<compile_context>
chip_gen: v7x
topology: tpu7x:2x2x1
jax: 0.10.0
libtpu: 0.0.40
codegen_flags: <defaults>
</compile_context>

<pallas_src>
import functools

import jax
import jax.numpy as jnp
from jax.experimental import pallas as pl
from jax.experimental.pallas import tpu as pltpu

BN_EPS = 1e-5


# ----------------------------- tiling helpers --------------------------------

def _round_up(x, m):
    return ((x + m - 1) // m) * m


@functools.lru_cache(maxsize=None)
def _vmem_budget_bytes():
    """Per-generation scoped-VMEM budget (~70% of physical VMEM)."""
    cap = 64 << 20                      # safe fallback (v7x has the smallest VMEM)
    try:
        info = pltpu.get_tpu_info()
        cap = int(getattr(info, "vmem_capacity_bytes", cap))
    except Exception:
        pass
    return int(cap * 0.7)


def _plan_conv_tiles(M, K, Cout):
    """Row-tile size for the im2col matmuls: budget-driven, >=2 tiles, mult of 16."""
    budget = _vmem_budget_bytes()
    fixed = 2 * K * Cout * 2 + (4 << 20)                 # dbl-buffered bf16 weights + margin
    row_bytes = 2 * K * 2 + K * 4 + 3 * Cout * 4         # dbl-buf bf16 patch row + f32 temps + out
    tm_budget = max(16, (budget - fixed) // max(row_bytes, 1))
    tm = min(tm_budget, _round_up(pl.cdiv(M, 2), 16), 32768)   # >=2 tiles -> both v7x TCs busy
    tm = max(16, (tm // 16) * 16)
    Mp = _round_up(M, tm)
    return tm, Mp, Mp // tm


def _pad_rows(mat, Mp):
    M = mat.shape[0]
    if Mp == M:
        return mat
    return jnp.pad(mat, ((0, Mp - M), (0, 0)))


# --------------------------- host-side layout glue ----------------------------

def _reflect_pad(x, p):
    return jnp.pad(x, ((0, 0), (p, p), (p, p), (0, 0)), mode="reflect")


def _im2col(xp, k):
    """Stride-1 patches of an already-padded NHWC tensor -> (N*Ho*Wo, k*k*C)."""
    N, Hp, Wp, C = xp.shape
    Ho, Wo = Hp - k + 1, Wp - k + 1
    cols = []
    for ky in range(k):
        for kx in range(k):
            cols.append(xp[:, ky:ky + Ho, kx:kx + Wo, :])
    patches = jnp.concatenate(cols, axis=-1)
    return patches.reshape(N * Ho * Wo, k * k * C), (N, Ho, Wo)


def _phase_shuffle(y, N, H, W, Cout):
    """(N*H*W, 4*Cout) phase-conv output -> (N, 2H, 2W, Cout) (pixel shuffle)."""
    y = y.reshape(N, H, W, 2, 2, Cout)
    y = jnp.transpose(y, (0, 1, 3, 2, 4, 5))
    return y.reshape(N, 2 * H, 2 * W, Cout)


def _conv_w2d(w_oihw):
    """Conv2d weight (Cout, Cin, KH, KW) -> (KH*KW*Cin, Cout), im2col order."""
    cout = w_oihw.shape[0]
    return jnp.transpose(w_oihw, (2, 3, 1, 0)).reshape(-1, cout)


def _convT_head_w(w_iohw):
    """ConvTranspose(k=4,s=1,p=0) on a 1x1 input -> dense (z_dim, 16*Cout) matrix."""
    z = w_iohw.shape[0]
    return jnp.transpose(w_iohw, (0, 2, 3, 1)).reshape(z, -1)


def _convT_phase_w2d(w_iohw):
    """ConvTranspose(k=3,s=2,p=1,op=1) weight (Cin,Cout,3,3) -> phase matrix (4*Cin, 4*Cout).

    Patch columns are the 2x2 taps [x(i,j), x(i,j+1), x(i+1,j), x(i+1,j+1)] (zero
    padded bottom/right); output columns are the 4 sub-pixel phases (py,px).
    """
    Cin, Cout = w_iohw.shape[0], w_iohw.shape[1]

    def kidx(p, d):                    # kernel index per axis for phase p, tap offset d
        if p == 0:
            return 1 if d == 0 else None
        return 2 if d == 0 else 0

    tap_blocks = []
    for dy in (0, 1):
        for dx in (0, 1):
            phase_cols = []
            for py in (0, 1):
                for px in (0, 1):
                    ky, kx = kidx(py, dy), kidx(px, dx)
                    if ky is None or kx is None:
                        phase_cols.append(jnp.zeros((Cin, Cout), w_iohw.dtype))
                    else:
                        phase_cols.append(w_iohw[:, :, ky, kx])
            tap_blocks.append(jnp.concatenate(phase_cols, axis=1))
    return jnp.concatenate(tap_blocks, axis=0)


# ------------------------------ Pallas kernels --------------------------------

def _valid_row_mask(tile_rows, total_rows):
    """(tile_rows, 1) bool mask of rows that belong to the un-padded matrix."""
    start = pl.program_id(0) * tile_rows
    row = start + jax.lax.broadcasted_iota(jnp.int32, (tile_rows, 1), 0)
    return row < total_rows


def _matmul_bias_relu_kernel(p_ref, w_ref, b_ref, o_ref):
    y = jnp.dot(p_ref[...], w_ref[...], preferred_element_type=jnp.float32)
    o_ref[...] = jnp.maximum(y + b_ref[...], 0.0)


def _matmul_tanh_kernel(p_ref, w_ref, o_ref):
    y = jnp.dot(p_ref[...], w_ref[...], preferred_element_type=jnp.float32)
    o_ref[...] = jnp.tanh(y)


def _matmul_stats_kernel(p_ref, w_ref, o_ref, s_ref, q_ref, *, tile_rows, total_rows):
    y = jnp.dot(p_ref[...], w_ref[...], preferred_element_type=jnp.float32)
    o_ref[...] = y
    ym = jnp.where(_valid_row_mask(tile_rows, total_rows), y, 0.0)
    s_ref[...] = jnp.sum(ym, axis=0, keepdims=True)[None]
    q_ref[...] = jnp.sum(ym * ym, axis=0, keepdims=True)[None]


def _prenorm_matmul_stats_kernel(p_ref, w_ref, sc_ref, sh_ref, o_ref, s_ref, q_ref,
                                 *, tile_rows, total_rows):
    # Pending BatchNorm affine + ReLU fused onto the patch tile (valid because
    # reflection padding commutes with per-channel elementwise ops).
    p = jnp.maximum(p_ref[...].astype(jnp.float32) * sc_ref[...] + sh_ref[...], 0.0)
    y = jnp.dot(p.astype(jnp.bfloat16), w_ref[...], preferred_element_type=jnp.float32)
    o_ref[...] = y
    ym = jnp.where(_valid_row_mask(tile_rows, total_rows), y, 0.0)
    s_ref[...] = jnp.sum(ym, axis=0, keepdims=True)[None]
    q_ref[...] = jnp.sum(ym * ym, axis=0, keepdims=True)[None]


def _bn_relu_kernel(y_ref, sc_ref, sh_ref, o_ref):
    o_ref[...] = jnp.maximum(y_ref[...] * sc_ref[...] + sh_ref[...], 0.0)


def _bn_add_kernel(y_ref, r_ref, sc_ref, sh_ref, o_ref):
    o_ref[...] = r_ref[...] + y_ref[...] * sc_ref[...] + sh_ref[...]


def _prenorm_bn_add_kernel(y_ref, r_ref, sc_ref, sh_ref, rsc_ref, rsh_ref, o_ref):
    res = jnp.maximum(r_ref[...] * rsc_ref[...] + rsh_ref[...], 0.0)
    o_ref[...] = res + y_ref[...] * sc_ref[...] + sh_ref[...]


# ---------------------------- pallas_call wrappers -----------------------------

def _run_conv(kernel, patches, w2d, vec_inputs=(), with_stats=False):
    """im2col matmul on the MXU. vec_inputs are (1, L) f32 rows broadcast per tile."""
    patches = patches.astype(jnp.bfloat16)
    w2d = w2d.astype(jnp.bfloat16)
    M, K = patches.shape
    Cout = w2d.shape[1]
    tm, Mp, ntiles = _plan_conv_tiles(M, K, Cout)
    p = _pad_rows(patches, Mp)

    in_specs = [pl.BlockSpec((tm, K), lambda i: (i, 0)),
                pl.BlockSpec((K, Cout), lambda i: (0, 0))]
    args = [p, w2d]
    for v in vec_inputs:
        in_specs.append(pl.BlockSpec((1, v.shape[1]), lambda i: (0, 0)))
        args.append(v)

    if with_stats:
        kern = functools.partial(kernel, tile_rows=tm, total_rows=M)
        out_shape = (jax.ShapeDtypeStruct((Mp, Cout), jnp.float32),
                     jax.ShapeDtypeStruct((ntiles, 1, Cout), jnp.float32),
                     jax.ShapeDtypeStruct((ntiles, 1, Cout), jnp.float32))
        out_specs = (pl.BlockSpec((tm, Cout), lambda i: (i, 0)),
                     pl.BlockSpec((1, 1, Cout), lambda i: (i, 0, 0)),
                     pl.BlockSpec((1, 1, Cout), lambda i: (i, 0, 0)))
    else:
        kern = kernel
        out_shape = jax.ShapeDtypeStruct((Mp, Cout), jnp.float32)
        out_specs = pl.BlockSpec((tm, Cout), lambda i: (i, 0))

    res = pl.pallas_call(
        kern,
        out_shape=out_shape,
        grid=(ntiles,),
        in_specs=in_specs,
        out_specs=out_specs,
        compiler_params=pltpu.CompilerParams(
            dimension_semantics=("parallel",),
            vmem_limit_bytes=_vmem_budget_bytes()),
    )(*args)

    if not with_stats:
        return res[:M]
    y, ps, pq = res
    return y[:M], jnp.sum(ps, axis=(0, 1)), jnp.sum(pq, axis=(0, 1))


def _run_elementwise(kernel, mats, vecs):
    """Elementwise (M, C) pass, widened to lane-dense (M/r, C*r) when C < 128."""
    M, C = mats[0].shape
    r = 1
    if C < 128 and 128 % C == 0:
        r0 = 128 // C
        if M % r0 == 0:
            r = r0
    Mw, Cw = M // r, C * r
    mats_w = [m.reshape(Mw, Cw) for m in mats]
    vecs_w = [jnp.tile(v.reshape(1, C), (1, r)) for v in vecs]

    tm = max(8, min(_round_up(pl.cdiv(Mw, 2), 8), 4096))
    Mp = _round_up(Mw, tm)
    ntiles = Mp // tm
    mats_p = [_pad_rows(m, Mp) for m in mats_w]

    in_specs = ([pl.BlockSpec((tm, Cw), lambda i: (i, 0)) for _ in mats_p] +
                [pl.BlockSpec((1, Cw), lambda i: (0, 0)) for _ in vecs_w])
    out = pl.pallas_call(
        kernel,
        out_shape=jax.ShapeDtypeStruct((Mp, Cw), jnp.float32),
        grid=(ntiles,),
        in_specs=in_specs,
        out_specs=pl.BlockSpec((tm, Cw), lambda i: (i, 0)),
        compiler_params=pltpu.CompilerParams(
            dimension_semantics=("parallel",),
            vmem_limit_bytes=_vmem_budget_bytes()),
    )(*mats_p, *vecs_w)
    return out[:Mw].reshape(M, C)


def _bn_scale_shift(s, q, count, gamma, beta):
    """Train-mode BatchNorm affine from batch sums / sums-of-squares (f32)."""
    # TODO(synk): eval-mode running_mean/running_var (and a Welford-style
    # reduction for very large |mean|/std ratios) are not implemented.
    mean = s / count
    var = jnp.maximum(q / count - mean * mean, 0.0)
    scale = gamma * jax.lax.rsqrt(var + BN_EPS)
    shift = beta - mean * scale
    return scale[None, :], shift[None, :]


# ------------------------------- layer helpers ---------------------------------

def head_forward(z2d, p):
    """ConvTranspose(z, C, k=4, s=1, p=0) on a 1x1 latent == dense matmul + bias + ReLU."""
    out = _run_conv(_matmul_bias_relu_kernel, z2d, p["w"],
                    vec_inputs=(p["b16"][None, :],))
    N = z2d.shape[0]
    return out.reshape(N, 4, 4, -1)


def resnet_block(x_img, p, pending=None):
    """x + BN2(conv2(ReLU(BN1(conv1(x))))) with reflect padding.

    `pending=(scale, shift)` means x_img is pre-BN and the previous layer's
    BN+ReLU is fused here (into conv1's matmul and the residual add).
    """
    N, H, W, C = x_img.shape
    M = N * H * W

    patches1, _ = _im2col(_reflect_pad(x_img, 1).astype(jnp.bfloat16), 3)
    if pending is None:
        y1, s1, q1 = _run_conv(_matmul_stats_kernel, patches1, p["w1"], with_stats=True)
    else:
        sc0, sh0 = pending
        y1, s1, q1 = _run_conv(_prenorm_matmul_stats_kernel, patches1, p["w1"],
                               vec_inputs=(jnp.tile(sc0, (1, 9)), jnp.tile(sh0, (1, 9))),
                               with_stats=True)
    sc1, sh1 = _bn_scale_shift(s1, q1, M, p["g1"], p["b1"])

    y1_img = y1.reshape(N, H, W, C)
    patches2, _ = _im2col(_reflect_pad(y1_img, 1).astype(jnp.bfloat16), 3)
    y2, s2, q2 = _run_conv(_prenorm_matmul_stats_kernel, patches2, p["w2"],
                           vec_inputs=(jnp.tile(sc1, (1, 9)), jnp.tile(sh1, (1, 9))),
                           with_stats=True)
    sc2, sh2 = _bn_scale_shift(s2, q2, M, p["g2"], p["b2"])

    x_flat = x_img.reshape(M, C)
    if pending is None:
        out = _run_elementwise(_bn_add_kernel, [y2, x_flat], [sc2, sh2])
    else:
        sc0, sh0 = pending
        out = _run_elementwise(_prenorm_bn_add_kernel, [y2, x_flat],
                               [sc2, sh2, sc0, sh0])
    return out.reshape(N, H, W, C)


def upsample_phase_conv(x_img, wph, gamma, beta):
    """ConvTranspose(k=3,s=2,p=1,op=1) via phase matmul; returns pre-BN output + BN affine."""
    N, H, W, C = x_img.shape
    M = N * H * W
    xq = jnp.pad(x_img, ((0, 0), (0, 1), (0, 1), (0, 0))).astype(jnp.bfloat16)
    patches, _ = _im2col(xq, 2)                                   # (M, 4*C)
    y, s, q = _run_conv(_matmul_stats_kernel, patches, wph, with_stats=True)
    Cout = wph.shape[1] // 4
    s = s.reshape(4, Cout).sum(axis=0)                            # fold the 4 phases
    q = q.reshape(4, Cout).sum(axis=0)
    sc, sh = _bn_scale_shift(s, q, 4 * M, gamma, beta)
    return _phase_shuffle(y, N, H, W, Cout), sc, sh               # pre-BN, BN applied lazily


def apply_pending_bn_relu(x_img, pending):
    N, H, W, C = x_img.shape
    sc, sh = pending
    out = _run_elementwise(_bn_relu_kernel, [x_img.reshape(-1, C)], [sc, sh])
    return out.reshape(N, H, W, C)


def tail_phase_conv_tanh(x_img, wph):
    N, H, W, C = x_img.shape
    xq = jnp.pad(x_img, ((0, 0), (0, 1), (0, 1), (0, 0))).astype(jnp.bfloat16)
    patches, _ = _im2col(xq, 2)
    y = _run_conv(_matmul_tanh_kernel, patches, wph)              # tanh fused in-kernel
    return _phase_shuffle(y, N, H, W, wph.shape[1] // 4)


# ----------------------------------- model -------------------------------------

def init_params(key, z_dim, output_nc, ngf=64, n_blocks=1, n_downsampling=2):
    n_keys = 3 + n_downsampling * (4 * n_blocks + 2)
    keys = iter(jax.random.split(key, max(n_keys, 2)))
    mult = 2 ** n_downsampling
    # ConvTranspose2d(z_dim, ngf*mult, 4, padding=0): PyTorch layout (Cin, Cout, KH, KW), bias=True.
    w0 = 0.05 * jax.random.normal(next(keys), (z_dim, ngf * mult, 4, 4), jnp.float32)
    b0 = 0.05 * jax.random.normal(next(keys), (ngf * mult,), jnp.float32)
    params = {"head": {"w": _convT_head_w(w0).astype(jnp.bfloat16),
                       "b16": jnp.tile(b0, 16)},
              "stages": []}
    for _ in range(n_downsampling):
        dim = ngf * mult
        blocks = []
        for _ in range(n_blocks):
            w1 = 0.05 * jax.random.normal(next(keys), (dim, dim, 3, 3), jnp.float32)
            w2 = 0.05 * jax.random.normal(next(keys), (dim, dim, 3, 3), jnp.float32)
            g1 = 1.0 + 0.02 * jax.random.normal(next(keys), (dim,), jnp.float32)
            g2 = 1.0 + 0.02 * jax.random.normal(next(keys), (dim,), jnp.float32)
            blocks.append({"w1": _conv_w2d(w1).astype(jnp.bfloat16), "g1": g1,
                           "b1": jnp.zeros((dim,), jnp.float32),
                           "w2": _conv_w2d(w2).astype(jnp.bfloat16), "g2": g2,
                           "b2": jnp.zeros((dim,), jnp.float32)})
        wu = 0.05 * jax.random.normal(next(keys), (dim, dim // 2, 3, 3), jnp.float32)
        gu = 1.0 + 0.02 * jax.random.normal(next(keys), (dim // 2,), jnp.float32)
        params["stages"].append({"blocks": blocks,
                                 "up_w": _convT_phase_w2d(wu).astype(jnp.bfloat16),
                                 "up_g": gu,
                                 "up_b": jnp.zeros((dim // 2,), jnp.float32)})
        mult //= 2
    wt = 0.05 * jax.random.normal(next(keys), (ngf * mult, output_nc, 3, 3), jnp.float32)
    params["tail"] = {"w": _convT_phase_w2d(wt).astype(jnp.bfloat16)}
    return params


def aegan_resnet_decoder_forward(x_nchw, params):
    # The decoder consumes a latent map of spatial size 1x1 (z vector).
    assert x_nchw.shape[2] == 1 and x_nchw.shape[3] == 1, x_nchw.shape
    z = x_nchw.reshape(x_nchw.shape[0], -1)                       # (N, z_dim)
    h = head_forward(z, params["head"])                           # (N, 4, 4, ngf*4)

    pending = None                                                # lazy upsample BN+ReLU
    for stage in params["stages"]:
        for bp in stage["blocks"]:
            h = resnet_block(h, bp, pending=pending)
            pending = None
        if pending is not None:                                   # n_blocks == 0 path
            h = apply_pending_bn_relu(h, pending)
            pending = None
        h, sc, sh = upsample_phase_conv(h, stage["up_w"], stage["up_g"], stage["up_b"])
        pending = (sc, sh)

    if pending is not None:
        # The tail's phase patches contain structural zero padding, so the last
        # BN+ReLU must be materialized instead of fused as a prenorm.
        h = apply_pending_bn_relu(h, pending)

    out = tail_phase_conv_tanh(h, params["tail"]["w"])
    return jnp.transpose(out, (0, 3, 1, 2))                       # NHWC -> NCHW


if __name__ == "__main__":
    # Small decoder: latent (2, 16, 1, 1) -> 4x4 head -> 8x8 -> 16x16 -> 32x32 RGB.
    N, z_dim, output_nc, ngf = 2, 16, 3, 8
    key = jax.random.PRNGKey(0)
    kx, kp = jax.random.split(key)
    x = jax.random.normal(kx, (N, z_dim, 1, 1), jnp.float32)
    params = init_params(kp, z_dim, output_nc, ngf)

    fwd = jax.jit(functools.partial(aegan_resnet_decoder_forward, params=params))
    out = jax.block_until_ready(fwd(x))
    assert out.shape == (N, output_nc, 32, 32), out.shape
    assert bool(jnp.all(jnp.isfinite(out)))
    assert bool(jnp.all(jnp.abs(out) <= 1.0))                     # tanh output range
    print("KERNEL_OK")
</pallas_src>

<mosaic_0001>
module attributes {stable_mosaic.version = 11 : i64} {
  func.func @_matmul_bias_relu_kernel(%arg0: i32, %arg1: memref<16x16xbf16, #tpu.memory_space<vmem>>, %arg2: memref<16x512xbf16, #tpu.memory_space<vmem>>, %arg3: memref<1x512xf32, #tpu.memory_space<vmem>>, %arg4: memref<16x512xf32, #tpu.memory_space<vmem>>) attributes {dimension_semantics = [#tpu.dimension_semantics<parallel>], iteration_bounds = array<i64: 1>, scalar_prefetch = 0 : i64, scratch_operands = 0 : i64, tpu.core_type = #tpu.core_type<tc>, window_params = [{transform_indices = @transform_0, window_bounds = array<i64: 16, 16>}, {pipeline_mode = #tpu.pipeline_mode<synchronous>, transform_indices = @transform_1, window_bounds = array<i64: 16, 512>}, {pipeline_mode = #tpu.pipeline_mode<synchronous>, transform_indices = @transform_2, window_bounds = array<i64: 1, 512>}, {transform_indices = @transform_3, window_bounds = array<i64: 16, 512>}]} {
    %c0 = arith.constant 0 : index
    %c0_0 = arith.constant 0 : index
    %0 = vector.load %arg1[%c0, %c0_0] : memref<16x16xbf16, #tpu.memory_space<vmem>>, vector<16x16xbf16>
    %c0_1 = arith.constant 0 : index
    %c0_2 = arith.constant 0 : index
    %1 = vector.load %arg2[%c0_1, %c0_2] : memref<16x512xbf16, #tpu.memory_space<vmem>>, vector<16x512xbf16>
    %cst = arith.constant dense<0.000000e+00> : vector<16x512xf32>
    %2 = tpu.matmul %0, %1, %cst {dimension_numbers = #tpu.dot_dimension_numbers<[1], [0], [0], [1], [0, 0, 1, 1], [], []>} : vector<16x16xbf16>, vector<16x512xbf16>, vector<16x512xf32> -> vector<16x512xf32>
    %c0_3 = arith.constant 0 : index
    %c0_4 = arith.constant 0 : index
    %3 = vector.load %arg3[%c0_3, %c0_4] : memref<1x512xf32, #tpu.memory_space<vmem>>, vector<1x512xf32>
    %4 = vector.broadcast %3 : vector<1x512xf32> to vector<16x512xf32>
    %5 = arith.addf %2, %4 : vector<16x512xf32>
    %cst_5 = arith.constant 0.000000e+00 : f32
    %6 = vector.broadcast %cst_5 : f32 to vector<16x512xf32>
    %7 = arith.maximumf %5, %6 : vector<16x512xf32>
    %c0_6 = arith.constant 0 : index
    %c0_7 = arith.constant 0 : index
    %8 = vector.load %arg4[%c0_6, %c0_7] : memref<16x512xf32, #tpu.memory_space<vmem>>, vector<16x512xf32>
    tpu.vector_store %arg4[%c0_6, %c0_7], %7 {strides = array<i32>} : memref<16x512xf32, #tpu.memory_space<vmem>>, vector<16x512xf32>,
    return
  }
  func.func @transform_0(%arg0: i32) -> (i32, i32) {
    %c0_i32 = arith.constant 0 : i32
    %c0_i32_0 = arith.constant 0 : i32
    return %arg0, %c0_i32 : i32, i32
  }
  func.func @transform_1(%arg0: i32) -> (i32, i32) {
    %c0_i32 = arith.constant 0 : i32
    %c0_i32_0 = arith.constant 0 : i32
    %c0_i32_1 = arith.constant 0 : i32
    return %c0_i32, %c0_i32_0 : i32, i32
  }
  func.func @transform_2(%arg0: i32) -> (i32, i32) {
    %c0_i32 = arith.constant 0 : i32
    %c0_i32_0 = arith.constant 0 : i32
    %c0_i32_1 = arith.constant 0 : i32
    return %c0_i32, %c0_i32_0 : i32, i32
  }
  func.func @transform_3(%arg0: i32) -> (i32, i32) {
    %c0_i32 = arith.constant 0 : i32
    %c0_i32_0 = arith.constant 0 : i32
    return %arg0, %c0_i32 : i32, i32
  }
}

module attributes {stable_mosaic.version = 11 : i64} {
  func.func @_matmul_stats_kernel(%arg0: i32, %arg1: memref<16x288xbf16, #tpu.memory_space<vmem>>, %arg2: memref<288x32xbf16, #tpu.memory_space<vmem>>, %arg3: memref<16x32xf32, #tpu.memory_space<vmem>>, %arg4: memref<1x1x32xf32, #tpu.memory_space<vmem>>, %arg5: memref<1x1x32xf32, #tpu.memory_space<vmem>>) attributes {dimension_semantics = [#tpu.dimension_semantics<parallel>], iteration_bounds = array<i64: 2>, scalar_prefetch = 0 : i64, scratch_operands = 0 : i64, tpu.core_type = #tpu.core_type<tc>, window_params = [{transform_indices = @transform_0, window_bounds = array<i64: 16, 288>}, {pipeline_mode = #tpu.pipeline_mode<synchronous>, transform_indices = @transform_1, window_bounds = array<i64: 288, 32>}, {transform_indices = @transform_2, window_bounds = array<i64: 16, 32>}, {transform_indices = @transform_3, window_bounds = array<i64: 1, 1, 32>}, {transform_indices = @transform_4, window_bounds = array<i64: 1, 1, 32>}]} {
    %c0 = arith.constant 0 : index
    %c0_0 = arith.constant 0 : index
    %0 = vector.load %arg1[%c0, %c0_0] : memref<16x288xbf16, #tpu.memory_space<vmem>>, vector<16x288xbf16>
    %c0_1 = arith.constant 0 : index
    %c0_2 = arith.constant 0 : index
    %1 = vector.load %arg2[%c0_1, %c0_2] : memref<288x32xbf16, #tpu.memory_space<vmem>>, vector<288x32xbf16>
    %cst = arith.constant dense<0.000000e+00> : vector<16x32xf32>
    %2 = tpu.matmul %0, %1, %cst {dimension_numbers = #tpu.dot_dimension_numbers<[1], [0], [0], [1], [0, 0, 1, 1], [], []>} : vector<16x288xbf16>, vector<288x32xbf16>, vector<16x32xf32> -> vector<16x32xf32>
    %c0_3 = arith.constant 0 : index
    %c0_4 = arith.constant 0 : index
    %3 = vector.load %arg3[%c0_3, %c0_4] : memref<16x32xf32, #tpu.memory_space<vmem>>, vector<16x32xf32>
    tpu.vector_store %arg3[%c0_3, %c0_4], %2 {strides = array<i32>} : memref<16x32xf32, #tpu.memory_space<vmem>>, vector<16x32xf32>,
    %c16_i32 = arith.constant 16 : i32
    %4 = arith.muli %arg0, %c16_i32 : i32
    %5 = tpu.iota {dimensions = array<i32: 0>} : vector<16x1xi32>
    %6 = vector.broadcast %4 : i32 to vector<16x1xi32>
    %7 = arith.addi %6, %5 : vector<16x1xi32>
    %c32_i32 = arith.constant 32 : i32
    %8 = vector.broadcast %c32_i32 : i32 to vector<16x1xi32>
    %9 = arith.cmpi slt, %7, %8 : vector<16x1xi32>
    %cst_5 = arith.constant 0.000000e+00 : f32
    %10 = vector.shape_cast %9 : vector<16x1xi1> to vector<16x1xi1>
    %11 = vector.broadcast %10 : vector<16x1xi1> to vector<16x32xi1>
    %12 = vector.broadcast %cst_5 : f32 to vector<16x32xf32>
    %13 = arith.select %11, %2, %12 : vector<16x32xi1>, vector<16x32xf32>
    %cst_6 = arith.constant dense<0.000000e+00> : vector<32xf32>
    %14 = vector.multi_reduction <add>, %13, %cst_6 [0] : vector<16x32xf32> to vector<32xf32>
    %15 = vector.shape_cast %14 : vector<32xf32> to vector<1x32xf32>
    %16 = vector.shape_cast %15 : vector<1x32xf32> to vector<1x1x32xf32>
    %c0_7 = arith.constant 0 : index
    %c0_8 = arith.constant 0 : index
    %c0_9 = arith.constant 0 : index
    %17 = vector.load %arg4[%c0_7, %c0_8, %c0_9] : memref<1x1x32xf32, #tpu.memory_space<vmem>>, vector<1x1x32xf32>
    tpu.vector_store %arg4[%c0_7, %c0_8, %c0_9], %16 {strides = array<i32>} : memref<1x1x32xf32, #tpu.memory_space<vmem>>, vector<1x1x32xf32>,
    %18 = arith.mulf %13, %13 : vector<16x32xf32>
    %cst_10 = arith.constant dense<0.000000e+00> : vector<32xf32>
    %19 = vector.multi_reduction <add>, %18, %cst_10 [0] : vector<16x32xf32> to vector<32xf32>
    %20 = vector.shape_cast %19 : vector<32xf32> to vector<1x32xf32>
    %21 = vector.shape_cast %20 : vector<1x32xf32> to vector<1x1x32xf32>
    %c0_11 = arith.constant 0 : index
    %c0_12 = arith.constant 0 : index
    %c0_13 = arith.constant 0 : index
    %22 = vector.load %arg5[%c0_11, %c0_12, %c0_13] : memref<1x1x32xf32, #tpu.memory_space<vmem>>, vector<1x1x32xf32>
    tpu.vector_store %arg5[%c0_11, %c0_12, %c0_13], %21 {strides = array<i32>} : memref<1x1x32xf32, #tpu.memory_space<vmem>>, vector<1x1x32xf32>,
    return
  }
  func.func @transform_0(%arg0: i32) -> (i32, i32) {
    %c0_i32 = arith.constant 0 : i32
    %c0_i32_0 = arith.constant 0 : i32
    return %arg0, %c0_i32 : i32, i32
  }
  func.func @transform_1(%arg0: i32) -> (i32, i32) {
    %c0_i32 = arith.constant 0 : i32
    %c0_i32_0 = arith.constant 0 : i32
    %c0_i32_1 = arith.constant 0 : i32
    return %c0_i32, %c0_i32_0 : i32, i32
  }
  func.func @transform_2(%arg0: i32) -> (i32, i32) {
    %c0_i32 = arith.constant 0 : i32
    %c0_i32_0 = arith.constant 0 : i32
    return %arg0, %c0_i32 : i32, i32
  }
  func.func @transform_3(%arg0: i32) -> (i32, i32, i32) {
    %c0_i32 = arith.constant 0 : i32
    %c0_i32_0 = arith.constant 0 : i32
    %c0_i32_1 = arith.constant 0 : i32
    return %arg0, %c0_i32, %c0_i32_0 : i32, i32, i32
  }
  func.func @transform_4(%arg0: i32) -> (i32, i32, i32) {
    %c0_i32 = arith.constant 0 : i32
    %c0_i32_0 = arith.constant 0 : i32
    %c0_i32_1 = arith.constant 0 : i32
    return %arg0, %c0_i32, %c0_i32_0 : i32, i32, i32
  }
}

module attributes {stable_mosaic.version = 11 : i64} {
  func.func @_prenorm_matmul_stats_kernel(%arg0: i32, %arg1: memref<16x288xbf16, #tpu.memory_space<vmem>>, %arg2: memref<288x32xbf16, #tpu.memory_space<vmem>>, %arg3: memref<1x288xf32, #tpu.memory_space<vmem>>, %arg4: memref<1x288xf32, #tpu.memory_space<vmem>>, %arg5: memref<16x32xf32, #tpu.memory_space<vmem>>, %arg6: memref<1x1x32xf32, #tpu.memory_space<vmem>>, %arg7: memref<1x1x32xf32, #tpu.memory_space<vmem>>) attributes {dimension_semantics = [#tpu.dimension_semantics<parallel>], iteration_bounds = array<i64: 2>, scalar_prefetch = 0 : i64, scratch_operands = 0 : i64, tpu.core_type = #tpu.core_type<tc>, window_params = [{transform_indices = @transform_0, window_bounds = array<i64: 16, 288>}, {pipeline_mode = #tpu.pipeline_mode<synchronous>, transform_indices = @transform_1, window_bounds = array<i64: 288, 32>}, {pipeline_mode = #tpu.pipeline_mode<synchronous>, transform_indices = @transform_2, window_bounds = array<i64: 1, 288>}, {pipeline_mode = #tpu.pipeline_mode<synchronous>, transform_indices = @transform_3, window_bounds = array<i64: 1, 288>}, {transform_indices = @transform_4, window_bounds = array<i64: 16, 32>}, {transform_indices = @transform_5, window_bounds = array<i64: 1, 1, 32>}, {transform_indices = @transform_6, window_bounds = array<i64: 1, 1, 32>}]} {
    %c0 = arith.constant 0 : index
    %c0_0 = arith.constant 0 : index
    %0 = vector.load %arg1[%c0, %c0_0] : memref<16x288xbf16, #tpu.memory_space<vmem>>, vector<16x288xbf16>
    %1 = arith.extf %0 : vector<16x288xbf16> to vector<16x288xf32>
    %c0_1 = arith.constant 0 : index
    %c0_2 = arith.constant 0 : index
    %2 = vector.load %arg3[%c0_1, %c0_2] : memref<1x288xf32, #tpu.memory_space<vmem>>, vector<1x288xf32>
    %3 = vector.broadcast %2 : vector<1x288xf32> to vector<16x288xf32>
    %4 = arith.mulf %1, %3 : vector<16x288xf32>
    %c0_3 = arith.constant 0 : index
    %c0_4 = arith.constant 0 : index
    %5 = vector.load %arg4[%c0_3, %c0_4] : memref<1x288xf32, #tpu.memory_space<vmem>>, vector<1x288xf32>
    %6 = vector.broadcast %5 : vector<1x288xf32> to vector<16x288xf32>
    %7 = arith.addf %4, %6 : vector<16x288xf32>
    %cst = arith.constant 0.000000e+00 : f32
    %8 = vector.broadcast %cst : f32 to vector<16x288xf32>
    %9 = arith.maximumf %7, %8 : vector<16x288xf32>
    %10 = arith.truncf %9 : vector<16x288xf32> to vector<16x288xbf16>
    %c0_5 = arith.constant 0 : index
    %c0_6 = arith.constant 0 : index
    %11 = vector.load %arg2[%c0_5, %c0_6] : memref<288x32xbf16, #tpu.memory_space<vmem>>, vector<288x32xbf16>
    %cst_7 = arith.constant dense<0.000000e+00> : vector<16x32xf32>
    %12 = tpu.matmul %10, %11, %cst_7 {dimension_numbers = #tpu.dot_dimension_numbers<[1], [0], [0], [1], [0, 0, 1, 1], [], []>} : vector<16x288xbf16>, vector<288x32xbf16>, vector<16x32xf32> -> vector<16x32xf32>
    %c0_8 = arith.constant 0 : index
    %c0_9 = arith.constant 0 : index
    %13 = vector.load %arg5[%c0_8, %c0_9] : memref<16x32xf32, #tpu.memory_space<vmem>>, vector<16x32xf32>
    tpu.vector_store %arg5[%c0_8, %c0_9], %12 {strides = array<i32>} : memref<16x32xf32, #tpu.memory_space<vmem>>, vector<16x32xf32>,
    %c16_i32 = arith.constant 16 : i32
    %14 = arith.muli %arg0, %c16_i32 : i32
    %15 = tpu.iota {dimensions = array<i32: 0>} : vector<16x1xi32>
    %16 = vector.broadcast %14 : i32 to vector<16x1xi32>
    %17 = arith.addi %16, %15 : vector<16x1xi32>
    %c32_i32 = arith.constant 32 : i32
    %18 = vector.broadcast %c32_i32 : i32 to vector<16x1xi32>
    %19 = arith.cmpi slt, %17, %18 : vector<16x1xi32>
    %cst_10 = arith.constant 0.000000e+00 : f32
    %20 = vector.shape_cast %19 : vector<16x1xi1> to vector<16x1xi1>
    %21 = vector.broadcast %20 : vector<16x1xi1> to vector<16x32xi1>
    %22 = vector.broadcast %cst_10 : f32 to vector<16x32xf32>
    %23 = arith.select %21, %12, %22 : vector<16x32xi1>, vector<16x32xf32>
    %cst_11 = arith.constant dense<0.000000e+00> : vector<32xf32>
    %24 = vector.multi_reduction <add>, %23, %cst_11 [0] : vector<16x32xf32> to vector<32xf32>
    %25 = vector.shape_cast %24 : vector<32xf32> to vector<1x32xf32>
    %26 = vector.shape_cast %25 : vector<1x32xf32> to vector<1x1x32xf32>
    %c0_12 = arith.constant 0 : index
    %c0_13 = arith.constant 0 : index
    %c0_14 = arith.constant 0 : index
    %27 = vector.load %arg6[%c0_12, %c0_13, %c0_14] : memref<1x1x32xf32, #tpu.memory_space<vmem>>, vector<1x1x32xf32>
    tpu.vector_store %arg6[%c0_12, %c0_13, %c0_14], %26 {strides = array<i32>} : memref<1x1x32xf32, #tpu.memory_space<vmem>>, vector<1x1x32xf32>,
    %28 = arith.mulf %23, %23 : vector<16x32xf32>
    %cst_15 = arith.constant dense<0.000000e+00> : vector<32xf32>
    %29 = vector.multi_reduction <add>, %28, %cst_15 [0] : vector<16x32xf32> to vector<32xf32>
    %30 = vector.shape_cast %29 : vector<32xf32> to vector<1x32xf32>
    %31 = vector.shape_cast %30 : vector<1x32xf32> to vector<1x1x32xf32>
    %c0_16 = arith.constant 0 : index
    %c0_17 = arith.constant 0 : index
    %c0_18 = arith.constant 0 : index
    %32 = vector.load %arg7[%c0_16, %c0_17, %c0_18] : memref<1x1x32xf32, #tpu.memory_space<vmem>>, vector<1x1x32xf32>
    tpu.vector_store %arg7[%c0_16, %c0_17, %c0_18], %31 {strides = array<i32>} : memref<1x1x32xf32, #tpu.memory_space<vmem>>, vector<1x1x32xf32>,
    return
  }
  func.func @transform_0(%arg0: i32) -> (i32, i32) {
    %c0_i32 = arith.constant 0 : i32
    %c0_i32_0 = arith.constant 0 : i32
    return %arg0, %c0_i32 : i32, i32
  }
  func.func @transform_1(%arg0: i32) -> (i32, i32) {
    %c0_i32 = arith.constant 0 : i32
    %c0_i32_0 = arith.constant 0 : i32
    %c0_i32_1 = arith.constant 0 : i32
    return %c0_i32, %c0_i32_0 : i32, i32
  }
  func.func @transform_2(%arg0: i32) -> (i32, i32) {
    %c0_i32 = arith.constant 0 : i32
    %c0_i32_0 = arith.constant 0 : i32
    %c0_i32_1 = arith.constant 0 : i32
    return %c0_i32, %c0_i32_0 : i32, i32
  }
  func.func @transform_3(%arg0: i32) -> (i32, i32) {
    %c0_i32 = arith.constant 0 : i32
    %c0_i32_0 = arith.constant 0 : i32
    %c0_i32_1 = arith.constant 0 : i32
    return %c0_i32, %c0_i32_0 : i32, i32
  }
  func.func @transform_4(%arg0: i32) -> (i32, i32) {
    %c0_i32 = arith.constant 0 : i32
    %c0_i32_0 = arith.constant 0 : i32
    return %arg0, %c0_i32 : i32, i32
  }
  func.func @transform_5(%arg0: i32) -> (i32, i32, i32) {
    %c0_i32 = arith.constant 0 : i32
    %c0_i32_0 = arith.constant 0 : i32
    %c0_i32_1 = arith.constant 0 : i32
    return %arg0, %c0_i32, %c0_i32_0 : i32, i32, i32
  }
  func.func @transform_6(%arg0: i32) -> (i32, i32, i32) {
    %c0_i32 = arith.constant 0 : i32
    %c0_i32_0 = arith.constant 0 : i32
    %c0_i32_1 = arith.constant 0 : i32
    return %arg0, %c0_i32, %c0_i32_0 : i32, i32, i32
  }
}

module attributes {stable_mosaic.version = 11 : i64} {
  func.func @_bn_add_kernel(%arg0: i32, %arg1: memref<8x128xf32, #tpu.memory_space<vmem>>, %arg2: memref<8x128xf32, #tpu.memory_space<vmem>>, %arg3: memref<1x128xf32, #tpu.memory_space<vmem>>, %arg4: memref<1x128xf32, #tpu.memory_space<vmem>>, %arg5: memref<8x128xf32, #tpu.memory_space<vmem>>) attributes {dimension_semantics = [#tpu.dimension_semantics<parallel>], iteration_bounds = array<i64: 1>, scalar_prefetch = 0 : i64, scratch_operands = 0 : i64, tpu.core_type = #tpu.core_type<tc>, window_params = [{transform_indices = @transform_0, window_bounds = array<i64: 8, 128>}, {transform_indices = @transform_1, window_bounds = array<i64: 8, 128>}, {pipeline_mode = #tpu.pipeline_mode<synchronous>, transform_indices = @transform_2, window_bounds = array<i64: 1, 128>}, {pipeline_mode = #tpu.pipeline_mode<synchronous>, transform_indices = @transform_3, window_bounds = array<i64: 1, 128>}, {transform_indices = @transform_4, window_bounds = array<i64: 8, 128>}]} {
    %c0 = arith.constant 0 : index
    %c0_0 = arith.constant 0 : index
    %0 = vector.load %arg2[%c0, %c0_0] : memref<8x128xf32, #tpu.memory_space<vmem>>, vector<8x128xf32>
    %c0_1 = arith.constant 0 : index
    %c0_2 = arith.constant 0 : index
    %1 = vector.load %arg1[%c0_1, %c0_2] : memref<8x128xf32, #tpu.memory_space<vmem>>, vector<8x128xf32>
    %c0_3 = arith.constant 0 : index
    %c0_4 = arith.constant 0 : index
    %2 = vector.load %arg3[%c0_3, %c0_4] : memref<1x128xf32, #tpu.memory_space<vmem>>, vector<1x128xf32>
    %3 = vector.broadcast %2 : vector<1x128xf32> to vector<8x128xf32>
    %4 = arith.mulf %1, %3 : vector<8x128xf32>
    %5 = arith.addf %0, %4 : vector<8x128xf32>
    %c0_5 = arith.constant 0 : index
    %c0_6 = arith.constant 0 : index
    %6 = vector.load %arg4[%c0_5, %c0_6] : memref<1x128xf32, #tpu.memory_space<vmem>>, vector<1x128xf32>
    %7 = vector.broadcast %6 : vector<1x128xf32> to vector<8x128xf32>
    %8 = arith.addf %5, %7 : vector<8x128xf32>
    %c0_7 = arith.constant 0 : index
    %c0_8 = arith.constant 0 : index
    %9 = vector.load %arg5[%c0_7, %c0_8] : memref<8x128xf32, #tpu.memory_space<vmem>>, vector<8x128xf32>
    tpu.vector_store %arg5[%c0_7, %c0_8], %8 {strides = array<i32>} : memref<8x128xf32, #tpu.memory_space<vmem>>, vector<8x128xf32>,
    return
  }
  func.func @transform_0(%arg0: i32) -> (i32, i32) {
    %c0_i32 = arith.constant 0 : i32
    %c0_i32_0 = arith.constant 0 : i32
    return %arg0, %c0_i32 : i32, i32
  }
  func.func @transform_1(%arg0: i32) -> (i32, i32) {
    %c0_i32 = arith.constant 0 : i32
    %c0_i32_0 = arith.constant 0 : i32
    return %arg0, %c0_i32 : i32, i32
  }
  func.func @transform_2(%arg0: i32) -> (i32, i32) {
    %c0_i32 = arith.constant 0 : i32
    %c0_i32_0 = arith.constant 0 : i32
    %c0_i32_1 = arith.constant 0 : i32
    return %c0_i32, %c0_i32_0 : i32, i32
  }
  func.func @transform_3(%arg0: i32) -> (i32, i32) {
    %c0_i32 = arith.constant 0 : i32
    %c0_i32_0 = arith.constant 0 : i32
    %c0_i32_1 = arith.constant 0 : i32
    return %c0_i32, %c0_i32_0 : i32, i32
  }
  func.func @transform_4(%arg0: i32) -> (i32, i32) {
    %c0_i32 = arith.constant 0 : i32
    %c0_i32_0 = arith.constant 0 : i32
    return %arg0, %c0_i32 : i32, i32
  }
}

module attributes {stable_mosaic.version = 11 : i64} {
  func.func @_matmul_stats_kernel(%arg0: i32, %arg1: memref<16x128xbf16, #tpu.memory_space<vmem>>, %arg2: memref<128x64xbf16, #tpu.memory_space<vmem>>, %arg3: memref<16x64xf32, #tpu.memory_space<vmem>>, %arg4: memref<1x1x64xf32, #tpu.memory_space<vmem>>, %arg5: memref<1x1x64xf32, #tpu.memory_space<vmem>>) attributes {dimension_semantics = [#tpu.dimension_semantics<parallel>], iteration_bounds = array<i64: 2>, scalar_prefetch = 0 : i64, scratch_operands = 0 : i64, tpu.core_type = #tpu.core_type<tc>, window_params = [{transform_indices = @transform_0, window_bounds = array<i64: 16, 128>}, {pipeline_mode = #tpu.pipeline_mode<synchronous>, transform_indices = @transform_1, window_bounds = array<i64: 128, 64>}, {transform_indices = @transform_2, window_bounds = array<i64: 16, 64>}, {transform_indices = @transform_3, window_bounds = array<i64: 1, 1, 64>}, {transform_indices = @transform_4, window_bounds = array<i64: 1, 1, 64>}]} {
    %c0 = arith.constant 0 : index
    %c0_0 = arith.constant 0 : index
    %0 = vector.load %arg1[%c0, %c0_0] : memref<16x128xbf16, #tpu.memory_space<vmem>>, vector<16x128xbf16>
    %c0_1 = arith.constant 0 : index
    %c0_2 = arith.constant 0 : index
    %1 = vector.load %arg2[%c0_1, %c0_2] : memref<128x64xbf16, #tpu.memory_space<vmem>>, vector<128x64xbf16>
    %cst = arith.constant dense<0.000000e+00> : vector<16x64xf32>
    %2 = tpu.matmul %0, %1, %cst {dimension_numbers = #tpu.dot_dimension_numbers<[1], [0], [0], [1], [0, 0, 1, 1], [], []>} : vector<16x128xbf16>, vector<128x64xbf16>, vector<16x64xf32> -> vector<16x64xf32>
    %c0_3 = arith.constant 0 : index
    %c0_4 = arith.constant 0 : index
    %3 = vector.load %arg3[%c0_3, %c0_4] : memref<16x64xf32, #tpu.memory_space<vmem>>, vector<16x64xf32>
    tpu.vector_store %arg3[%c0_3, %c0_4], %2 {strides = array<i32>} : memref<16x64xf32, #tpu.memory_space<vmem>>, vector<16x64xf32>,
    %c16_i32 = arith.constant 16 : i32
    %4 = arith.muli %arg0, %c16_i32 : i32
    %5 = tpu.iota {dimensions = array<i32: 0>} : vector<16x1xi32>
    %6 = vector.broadcast %4 : i32 to vector<16x1xi32>
    %7 = arith.addi %6, %5 : vector<16x1xi32>
    %c32_i32 = arith.constant 32 : i32
    %8 = vector.broadcast %c32_i32 : i32 to vector<16x1xi32>
    %9 = arith.cmpi slt, %7, %8 : vector<16x1xi32>
    %cst_5 = arith.constant 0.000000e+00 : f32
    %10 = vector.shape_cast %9 : vector<16x1xi1> to vector<16x1xi1>
    %11 = vector.broadcast %10 : vector<16x1xi1> to vector<16x64xi1>
    %12 = vector.broadcast %cst_5 : f32 to vector<16x64xf32>
    %13 = arith.select %11, %2, %12 : vector<16x64xi1>, vector<16x64xf32>
    %cst_6 = arith.constant dense<0.000000e+00> : vector<64xf32>
    %14 = vector.multi_reduction <add>, %13, %cst_6 [0] : vector<16x64xf32> to vector<64xf32>
    %15 = vector.shape_cast %14 : vector<64xf32> to vector<1x64xf32>
    %16 = vector.shape_cast %15 : vector<1x64xf32> to vector<1x1x64xf32>
    %c0_7 = arith.constant 0 : index
    %c0_8 = arith.constant 0 : index
    %c0_9 = arith.constant 0 : index
    %17 = vector.load %arg4[%c0_7, %c0_8, %c0_9] : memref<1x1x64xf32, #tpu.memory_space<vmem>>, vector<1x1x64xf32>
    tpu.vector_store %arg4[%c0_7, %c0_8, %c0_9], %16 {strides = array<i32>} : memref<1x1x64xf32, #tpu.memory_space<vmem>>, vector<1x1x64xf32>,
    %18 = arith.mulf %13, %13 : vector<16x64xf32>
    %cst_10 = arith.constant dense<0.000000e+00> : vector<64xf32>
    %19 = vector.multi_reduction <add>, %18, %cst_10 [0] : vector<16x64xf32> to vector<64xf32>
    %20 = vector.shape_cast %19 : vector<64xf32> to vector<1x64xf32>
    %21 = vector.shape_cast %20 : vector<1x64xf32> to vector<1x1x64xf32>
    %c0_11 = arith.constant 0 : index
    %c0_12 = arith.constant 0 : index
    %c0_13 = arith.constant 0 : index
    %22 = vector.load %arg5[%c0_11, %c0_12, %c0_13] : memref<1x1x64xf32, #tpu.memory_space<vmem>>, vector<1x1x64xf32>
    tpu.vector_store %arg5[%c0_11, %c0_12, %c0_13], %21 {strides = array<i32>} : memref<1x1x64xf32, #tpu.memory_space<vmem>>, vector<1x1x64xf32>,
    return
  }
  func.func @transform_0(%arg0: i32) -> (i32, i32) {
    %c0_i32 = arith.constant 0 : i32
    %c0_i32_0 = arith.constant 0 : i32
    return %arg0, %c0_i32 : i32, i32
  }
  func.func @transform_1(%arg0: i32) -> (i32, i32) {
    %c0_i32 = arith.constant 0 : i32
    %c0_i32_0 = arith.constant 0 : i32
    %c0_i32_1 = arith.constant 0 : i32
    return %c0_i32, %c0_i32_0 : i32, i32
  }
  func.func @transform_2(%arg0: i32) -> (i32, i32) {
    %c0_i32 = arith.constant 0 : i32
    %c0_i32_0 = arith.constant 0 : i32
    return %arg0, %c0_i32 : i32, i32
  }
  func.func @transform_3(%arg0: i32) -> (i32, i32, i32) {
    %c0_i32 = arith.constant 0 : i32
    %c0_i32_0 = arith.constant 0 : i32
    %c0_i32_1 = arith.constant 0 : i32
    return %arg0, %c0_i32, %c0_i32_0 : i32, i32, i32
  }
  func.func @transform_4(%arg0: i32) -> (i32, i32, i32) {
    %c0_i32 = arith.constant 0 : i32
    %c0_i32_0 = arith.constant 0 : i32
    %c0_i32_1 = arith.constant 0 : i32
    return %arg0, %c0_i32, %c0_i32_0 : i32, i32, i32
  }
}

module attributes {stable_mosaic.version = 11 : i64} {
  func.func @_prenorm_matmul_stats_kernel(%arg0: i32, %arg1: memref<64x144xbf16, #tpu.memory_space<vmem>>, %arg2: memref<144x16xbf16, #tpu.memory_space<vmem>>, %arg3: memref<1x144xf32, #tpu.memory_space<vmem>>, %arg4: memref<1x144xf32, #tpu.memory_space<vmem>>, %arg5: memref<64x16xf32, #tpu.memory_space<vmem>>, %arg6: memref<1x1x16xf32, #tpu.memory_space<vmem>>, %arg7: memref<1x1x16xf32, #tpu.memory_space<vmem>>) attributes {dimension_semantics = [#tpu.dimension_semantics<parallel>], iteration_bounds = array<i64: 2>, scalar_prefetch = 0 : i64, scratch_operands = 0 : i64, tpu.core_type = #tpu.core_type<tc>, window_params = [{transform_indices = @transform_0, window_bounds = array<i64: 64, 144>}, {pipeline_mode = #tpu.pipeline_mode<synchronous>, transform_indices = @transform_1, window_bounds = array<i64: 144, 16>}, {pipeline_mode = #tpu.pipeline_mode<synchronous>, transform_indices = @transform_2, window_bounds = array<i64: 1, 144>}, {pipeline_mode = #tpu.pipeline_mode<synchronous>, transform_indices = @transform_3, window_bounds = array<i64: 1, 144>}, {transform_indices = @transform_4, window_bounds = array<i64: 64, 16>}, {transform_indices = @transform_5, window_bounds = array<i64: 1, 1, 16>}, {transform_indices = @transform_6, window_bounds = array<i64: 1, 1, 16>}]} {
    %c0 = arith.constant 0 : index
    %c0_0 = arith.constant 0 : index
    %0 = vector.load %arg1[%c0, %c0_0] : memref<64x144xbf16, #tpu.memory_space<vmem>>, vector<64x144xbf16>
    %1 = arith.extf %0 : vector<64x144xbf16> to vector<64x144xf32>
    %c0_1 = arith.constant 0 : index
    %c0_2 = arith.constant 0 : index
    %2 = vector.load %arg3[%c0_1, %c0_2] : memref<1x144xf32, #tpu.memory_space<vmem>>, vector<1x144xf32>
    %3 = vector.broadcast %2 : vector<1x144xf32> to vector<64x144xf32>
    %4 = arith.mulf %1, %3 : vector<64x144xf32>
    %c0_3 = arith.constant 0 : index
    %c0_4 = arith.constant 0 : index
    %5 = vector.load %arg4[%c0_3, %c0_4] : memref<1x144xf32, #tpu.memory_space<vmem>>, vector<1x144xf32>
    %6 = vector.broadcast %5 : vector<1x144xf32> to vector<64x144xf32>
    %7 = arith.addf %4, %6 : vector<64x144xf32>
    %cst = arith.constant 0.000000e+00 : f32
    %8 = vector.broadcast %cst : f32 to vector<64x144xf32>
    %9 = arith.maximumf %7, %8 : vector<64x144xf32>
    %10 = arith.truncf %9 : vector<64x144xf32> to vector<64x144xbf16>
    %c0_5 = arith.constant 0 : index
    %c0_6 = arith.constant 0 : index
    %11 = vector.load %arg2[%c0_5, %c0_6] : memref<144x16xbf16, #tpu.memory_space<vmem>>, vector<144x16xbf16>
    %cst_7 = arith.constant dense<0.000000e+00> : vector<64x16xf32>
    %12 = tpu.matmul %10, %11, %cst_7 {dimension_numbers = #tpu.dot_dimension_numbers<[1], [0], [0], [1], [0, 0, 1, 1], [], []>} : vector<64x144xbf16>, vector<144x16xbf16>, vector<64x16xf32> -> vector<64x16xf32>
    %c0_8 = arith.constant 0 : index
    %c0_9 = arith.constant 0 : index
    %13 = vector.load %arg5[%c0_8, %c0_9] : memref<64x16xf32, #tpu.memory_space<vmem>>, vector<64x16xf32>
    tpu.vector_store %arg5[%c0_8, %c0_9], %12 {strides = array<i32>} : memref<64x16xf32, #tpu.memory_space<vmem>>, vector<64x16xf32>,
    %c64_i32 = arith.constant 64 : i32
    %14 = arith.muli %arg0, %c64_i32 : i32
    %15 = tpu.iota {dimensions = array<i32: 0>} : vector<64x1xi32>
    %16 = vector.broadcast %14 : i32 to vector<64x1xi32>
    %17 = arith.addi %16, %15 : vector<64x1xi32>
    %c128_i32 = arith.constant 128 : i32
    %18 = vector.broadcast %c128_i32 : i32 to vector<64x1xi32>
    %19 = arith.cmpi slt, %17, %18 : vector<64x1xi32>
    %cst_10 = arith.constant 0.000000e+00 : f32
    %20 = vector.shape_cast %19 : vector<64x1xi1> to vector<64x1xi1>
    %21 = vector.broadcast %20 : vector<64x1xi1> to vector<64x16xi1>
    %22 = vector.broadcast %cst_10 : f32 to vector<64x16xf32>
    %23 = arith.select %21, %12, %22 : vector<64x16xi1>, vector<64x16xf32>
    %cst_11 = arith.constant dense<0.000000e+00> : vector<16xf32>
    %24 = vector.multi_reduction <add>, %23, %cst_11 [0] : vector<64x16xf32> to vector<16xf32>
    %25 = vector.shape_cast %24 : vector<16xf32> to vector<1x16xf32>
    %26 = vector.shape_cast %25 : vector<1x16xf32> to vector<1x1x16xf32>
    %c0_12 = arith.constant 0 : index
    %c0_13 = arith.constant 0 : index
    %c0_14 = arith.constant 0 : index
    %27 = vector.load %arg6[%c0_12, %c0_13, %c0_14] : memref<1x1x16xf32, #tpu.memory_space<vmem>>, vector<1x1x16xf32>
    tpu.vector_store %arg6[%c0_12, %c0_13, %c0_14], %26 {strides = array<i32>} : memref<1x1x16xf32, #tpu.memory_space<vmem>>, vector<1x1x16xf32>,
    %28 = arith.mulf %23, %23 : vector<64x16xf32>
    %cst_15 = arith.constant dense<0.000000e+00> : vector<16xf32>
    %29 = vector.multi_reduction <add>, %28, %cst_15 [0] : vector<64x16xf32> to vector<16xf32>
    %30 = vector.shape_cast %29 : vector<16xf32> to vector<1x16xf32>
    %31 = vector.shape_cast %30 : vector<1x16xf32> to vector<1x1x16xf32>
    %c0_16 = arith.constant 0 : index
    %c0_17 = arith.constant 0 : index
    %c0_18 = arith.constant 0 : index
    %32 = vector.load %arg7[%c0_16, %c0_17, %c0_18] : memref<1x1x16xf32, #tpu.memory_space<vmem>>, vector<1x1x16xf32>
    tpu.vector_store %arg7[%c0_16, %c0_17, %c0_18], %31 {strides = array<i32>} : memref<1x1x16xf32, #tpu.memory_space<vmem>>, vector<1x1x16xf32>,
    return
  }
  func.func @transform_0(%arg0: i32) -> (i32, i32) {
    %c0_i32 = arith.constant 0 : i32
    %c0_i32_0 = arith.constant 0 : i32
    return %arg0, %c0_i32 : i32, i32
  }
  func.func @transform_1(%arg0: i32) -> (i32, i32) {
    %c0_i32 = arith.constant 0 : i32
    %c0_i32_0 = arith.constant 0 : i32
    %c0_i32_1 = arith.constant 0 : i32
    return %c0_i32, %c0_i32_0 : i32, i32
  }
  func.func @transform_2(%arg0: i32) -> (i32, i32) {
    %c0_i32 = arith.constant 0 : i32
    %c0_i32_0 = arith.constant 0 : i32
    %c0_i32_1 = arith.constant 0 : i32
    return %c0_i32, %c0_i32_0 : i32, i32
  }
  func.func @transform_3(%arg0: i32) -> (i32, i32) {
    %c0_i32 = arith.constant 0 : i32
    %c0_i32_0 = arith.constant 0 : i32
    %c0_i32_1 = arith.constant 0 : i32
    return %c0_i32, %c0_i32_0 : i32, i32
  }
  func.func @transform_4(%arg0: i32) -> (i32, i32) {
    %c0_i32 = arith.constant 0 : i32
    %c0_i32_0 = arith.constant 0 : i32
    return %arg0, %c0_i32 : i32, i32
  }
  func.func @transform_5(%arg0: i32) -> (i32, i32, i32) {
    %c0_i32 = arith.constant 0 : i32
    %c0_i32_0 = arith.constant 0 : i32
    %c0_i32_1 = arith.constant 0 : i32
    return %arg0, %c0_i32, %c0_i32_0 : i32, i32, i32
  }
  func.func @transform_6(%arg0: i32) -> (i32, i32, i32) {
    %c0_i32 = arith.constant 0 : i32
    %c0_i32_0 = arith.constant 0 : i32
    %c0_i32_1 = arith.constant 0 : i32
    return %arg0, %c0_i32, %c0_i32_0 : i32, i32, i32
  }
}

module attributes {stable_mosaic.version = 11 : i64} {
  func.func @_prenorm_bn_add_kernel(%arg0: i32, %arg1: memref<8x128xf32, #tpu.memory_space<vmem>>, %arg2: memref<8x128xf32, #tpu.memory_space<vmem>>, %arg3: memref<1x128xf32, #tpu.memory_space<vmem>>, %arg4: memref<1x128xf32, #tpu.memory_space<vmem>>, %arg5: memref<1x128xf32, #tpu.memory_space<vmem>>, %arg6: memref<1x128xf32, #tpu.memory_space<vmem>>, %arg7: memref<8x128xf32, #tpu.memory_space<vmem>>) attributes {dimension_semantics = [#tpu.dimension_semantics<parallel>], iteration_bounds = array<i64: 2>, scalar_prefetch = 0 : i64, scratch_operands = 0 : i64, tpu.core_type = #tpu.core_type<tc>, window_params = [{transform_indices = @transform_0, window_bounds = array<i64: 8, 128>}, {transform_indices = @transform_1, window_bounds = array<i64: 8, 128>}, {pipeline_mode = #tpu.pipeline_mode<synchronous>, transform_indices = @transform_2, window_bounds = array<i64: 1, 128>}, {pipeline_mode = #tpu.pipeline_mode<synchronous>, transform_indices = @transform_3, window_bounds = array<i64: 1, 128>}, {pipeline_mode = #tpu.pipeline_mode<synchronous>, transform_indices = @transform_4, window_bounds = array<i64: 1, 128>}, {pipeline_mode = #tpu.pipeline_mode<synchronous>, transform_indices = @transform_5, window_bounds = array<i64: 1, 128>}, {transform_indices = @transform_6, window_bounds = array<i64: 8, 128>}]} {
    %c0 = arith.constant 0 : index
    %c0_0 = arith.constant 0 : index
    %0 = vector.load %arg2[%c0, %c0_0] : memref<8x128xf32, #tpu.memory_space<vmem>>, vector<8x128xf32>
    %c0_1 = arith.constant 0 : index
    %c0_2 = arith.constant 0 : index
    %1 = vector.load %arg5[%c0_1, %c0_2] : memref<1x128xf32, #tpu.memory_space<vmem>>, vector<1x128xf32>
    %2 = vector.broadcast %1 : vector<1x128xf32> to vector<8x128xf32>
    %3 = arith.mulf %0, %2 : vector<8x128xf32>
    %c0_3 = arith.constant 0 : index
    %c0_4 = arith.constant 0 : index
    %4 = vector.load %arg6[%c0_3, %c0_4] : memref<1x128xf32, #tpu.memory_space<vmem>>, vector<1x128xf32>
    %5 = vector.broadcast %4 : vector<1x128xf32> to vector<8x128xf32>
    %6 = arith.addf %3, %5 : vector<8x128xf32>
    %cst = arith.constant 0.000000e+00 : f32
    %7 = vector.broadcast %cst : f32 to vector<8x128xf32>
    %8 = arith.maximumf %6, %7 : vector<8x128xf32>
    %c0_5 = arith.constant 0 : index
    %c0_6 = arith.constant 0 : index
    %9 = vector.load %arg1[%c0_5, %c0_6] : memref<8x128xf32, #tpu.memory_space<vmem>>, vector<8x128xf32>
    %c0_7 = arith.constant 0 : index
    %c0_8 = arith.constant 0 : index
    %10 = vector.load %arg3[%c0_7, %c0_8] : memref<1x128xf32, #tpu.memory_space<vmem>>, vector<1x128xf32>
    %11 = vector.broadcast %10 : vector<1x128xf32> to vector<8x128xf32>
    %12 = arith.mulf %9, %11 : vector<8x128xf32>
    %13 = arith.addf %8, %12 : vector<8x128xf32>
    %c0_9 = arith.constant 0 : index
    %c0_10 = arith.constant 0 : index
    %14 = vector.load %arg4[%c0_9, %c0_10] : memref<1x128xf32, #tpu.memory_space<vmem>>, vector<1x128xf32>
    %15 = vector.broadcast %14 : vector<1x128xf32> to vector<8x128xf32>
    %16 = arith.addf %13, %15 : vector<8x128xf32>
    %c0_11 = arith.constant 0 : index
    %c0_12 = arith.constant 0 : index
    %17 = vector.load %arg7[%c0_11, %c0_12] : memref<8x128xf32, #tpu.memory_space<vmem>>, vector<8x128xf32>
    tpu.vector_store %arg7[%c0_11, %c0_12], %16 {strides = array<i32>} : memref<8x128xf32, #tpu.memory_space<vmem>>, vector<8x128xf32>,
    return
  }
  func.func @transform_0(%arg0: i32) -> (i32, i32) {
    %c0_i32 = arith.constant 0 : i32
    %c0_i32_0 = arith.constant 0 : i32
    return %arg0, %c0_i32 : i32, i32
  }
  func.func @transform_1(%arg0: i32) -> (i32, i32) {
    %c0_i32 = arith.constant 0 : i32
    %c0_i32_0 = arith.constant 0 : i32
    return %arg0, %c0_i32 : i32, i32
  }
  func.func @transform_2(%arg0: i32) -> (i32, i32) {
    %c0_i32 = arith.constant 0 : i32
    %c0_i32_0 = arith.constant 0 : i32
    %c0_i32_1 = arith.constant 0 : i32
    return %c0_i32, %c0_i32_0 : i32, i32
  }
  func.func @transform_3(%arg0: i32) -> (i32, i32) {
    %c0_i32 = arith.constant 0 : i32
    %c0_i32_0 = arith.constant 0 : i32
    %c0_i32_1 = arith.constant 0 : i32
    return %c0_i32, %c0_i32_0 : i32, i32
  }
  func.func @transform_4(%arg0: i32) -> (i32, i32) {
    %c0_i32 = arith.constant 0 : i32
    %c0_i32_0 = arith.constant 0 : i32
    %c0_i32_1 = arith.constant 0 : i32
    return %c0_i32, %c0_i32_0 : i32, i32
  }
  func.func @transform_5(%arg0: i32) -> (i32, i32) {
    %c0_i32 = arith.constant 0 : i32
    %c0_i32_0 = arith.constant 0 : i32
    %c0_i32_1 = arith.constant 0 : i32
    return %c0_i32, %c0_i32_0 : i32, i32
  }
  func.func @transform_6(%arg0: i32) -> (i32, i32) {
    %c0_i32 = arith.constant 0 : i32
    %c0_i32_0 = arith.constant 0 : i32
    return %arg0, %c0_i32 : i32, i32
  }
}

module attributes {stable_mosaic.version = 11 : i64} {
  func.func @_matmul_stats_kernel(%arg0: i32, %arg1: memref<64x64xbf16, #tpu.memory_space<vmem>>, %arg2: memref<64x32xbf16, #tpu.memory_space<vmem>>, %arg3: memref<64x32xf32, #tpu.memory_space<vmem>>, %arg4: memref<1x1x32xf32, #tpu.memory_space<vmem>>, %arg5: memref<1x1x32xf32, #tpu.memory_space<vmem>>) attributes {dimension_semantics = [#tpu.dimension_semantics<parallel>], iteration_bounds = array<i64: 2>, scalar_prefetch = 0 : i64, scratch_operands = 0 : i64, tpu.core_type = #tpu.core_type<tc>, window_params = [{transform_indices = @transform_0, window_bounds = array<i64: 64, 64>}, {pipeline_mode = #tpu.pipeline_mode<synchronous>, transform_indices = @transform_1, window_bounds = array<i64: 64, 32>}, {transform_indices = @transform_2, window_bounds = array<i64: 64, 32>}, {transform_indices = @transform_3, window_bounds = array<i64: 1, 1, 32>}, {transform_indices = @transform_4, window_bounds = array<i64: 1, 1, 32>}]} {
    %c0 = arith.constant 0 : index
    %c0_0 = arith.constant 0 : index
    %0 = vector.load %arg1[%c0, %c0_0] : memref<64x64xbf16, #tpu.memory_space<vmem>>, vector<64x64xbf16>
    %c0_1 = arith.constant 0 : index
    %c0_2 = arith.constant 0 : index
    %1 = vector.load %arg2[%c0_1, %c0_2] : memref<64x32xbf16, #tpu.memory_space<vmem>>, vector<64x32xbf16>
    %cst = arith.constant dense<0.000000e+00> : vector<64x32xf32>
    %2 = tpu.matmul %0, %1, %cst {dimension_numbers = #tpu.dot_dimension_numbers<[1], [0], [0], [1], [0, 0, 1, 1], [], []>} : vector<64x64xbf16>, vector<64x32xbf16>, vector<64x32xf32> -> vector<64x32xf32>
    %c0_3 = arith.constant 0 : index
    %c0_4 = arith.constant 0 : index
    %3 = vector.load %arg3[%c0_3, %c0_4] : memref<64x32xf32, #tpu.memory_space<vmem>>, vector<64x32xf32>
    tpu.vector_store %arg3[%c0_3, %c0_4], %2 {strides = array<i32>} : memref<64x32xf32, #tpu.memory_space<vmem>>, vector<64x32xf32>,
    %c64_i32 = arith.constant 64 : i32
    %4 = arith.muli %arg0, %c64_i32 : i32
    %5 = tpu.iota {dimensions = array<i32: 0>} : vector<64x1xi32>
    %6 = vector.broadcast %4 : i32 to vector<64x1xi32>
    %7 = arith.addi %6, %5 : vector<64x1xi32>
    %c128_i32 = arith.constant 128 : i32
    %8 = vector.broadcast %c128_i32 : i32 to vector<64x1xi32>
    %9 = arith.cmpi slt, %7, %8 : vector<64x1xi32>
    %cst_5 = arith.constant 0.000000e+00 : f32
    %10 = vector.shape_cast %9 : vector<64x1xi1> to vector<64x1xi1>
    %11 = vector.broadcast %10 : vector<64x1xi1> to vector<64x32xi1>
    %12 = vector.broadcast %cst_5 : f32 to vector<64x32xf32>
    %13 = arith.select %11, %2, %12 : vector<64x32xi1>, vector<64x32xf32>
    %cst_6 = arith.constant dense<0.000000e+00> : vector<32xf32>
    %14 = vector.multi_reduction <add>, %13, %cst_6 [0] : vector<64x32xf32> to vector<32xf32>
    %15 = vector.shape_cast %14 : vector<32xf32> to vector<1x32xf32>
    %16 = vector.shape_cast %15 : vector<1x32xf32> to vector<1x1x32xf32>
    %c0_7 = arith.constant 0 : index
    %c0_8 = arith.constant 0 : index
    %c0_9 = arith.constant 0 : index
    %17 = vector.load %arg4[%c0_7, %c0_8, %c0_9] : memref<1x1x32xf32, #tpu.memory_space<vmem>>, vector<1x1x32xf32>
    tpu.vector_store %arg4[%c0_7, %c0_8, %c0_9], %16 {strides = array<i32>} : memref<1x1x32xf32, #tpu.memory_space<vmem>>, vector<1x1x32xf32>,
    %18 = arith.mulf %13, %13 : vector<64x32xf32>
    %cst_10 = arith.constant dense<0.000000e+00> : vector<32xf32>
    %19 = vector.multi_reduction <add>, %18, %cst_10 [0] : vector<64x32xf32> to vector<32xf32>
    %20 = vector.shape_cast %19 : vector<32xf32> to vector<1x32xf32>
    %21 = vector.shape_cast %20 : vector<1x32xf32> to vector<1x1x32xf32>
    %c0_11 = arith.constant 0 : index
    %c0_12 = arith.constant 0 : index
    %c0_13 = arith.constant 0 : index
    %22 = vector.load %arg5[%c0_11, %c0_12, %c0_13] : memref<1x1x32xf32, #tpu.memory_space<vmem>>, vector<1x1x32xf32>
    tpu.vector_store %arg5[%c0_11, %c0_12, %c0_13], %21 {strides = array<i32>} : memref<1x1x32xf32, #tpu.memory_space<vmem>>, vector<1x1x32xf32>,
    return
  }
  func.func @transform_0(%arg0: i32) -> (i32, i32) {
    %c0_i32 = arith.constant 0 : i32
    %c0_i32_0 = arith.constant 0 : i32
    return %arg0, %c0_i32 : i32, i32
  }
  func.func @transform_1(%arg0: i32) -> (i32, i32) {
    %c0_i32 = arith.constant 0 : i32
    %c0_i32_0 = arith.constant 0 : i32
    %c0_i32_1 = arith.constant 0 : i32
    return %c0_i32, %c0_i32_0 : i32, i32
  }
  func.func @transform_2(%arg0: i32) -> (i32, i32) {
    %c0_i32 = arith.constant 0 : i32
    %c0_i32_0 = arith.constant 0 : i32
    return %arg0, %c0_i32 : i32, i32
  }
  func.func @transform_3(%arg0: i32) -> (i32, i32, i32) {
    %c0_i32 = arith.constant 0 : i32
    %c0_i32_0 = arith.constant 0 : i32
    %c0_i32_1 = arith.constant 0 : i32
    return %arg0, %c0_i32, %c0_i32_0 : i32, i32, i32
  }
  func.func @transform_4(%arg0: i32) -> (i32, i32, i32) {
    %c0_i32 = arith.constant 0 : i32
    %c0_i32_0 = arith.constant 0 : i32
    %c0_i32_1 = arith.constant 0 : i32
    return %arg0, %c0_i32, %c0_i32_0 : i32, i32, i32
  }
}

module attributes {stable_mosaic.version = 11 : i64} {
  func.func @_bn_relu_kernel(%arg0: i32, %arg1: memref<16x128xf32, #tpu.memory_space<vmem>>, %arg2: memref<1x128xf32, #tpu.memory_space<vmem>>, %arg3: memref<1x128xf32, #tpu.memory_space<vmem>>, %arg4: memref<16x128xf32, #tpu.memory_space<vmem>>) attributes {dimension_semantics = [#tpu.dimension_semantics<parallel>], iteration_bounds = array<i64: 2>, scalar_prefetch = 0 : i64, scratch_operands = 0 : i64, tpu.core_type = #tpu.core_type<tc>, window_params = [{transform_indices = @transform_0, window_bounds = array<i64: 16, 128>}, {pipeline_mode = #tpu.pipeline_mode<synchronous>, transform_indices = @transform_1, window_bounds = array<i64: 1, 128>}, {pipeline_mode = #tpu.pipeline_mode<synchronous>, transform_indices = @transform_2, window_bounds = array<i64: 1, 128>}, {transform_indices = @transform_3, window_bounds = array<i64: 16, 128>}]} {
    %c0 = arith.constant 0 : index
    %c0_0 = arith.constant 0 : index
    %0 = vector.load %arg1[%c0, %c0_0] : memref<16x128xf32, #tpu.memory_space<vmem>>, vector<16x128xf32>
    %c0_1 = arith.constant 0 : index
    %c0_2 = arith.constant 0 : index
    %1 = vector.load %arg2[%c0_1, %c0_2] : memref<1x128xf32, #tpu.memory_space<vmem>>, vector<1x128xf32>
    %2 = vector.broadcast %1 : vector<1x128xf32> to vector<16x128xf32>
    %3 = arith.mulf %0, %2 : vector<16x128xf32>
    %c0_3 = arith.constant 0 : index
    %c0_4 = arith.constant 0 : index
    %4 = vector.load %arg3[%c0_3, %c0_4] : memref<1x128xf32, #tpu.memory_space<vmem>>, vector<1x128xf32>
    %5 = vector.broadcast %4 : vector<1x128xf32> to vector<16x128xf32>
    %6 = arith.addf %3, %5 : vector<16x128xf32>
    %cst = arith.constant 0.000000e+00 : f32
    %7 = vector.broadcast %cst : f32 to vector<16x128xf32>
    %8 = arith.maximumf %6, %7 : vector<16x128xf32>
    %c0_5 = arith.constant 0 : index
    %c0_6 = arith.constant 0 : index
    %9 = vector.load %arg4[%c0_5, %c0_6] : memref<16x128xf32, #tpu.memory_space<vmem>>, vector<16x128xf32>
    tpu.vector_store %arg4[%c0_5, %c0_6], %8 {strides = array<i32>} : memref<16x128xf32, #tpu.memory_space<vmem>>, vector<16x128xf32>,
    return
  }
  func.func @transform_0(%arg0: i32) -> (i32, i32) {
    %c0_i32 = arith.constant 0 : i32
    %c0_i32_0 = arith.constant 0 : i32
    return %arg0, %c0_i32 : i32, i32
  }
  func.func @transform_1(%arg0: i32) -> (i32, i32) {
    %c0_i32 = arith.constant 0 : i32
    %c0_i32_0 = arith.constant 0 : i32
    %c0_i32_1 = arith.constant 0 : i32
    return %c0_i32, %c0_i32_0 : i32, i32
  }
  func.func @transform_2(%arg0: i32) -> (i32, i32) {
    %c0_i32 = arith.constant 0 : i32
    %c0_i32_0 = arith.constant 0 : i32
    %c0_i32_1 = arith.constant 0 : i32
    return %c0_i32, %c0_i32_0 : i32, i32
  }
  func.func @transform_3(%arg0: i32) -> (i32, i32) {
    %c0_i32 = arith.constant 0 : i32
    %c0_i32_0 = arith.constant 0 : i32
    return %arg0, %c0_i32 : i32, i32
  }
}

module attributes {stable_mosaic.version = 11 : i64} {
  func.func @_matmul_tanh_kernel(%arg0: i32, %arg1: memref<256x32xbf16, #tpu.memory_space<vmem>>, %arg2: memref<32x12xbf16, #tpu.memory_space<vmem>>, %arg3: memref<256x12xf32, #tpu.memory_space<vmem>>) attributes {dimension_semantics = [#tpu.dimension_semantics<parallel>], iteration_bounds = array<i64: 2>, scalar_prefetch = 0 : i64, scratch_operands = 0 : i64, tpu.core_type = #tpu.core_type<tc>, window_params = [{transform_indices = @transform_0, window_bounds = array<i64: 256, 32>}, {pipeline_mode = #tpu.pipeline_mode<synchronous>, transform_indices = @transform_1, window_bounds = array<i64: 32, 12>}, {transform_indices = @transform_2, window_bounds = array<i64: 256, 12>}]} {
    %c0 = arith.constant 0 : index
    %c0_0 = arith.constant 0 : index
    %0 = vector.load %arg1[%c0, %c0_0] : memref<256x32xbf16, #tpu.memory_space<vmem>>, vector<256x32xbf16>
    %c0_1 = arith.constant 0 : index
    %c0_2 = arith.constant 0 : index
    %1 = vector.load %arg2[%c0_1, %c0_2] : memref<32x12xbf16, #tpu.memory_space<vmem>>, vector<32x12xbf16>
    %cst = arith.constant dense<0.000000e+00> : vector<256x12xf32>
    %2 = tpu.matmul %0, %1, %cst {dimension_numbers = #tpu.dot_dimension_numbers<[1], [0], [0], [1], [0, 0, 1, 1], [], []>} : vector<256x32xbf16>, vector<32x12xbf16>, vector<256x12xf32> -> vector<256x12xf32>
    %3 = math.tanh %2 : vector<256x12xf32>
    %c0_3 = arith.constant 0 : index
    %c0_4 = arith.constant 0 : index
    %4 = vector.load %arg3[%c0_3, %c0_4] : memref<256x12xf32, #tpu.memory_space<vmem>>, vector<256x12xf32>
    tpu.vector_store %arg3[%c0_3, %c0_4], %3 {strides = array<i32>} : memref<256x12xf32, #tpu.memory_space<vmem>>, vector<256x12xf32>,
    return
  }
  func.func @transform_0(%arg0: i32) -> (i32, i32) {
    %c0_i32 = arith.constant 0 : i32
    %c0_i32_0 = arith.constant 0 : i32
    return %arg0, %c0_i32 : i32, i32
  }
  func.func @transform_1(%arg0: i32) -> (i32, i32) {
    %c0_i32 = arith.constant 0 : i32
    %c0_i32_0 = arith.constant 0 : i32
    %c0_i32_1 = arith.constant 0 : i32
    return %c0_i32, %c0_i32_0 : i32, i32
  }
  func.func @transform_2(%arg0: i32) -> (i32, i32) {
    %c0_i32 = arith.constant 0 : i32
    %c0_i32_0 = arith.constant 0 : i32
    return %arg0, %c0_i32 : i32, i32
  }
}

</mosaic_0001>

<llo_original>
// kernel: aegan_resnet_decoder_forward.11
$region0: #{aegan_resnet_decoder_forward.11}
  #allocation0 [shape = 'u32[]', space=smem, size = 0x4, offset = 0x4, fixed_abs, tag = 'smem constant byte address 0x4 - core index']
  #allocation1 [shape = 'u32[144,128]{1,0:T(1,128)}', space=vmem, size = 0x12000, scoped, tag = 'internal scratch']
  %s0 = inlined_call_operand.vmem [shape: bf16[16,16], index: 0, kind: input, shape index: {}]
  %s1 = inlined_call_operand.vmem [shape: bf16[16,512], index: 1, kind: input, shape index: {}]
  %s2 = inlined_call_operand.hbm [shape: f32[1,512], index: 2, kind: input, shape index: {}]
  %s3 = inlined_call_operand.vmem [shape: f32[16,512], index: 3, kind: output, shape index: {}]
  %s4 = sld [smem:[#allocation0]]
  $region26: #{aegan_resnet_decoder_forward.11} parent=0
    _
  %s6 = ssub.s32 1, %s4
  %s7 = scalar_select 0, %s6, %s4
  $region1: #{aegan_resnet_decoder_forward.11} parent=0
    #allocation2 [shape = 'u8[2048]{0}', space=vmem, size = 0x800, scoped, tag = 'input window, operand 2, single buffered']
    #allocation3 [shape = 's32[1]{0}', space=sflag, size = 0x4, scoped, tag = 'scoped memory for aegan_resnet_decoder_forward.11']
    %8 = vsyncpa [#allocation3], 0
    // Predicated region
    $region2: #{aegan_resnet_decoder_forward.11} parent=1 // pred_check
      _
    $region3: #{aegan_resnet_decoder_forward.11} parent=1 // pred_check_branch
      %10 = sbr.rel (0) target = $region5
    $region4: #{aegan_resnet_decoder_forward.11} parent=1 // pred_region
      _
    $region5: #{aegan_resnet_decoder_forward.11} parent=1 // pred_fallthru
      _
    // Predicated region
    $region6: #{aegan_resnet_decoder_forward.11} parent=1 // pred_check
      _
    $region7: #{aegan_resnet_decoder_forward.11} parent=1 // pred_check_branch
      %12 = sbr.rel (0) target = $region9
    $region8: #{aegan_resnet_decoder_forward.11} parent=1 // pred_region
      _
    $region9: #{aegan_resnet_decoder_forward.11} parent=1 // pred_fallthru
      _
    // Predicated region
    $region10: #{aegan_resnet_decoder_forward.11} parent=1 // pred_check
      _
    $region11: #{aegan_resnet_decoder_forward.11} parent=1 // pred_check_branch
      %14 = sbr.rel (0) target = $region13
    $region12: #{aegan_resnet_decoder_forward.11} parent=1 // pred_region
      %s16 = ssub.s32 64, 64
      %17 = vsyncadd [#allocation3], %s16
      %s19 = sshll.u32 [#allocation2], 4
      %s20 = int_to_ptr.vmem [resolvable:$true] %s19
      %22 = dma.hbm_to_vmem [thread:$0]  %s2, 64, %s20, [#allocation3]
    $region13: #{aegan_resnet_decoder_forward.11} parent=1 // pred_fallthru
      _
    // Predicated region
    $region14: #{aegan_resnet_decoder_forward.11} parent=1 // pred_check
      _
    $region15: #{aegan_resnet_decoder_forward.11} parent=1 // pred_check_branch
      %24 = sbr.rel (0) target = $region17
    $region16: #{aegan_resnet_decoder_forward.11} parent=1 // pred_region
      %25 = dma.done [#allocation3], 64
    $region17: #{aegan_resnet_decoder_forward.11} parent=1 // pred_fallthru
      _
    %v27 = vld [vmem:[%s0] sm:$0xf]
    %v28 = vld [vmem:[%s0 + $0x4] sm:$0xf]
    %v29 = vld [vmem:[%s1] sm:$0xff]
    %v30 = vld [vmem:[%s1 + $0x8] sm:$0xff]
    %v31 = vld [vmem:[%s1 + $0x10] sm:$0xff]
    %v32 = vld [vmem:[%s1 + $0x18] sm:$0xff]
    %v33 = vld [vmem:[#allocation2] sm:$0xf]
    %v35 = vlaneseq
    %v36 = vshrl.u32 %v35, 7
    %v37 = vsub.s32 0, %v36
    %v38 = vrot.slane %v33, %v37
    %v39 = vlaneseq
    %v40 = vshrl.u32 %v39, 7
    %v41 = vsub.s32 1, %v40
    %v42 = vrot.slane %v33, %v41
    %v43 = vlaneseq
    %v44 = vshrl.u32 %v43, 7
    %v45 = vsub.s32 2, %v44
    %v46 = vrot.slane %v33, %v45
    %v47 = vlaneseq
    %v48 = vshrl.u32 %v47, 7
    %v49 = vsub.s32 3, %v48
    %v50 = vrot.slane %v33, %v49
    %v57 = vunpack.c.l.b16 %v27
    %v58 = vunpack.c.l.b16 %v28
    %v59 = vpack.c.b16 %v58, %v57
    %v64 = vunpack.c.l.b16 %v29
    %v65 = vunpack.c.h.b16 %v29
    %v66 = vunpack.c.l.b16 %v30
    %v67 = vunpack.c.h.b16 %v30
    %v68 = vunpack.c.l.b16 %v31
    %v69 = vunpack.c.h.b16 %v31
    %v70 = vunpack.c.l.b16 %v32
    %v71 = vunpack.c.h.b16 %v32
    %v72 = vpack.c.b16 %v68, %v64
    %v73 = vpack.c.b16 %v69, %v65
    %v74 = vpack.c.b16 %v70, %v66
    %v75 = vpack.c.b16 %v71, %v67
    %vm80 = vcmask 130048
    %v82 = vsel %vm80, %v59, 0
    %84 = vmatprep.subr.bf16.mxu0 %v73
    %85 = vmatpush1.bf16.msra.mxu0 %v72
    %86 = vmatprep.subr.bf16.mxu0 0
    %87 = vmatpush1.bf16.msra.mxu0 0
    %88 = vmatprep.subr.bf16.mxu0 0
    %89 = vmatpush1.bf16.msra.mxu0 0
    %90 = vmatprep.subr.bf16.mxu0 0
    %91 = vmatpush1.bf16.msra.mxu0 0
    %92 = vmatprep.subr.bf16.mxu0 0
    %93 = vmatpush1.bf16.msra.mxu0 0
    %94 = vmatprep.subr.bf16.mxu0 0
    %95 = vmatpush1.bf16.msra.mxu0 0
    %96 = vmatprep.subr.bf16.mxu0 0
    %97 = vmatpush1.bf16.msra.mxu0 0
    %98 = vmatprep.subr.bf16.mxu0 0
    %99 = vmatpush1.bf16.msra.mxu0 0
    %100 = vmatprep.subr.bf16.mxu0 0
    %101 = vmatpush1.bf16.msra.mxu0 0
    %102 = vmatprep.subr.bf16.mxu0 0
    %103 = vmatpush1.bf16.msra.mxu0 0
    %104 = vmatprep.subr.bf16.mxu0 0
    %105 = vmatpush1.bf16.msra.mxu0 0
    %106 = vmatprep.subr.bf16.mxu0 0
    %107 = vmatpush1.bf16.msra.mxu0 0
    %108 = vmatprep.subr.bf16.mxu0 0
    %109 = vmatpush1.bf16.msra.mxu0 0
    %110 = vmatprep.subr.bf16.mxu0 0
    %111 = vmatpush1.bf16.msra.mxu0 0
    %112 = vmatprep.subr.bf16.mxu0 0
    %113 = vmatpush1.bf16.msra.mxu0 0
    %114 = vmatprep.subr.bf16.mxu0 0
    %115 = vmatpush1.bf16.msra.mxu0 0
    %116 = vmatprep.mubr.bf16.mxu0 0
    %117 = vmatmul.mubr.bf16.gmra.mrb[0].mxu0 %v82
    %v118 = vpop.f32.mrb[0].mxu0
    %v119 = vadd.f32 %v38, %v118
    %v120 = vpop.f32.mrb[0].mxu0
    %v121 = vadd.f32 %v42, %v120
    %v122 = vpop.f32.mrb[0].mxu0
    %v123 = vadd.f32 %v38, %v122
    %v124 = vpop.f32.mrb[0].mxu0
    %v125 = vadd.f32 %v42, %v124
    %126 = vdwg.mxu0
    %127 = vmatprep.subr.bf16.mxu0 %v75
    %128 = vmatpush1.bf16.msra.mxu0 %v74
    %129 = vmatprep.subr.bf16.mxu0 0
    %130 = vmatpush1.bf16.msra.mxu0 0
    %131 = vmatprep.subr.bf16.mxu0 0
    %132 = vmatpush1.bf16.msra.mxu0 0
    %133 = vmatprep.subr.bf16.mxu0 0
    %134 = vmatpush1.bf16.msra.mxu0 0
    %135 = vmatprep.subr.bf16.mxu0 0
    %136 = vmatpush1.bf16.msra.mxu0 0
    %137 = vmatprep.subr.bf16.mxu0 0
    %138 = vmatpush1.bf16.msra.mxu0 0
    %139 = vmatprep.subr.bf16.mxu0 0
    %140 = vmatpush1.bf16.msra.mxu0 0
    %141 = vmatprep.subr.bf16.mxu0 0
    %142 = vmatpush1.bf16.msra.mxu0 0
    %143 = vmatprep.subr.bf16.mxu0 0
    %144 = vmatpush1.bf16.msra.mxu0 0
    %145 = vmatprep.subr.bf16.mxu0 0
    %146 = vmatpush1.bf16.msra.mxu0 0
    %147 = vmatprep.subr.bf16.mxu0 0
    %148 = vmatpush1.bf16.msra.mxu0 0
    %149 = vmatprep.subr.bf16.mxu0 0
    %150 = vmatpush1.bf16.msra.mxu0 0
    %151 = vmatprep.subr.bf16.mxu0 0
    %152 = vmatpush1.bf16.msra.mxu0 0
    %153 = vmatprep.subr.bf16.mxu0 0
    %154 = vmatpush1.bf16.msra.mxu0 0
    %155 = vmatprep.subr.bf16.mxu0 0
    %156 = vmatpush1.bf16.msra.mxu0 0
    %157 = vmatprep.subr.bf16.mxu0 0
    %158 = vmatpush1.bf16.msra.mxu0 0
    %159 = vmatprep.mubr.bf16.mxu0 0
    %160 = vmatmul.mubr.bf16.gmra.mrb[0].mxu0 %v82
    %v161 = vpop.f32.mrb[0].mxu0
    %v162 = vadd.f32 %v46, %v161
    %v163 = vpop.f32.mrb[0].mxu0
    %v164 = vadd.f32 %v50, %v163
    %v165 = vpop.f32.mrb[0].mxu0
    %v166 = vadd.f32 %v46, %v165
    %v167 = vpop.f32.mrb[0].mxu0
    %v168 = vadd.f32 %v50, %v167
    %169 = vdwg.mxu0
    %v170 = vmax.f32 %v119, 0.0
    %v171 = vmax.f32 %v121, 0.0
    %v172 = vmax.f32 %v162, 0.0
    %v173 = vmax.f32 %v164, 0.0
    %v174 = vmax.f32 %v123, 0.0
    %v175 = vmax.f32 %v125, 0.0
    %v176 = vmax.f32 %v166, 0.0
    %v177 = vmax.f32 %v168, 0.0
    %178 = vst [vmem:[%s3] sm:$0xff] %v170
    %179 = vst [vmem:[%s3 + $0x8] sm:$0xff] %v171
    %180 = vst [vmem:[%s3 + $0x10] sm:$0xff] %v172
    %181 = vst [vmem:[%s3 + $0x18] sm:$0xff] %v173
    %182 = vst [vmem:[%s3 + $0x20] sm:$0xff] %v174
    %183 = vst [vmem:[%s3 + $0x28] sm:$0xff] %v175
    %184 = vst [vmem:[%s3 + $0x30] sm:$0xff] %v176
    %185 = vst [vmem:[%s3 + $0x38] sm:$0xff] %v177
    // Predicated region
    $region18: #{aegan_resnet_decoder_forward.11} parent=1 // pred_check
      _
    $region19: #{aegan_resnet_decoder_forward.11} parent=1 // pred_check_branch
      %187 = sbr.rel (0) target = $region21
    $region20: #{aegan_resnet_decoder_forward.11} parent=1 // pred_region
      _
    $region21: #{aegan_resnet_decoder_forward.11} parent=1 // pred_fallthru
      _
    // Predicated region
    $region22: #{aegan_resnet_decoder_forward.11} parent=1 // pred_check
      _
    $region23: #{aegan_resnet_decoder_forward.11} parent=1 // pred_check_branch
      %189 = sbr.rel (0) target = $region25
    $region24: #{aegan_resnet_decoder_forward.11} parent=1 // pred_region
      _
    $region25: #{aegan_resnet_decoder_forward.11} parent=1 // pred_fallthru
      _
    %190 = vsyncpa [#allocation3], 1

// kernel: aegan_resnet_decoder_forward.12
$region0: #{aegan_resnet_decoder_forward.12}
  #allocation0 [shape = 'u32[]', space=smem, size = 0x4, offset = 0x4, fixed_abs, tag = 'smem constant byte address 0x4 - core index']
  #allocation1 [shape = 'u32[144,128]{1,0:T(1,128)}', space=vmem, size = 0x12000, scoped, tag = 'internal scratch']
  %s0 = inlined_call_operand.vmem [shape: bf16[32,288], index: 0, kind: input, shape index: {}]
  %s1 = inlined_call_operand.hbm [shape: bf16[288,32], index: 1, kind: input, shape index: {}]
  %s2 = inlined_call_operand.vmem [shape: f32[32,32], index: 2, kind: output, shape index: {0}]
  %s3 = inlined_call_operand.vmem [shape: f32[2,1,32], index: 3, kind: output, shape index: {1}]
  %s4 = inlined_call_operand.vmem [shape: f32[2,1,32], index: 4, kind: output, shape index: {2}]
  %5 = xla_tuple %s2, %s3, %s4
  %s6 = sld [smem:[#allocation0]]
  $region61: #{aegan_resnet_decoder_forward.12} parent=0
    _
  %s8 = ssub.s32 1, %s6
  %s9 = scalar_select 0, %s8, %s6
  $region1: #{aegan_resnet_decoder_forward.12} parent=0
    #allocation2 [shape = 'u8[73728]{0}', space=vmem, size = 0x12000, scoped, tag = 'input window, operand 1, single buffered']
    #allocation3 [shape = 's32[2]{0}', space=sflag, size = 0x8, scoped, tag = 'scoped memory for aegan_resnet_decoder_forward.12']
    %10 = vsyncpa [#allocation3], 0
    loop: start=0, step=1, limit=4
    $region2: #{aegan_resnet_decoder_forward.12} parent=1 // loop_pre_header
      _
    $region3: #{aegan_resnet_decoder_forward.12} parent=1 // loop_header
      %s12 = sphi 0, %s16
      %p13 = scmp.ge.s32.totalorder %s12, 4
      %s22 = sphi 0, %s24
      %s25 = sphi 0, %s22
      %s26 = sphi 0, %s25
      %s42 = sphi 0, %s26
      %s46 = sphi 0, %s46
      %s48 = sphi 0, %s46
      %s49 = sphi 0, %s48
      %s63 = sphi 0, %s49
      %s69 = sphi 0, %s71
      %s72 = sphi 0, %s69
      %s73 = sphi 0, %s72
      %s89 = sphi 0, %s73
      %s95 = sphi 0, %s97
      %s98 = sphi 0, %s95
      %s99 = sphi 0, %s98
      %s115 = sphi 0, %s99
      %s121 = sphi 0, %s123
      %s124 = sphi 0, %s121
      %s125 = sphi 0, %s124
      %s141 = sphi 0, %s125
    $region4: #{aegan_resnet_decoder_forward.12} parent=1 // loop_header_branch
      %15 = sbr.rel (%p13) target = $region8
    $region5: #{aegan_resnet_decoder_forward.12} parent=1 // loop_body
      %s17 = ssub.s32 %s12, 1
      %s18 = ssub.s32 %s12, 2
      %s19 = sadd.s32 %s12, 1
      %s20 = ssub.s32 %s12, %s19
      %p21 = scmp.eq.s32.totalorder %s20, 0
      %s23 = sadd.s32 %s22, 1
      %s24 = scalar_select %p21, %s22, %s23
      %p27 = pneg %p21
      %p28 = scmp.eq.s32.totalorder %s12, 1
      %p29 = por %p27, %p28
      %p30 = scmp.ne.s32.totalorder %s22, %s25
      %p31 = scmp.eq.s32.totalorder %s12, 0
      %p32 = por %p30, %p31
      %p33 = scmp.ne.s32.totalorder %s22, %s25
      %p34 = scmp.eq.s32.totalorder %s17, 1
      %p35 = por %p33, %p34
      %p36 = scmp.ne.s32.totalorder %s25, %s26
      %p37 = scmp.eq.s32.totalorder %s17, 0
      %p38 = por %p36, %p37
      %p39 = scmp.ne.s32.totalorder %s25, %s26
      %p40 = scmp.eq.s32.totalorder %s18, 1
      %p41 = por %p39, %p40
      %p43 = scmp.ne.s32.totalorder %s26, %s42
      %p44 = scmp.eq.s32.totalorder %s18, 0
      %p45 = por %p43, %p44
      %s47 = sadd.s32 %s46, 1
      %p50 = scmp.eq.s32.totalorder %s12, 1
      %p51 = scmp.ne.s32.totalorder %s46, %s48
      %p52 = scmp.eq.s32.totalorder %s12, 0
      %p53 = por %p51, %p52
      %p54 = scmp.ne.s32.totalorder %s46, %s48
      %p55 = scmp.eq.s32.totalorder %s17, 1
      %p56 = por %p54, %p55
      %p57 = scmp.ne.s32.totalorder %s48, %s49
      %p58 = scmp.eq.s32.totalorder %s17, 0
      %p59 = por %p57, %p58
      %p60 = scmp.ne.s32.totalorder %s48, %s49
      %p61 = scmp.eq.s32.totalorder %s18, 1
      %p62 = por %p60, %p61
      %p64 = scmp.ne.s32.totalorder %s49, %s63
      %p65 = scmp.eq.s32.totalorder %s18, 0
      %p66 = por %p64, %p65
      %s67 = ssub.s32 %s12, %s19
      %p68 = scmp.eq.s32.totalorder %s67, 0
      %s70 = sadd.s32 %s69, 1
      %s71 = scalar_select %p68, %s69, %s70
      %p74 = pneg %p68
      %p75 = scmp.eq.s32.totalorder %s12, 1
      %p76 = por %p74, %p75
      %p77 = scmp.ne.s32.totalorder %s69, %s72
      %p78 = scmp.eq.s32.totalorder %s12, 0
      %p79 = por %p77, %p78
      %p80 = scmp.ne.s32.totalorder %s69, %s72
      %p81 = scmp.eq.s32.totalorder %s17, 1
      %p82 = por %p80, %p81
      %p83 = scmp.ne.s32.totalorder %s72, %s73
      %p84 = scmp.eq.s32.totalorder %s17, 0
      %p85 = por %p83, %p84
      %p86 = scmp.ne.s32.totalorder %s72, %s73
      %p87 = scmp.eq.s32.totalorder %s18, 1
      %p88 = por %p86, %p87
      %p90 = scmp.ne.s32.totalorder %s73, %s89
      %p91 = scmp.eq.s32.totalorder %s18, 0
      %p92 = por %p90, %p91
      %s93 = ssub.s32 %s12, %s19
      %p94 = scmp.eq.s32.totalorder %s93, 0
      %s96 = sadd.s32 %s95, 1
      %s97 = scalar_select %p94, %s95, %s96
      %p100 = pneg %p94
      %p101 = scmp.eq.s32.totalorder %s12, 1
      %p102 = por %p100, %p101
      %p103 = scmp.ne.s32.totalorder %s95, %s98
      %p104 = scmp.eq.s32.totalorder %s12, 0
      %p105 = por %p103, %p104
      %p106 = scmp.ne.s32.totalorder %s95, %s98
      %p107 = scmp.eq.s32.totalorder %s17, 1
      %p108 = por %p106, %p107
      %p109 = scmp.ne.s32.totalorder %s98, %s99
      %p110 = scmp.eq.s32.totalorder %s17, 0
      %p111 = por %p109, %p110
      %p112 = scmp.ne.s32.totalorder %s98, %s99
      %p113 = scmp.eq.s32.totalorder %s18, 1
      %p114 = por %p112, %p113
      %p116 = scmp.ne.s32.totalorder %s99, %s115
      %p117 = scmp.eq.s32.totalorder %s18, 0
      %p118 = por %p116, %p117
      %s119 = ssub.s32 %s12, %s19
      %p120 = scmp.eq.s32.totalorder %s119, 0
      %s122 = sadd.s32 %s121, 1
      %s123 = scalar_select %p120, %s121, %s122
      %p126 = pneg %p120
      %p127 = scmp.eq.s32.totalorder %s12, 1
      %p128 = por %p126, %p127
      %p129 = scmp.ne.s32.totalorder %s121, %s124
      %p130 = scmp.eq.s32.totalorder %s12, 0
      %p131 = por %p129, %p130
      %p132 = scmp.ne.s32.totalorder %s121, %s124
      %p133 = scmp.eq.s32.totalorder %s17, 1
      %p134 = por %p132, %p133
      %p135 = scmp.ne.s32.totalorder %s124, %s125
      %p136 = scmp.eq.s32.totalorder %s17, 0
      %p137 = por %p135, %p136
      %p138 = scmp.ne.s32.totalorder %s124, %s125
      %p139 = scmp.eq.s32.totalorder %s18, 1
      %p140 = por %p138, %p139
      %p142 = scmp.ne.s32.totalorder %s125, %s141
      %p143 = scmp.eq.s32.totalorder %s18, 0
      %p144 = por %p142, %p143
      %p145 = scmp.le.s32.totalorder 1, %s12
      %p146 = scmp.lt.s32.totalorder %s12, 3
      %p147 = pnand %p145, %p146
      %p148 = pneg %p147
      // Predicated region
      $region9: #{aegan_resnet_decoder_forward.12} parent=5 // pred_check
        _
      $region10: #{aegan_resnet_decoder_forward.12} parent=5 // pred_check_branch
        %150 = sbr.rel (%p147) target = $region12
      $region11: #{aegan_resnet_decoder_forward.12} parent=5 // pred_region
        %s151 = ssub.s32 %s12, 1
        // Predicated region
        $region13: #{aegan_resnet_decoder_forward.12} parent=11 // pred_check
          %p152 = pneg %p59
        $region14: #{aegan_resnet_decoder_forward.12} parent=11 // pred_check_branch
          %154 = sbr.rel (%p152) target = $region16
        $region15: #{aegan_resnet_decoder_forward.12} parent=11 // pred_region
          %s156 = ssub.s32 2304, 2304
          %157 = vsyncadd [#allocation3], %s156
          %s158 = sshll.u32 [#allocation2], 4
          %s159 = int_to_ptr.vmem [resolvable:$true] %s158
          %164 = dma.hbm_to_vmem [thread:$0]  %s1, 2304, %s159, [#allocation3], 64, 64, 4
        $region16: #{aegan_resnet_decoder_forward.12} parent=11 // pred_fallthru
          _
      $region12: #{aegan_resnet_decoder_forward.12} parent=5 // pred_fallthru
        _
      %p165 = scmp.lt.s32.totalorder %s12, 2
      // Predicated region
      $region17: #{aegan_resnet_decoder_forward.12} parent=5 // pred_check
        %p166 = pneg %p165
      $region18: #{aegan_resnet_decoder_forward.12} parent=5 // pred_check_branch
        %168 = sbr.rel (%p166) target = $region20
      $region19: #{aegan_resnet_decoder_forward.12} parent=5 // pred_region
        // Predicated region
        $region21: #{aegan_resnet_decoder_forward.12} parent=19 // pred_check
          %p169 = pneg %p32
        $region22: #{aegan_resnet_decoder_forward.12} parent=19 // pred_check_branch
          %171 = sbr.rel (%p169) target = $region24
        $region23: #{aegan_resnet_decoder_forward.12} parent=19 // pred_region
          %s172 = smul.u32 2, %s12
          %p173 = scmp.lt.s32.totalorder %s172, 3
          %s174 = scalar_select %p173, %s172, 3
          %s175 = smul.addr %s174, 3
          %s176 = smul.addr %s175, 4
          %s177 = scalar_lea.vmem %s0, %s176
          %s178 = smul.u32 2, %s12
        $region24: #{aegan_resnet_decoder_forward.12} parent=19 // pred_fallthru
          _
      $region20: #{aegan_resnet_decoder_forward.12} parent=5 // pred_fallthru
        _
      %p179 = scmp.le.s32.totalorder 1, %s12
      %p180 = scmp.lt.s32.totalorder %s12, 3
      %p181 = pnand %p179, %p180
      %p182 = pneg %p181
      // Predicated region
      $region25: #{aegan_resnet_decoder_forward.12} parent=5 // pred_check
        _
      $region26: #{aegan_resnet_decoder_forward.12} parent=5 // pred_check_branch
        %184 = sbr.rel (%p181) target = $region28
      $region27: #{aegan_resnet_decoder_forward.12} parent=5 // pred_region
        %s185 = ssub.s32 %s12, 1
        // Predicated region
        $region29: #{aegan_resnet_decoder_forward.12} parent=27 // pred_check
          %p186 = pneg %p59
        $region30: #{aegan_resnet_decoder_forward.12} parent=27 // pred_check_branch
          %188 = sbr.rel (%p186) target = $region32
        $region31: #{aegan_resnet_decoder_forward.12} parent=27 // pred_region
          %189 = dma.done [#allocation3], 2304
        $region32: #{aegan_resnet_decoder_forward.12} parent=27 // pred_fallthru
          _
        %s190 = smul.u32 2, %s17
        %p191 = scmp.lt.s32.totalorder %s190, 3
        %s192 = scalar_select %p191, %s190, 3
        %s193 = smul.addr %s192, 3
        %s194 = smul.addr %s193, 4
        %s195 = scalar_lea.vmem %s0, %s194
        %p196 = pneg %p38
        %p197 = pneg %p35
        %p198 = pneg %p59
        %p199 = pneg %p56
        %p200 = pneg %p85
        %p201 = pneg %p82
        %s202 = smul.u32 2, %s17
        %p203 = scmp.lt.s32.totalorder %s202, 3
        %s204 = scalar_select %p203, %s202, 3
        %s205 = smul.addr %s204, 8
        %s206 = scalar_lea.vmem %s2, %s205
        %p207 = pneg %p111
        %p208 = pneg %p108
        %p209 = scmp.lt.s32.totalorder %s17, 1
        %s210 = scalar_select %p209, %s17, 1
        %s211 = scalar_lea.vmem %s3, %s210
        %p212 = pneg %p137
        %p213 = pneg %p134
        %p214 = scmp.lt.s32.totalorder %s17, 1
        %s215 = scalar_select %p214, %s17, 1
        %s216 = scalar_lea.vmem %s4, %s215
        %s217 = smul.u32 2, %s17
        %p218 = scmp.lt.s32.totalorder %s217, 3
        %s219 = scalar_select %p218, %s217, 3
        %s220 = smul.addr %s219, 3
        %s221 = smul.addr %s220, 4
        %s222 = scalar_lea.vmem %s0, %s221
        %s223 = smul.u32 2, %s17
        %s224 = smul.u32 2, %s17
        %p225 = scmp.lt.s32.totalorder %s224, 3
        %s226 = scalar_select %p225, %s224, 3
        %s227 = smul.addr %s226, 8
        %s228 = scalar_lea.vmem %s2, %s227
        %s229 = smul.u32 2, %s17
        %p230 = scmp.lt.s32.totalorder %s17, 1
        %s231 = scalar_select %p230, %s17, 1
        %s232 = scalar_lea.vmem %s3, %s231
        %p233 = scmp.lt.s32.totalorder %s17, 1
        %s234 = scalar_select %p233, %s17, 1
        %s235 = scalar_lea.vmem %s4, %s234
        %v237 = vld [vmem:[%s222] sm:$0xff]
        %v238 = vld [vmem:[%s222 + $0x8] sm:$0xf]
        %v239 = vld [vmem:[%s222 + $0xc] sm:$0xff]
        %v240 = vld [vmem:[%s222 + $0x14] sm:$0xf]
        %v241 = vld [vmem:[#allocation2] sm:$0xf]
        %v242 = vld [vmem:[#allocation2 + $0x4] sm:$0xf]
        %v243 = vld [vmem:[#allocation2 + $0x8] sm:$0xf]
        %v244 = vld [vmem:[#allocation2 + $0xc] sm:$0xf]
        %v245 = vld [vmem:[#allocation2 + $0x10] sm:$0xf]
        %v246 = vld [vmem:[#allocation2 + $0x14] sm:$0xf]
        %v247 = vld [vmem:[#allocation2 + $0x18] sm:$0xf]
        %v248 = vld [vmem:[#allocation2 + $0x1c] sm:$0xf]
        %v249 = vld [vmem:[#allocation2 + $0x20] sm:$0xf]
        %v250 = vld [vmem:[#allocation2 + $0x24] sm:$0xf]
        %v251 = vld [vmem:[#allocation2 + $0x28] sm:$0xf]
        %v252 = vld [vmem:[#allocation2 + $0x2c] sm:$0xf]
        %v253 = vld [vmem:[#allocation2 + $0x30] sm:$0xf]
        %v254 = vld [vmem:[#allocation2 + $0x34] sm:$0xf]
        %v255 = vld [vmem:[#allocation2 + $0x38] sm:$0xf]
        %v256 = vld [vmem:[#allocation2 + $0x3c] sm:$0xf]
        %v257 = vld [vmem:[#allocation2 + $0x40] sm:$0xf]
        %v258 = vld [vmem:[#allocation2 + $0x44] sm:$0xf]
        %v259 = vld [vmem:[#allocation2 + $0x48] sm:$0xf]
        %v260 = vld [vmem:[#allocation2 + $0x4c] sm:$0xf]
        %v261 = vld [vmem:[#allocation2 + $0x50] sm:$0xf]
        %v262 = vld [vmem:[#allocation2 + $0x54] sm:$0xf]
        %v263 = vld [vmem:[#allocation2 + $0x58] sm:$0xf]
        %v264 = vld [vmem:[#allocation2 + $0x5c] sm:$0xf]
        %v265 = vld [vmem:[#allocation2 + $0x60] sm:$0xf]
        %v266 = vld [vmem:[#allocation2 + $0x64] sm:$0xf]
        %v267 = vld [vmem:[#allocation2 + $0x68] sm:$0xf]
        %v268 = vld [vmem:[#allocation2 + $0x6c] sm:$0xf]
        %v269 = vld [vmem:[#allocation2 + $0x70] sm:$0xf]
        %v270 = vld [vmem:[#allocation2 + $0x74] sm:$0xf]
        %v271 = vld [vmem:[#allocation2 + $0x78] sm:$0xf]
        %v272 = vld [vmem:[#allocation2 + $0x7c] sm:$0xf]
        %v273 = vld [vmem:[#allocation2 + $0x80] sm:$0xf]
        %v274 = vld [vmem:[#allocation2 + $0x84] sm:$0xf]
        %v275 = vld [vmem:[#allocation2 + $0x88] sm:$0xf]
        %v276 = vld [vmem:[#allocation2 + $0x8c] sm:$0xf]
        %v281 = vunpack.c.l.b16 %v237
        %v282 = vunpack.c.h.b16 %v237
        %v283 = vunpack.c.l.b16 %v238
        %v284 = vunpack.c.l.b16 %v239
        %v285 = vunpack.c.h.b16 %v239
        %v286 = vunpack.c.l.b16 %v240
        %v287 = vpack.c.b16 %v284, %v281
        %v288 = vpack.c.b16 %v285, %v282
        %v289 = vpack.c.b16 %v286, %v283
        %v328 = vunpack.c.l.b16 %v241
        %v329 = vunpack.c.l.b16 %v242
        %v330 = vunpack.c.l.b16 %v243
        %v331 = vunpack.c.l.b16 %v244
        %v332 = vunpack.c.l.b16 %v245
        %v333 = vunpack.c.l.b16 %v246
        %v334 = vunpack.c.l.b16 %v247
        %v335 = vunpack.c.l.b16 %v248
        %v336 = vunpack.c.l.b16 %v249
        %v337 = vunpack.c.l.b16 %v250
        %v338 = vunpack.c.l.b16 %v251
        %v339 = vunpack.c.l.b16 %v252
        %v340 = vunpack.c.l.b16 %v253
        %v341 = vunpack.c.l.b16 %v254
        %v342 = vunpack.c.l.b16 %v255
        %v343 = vunpack.c.l.b16 %v256
        %v344 = vunpack.c.l.b16 %v257
        %v345 = vunpack.c.l.b16 %v258
        %v346 = vunpack.c.l.b16 %v259
        %v347 = vunpack.c.l.b16 %v260
        %v348 = vunpack.c.l.b16 %v261
        %v349 = vunpack.c.l.b16 %v262
        %v350 = vunpack.c.l.b16 %v263
        %v351 = vunpack.c.l.b16 %v264
        %v352 = vunpack.c.l.b16 %v265
        %v353 = vunpack.c.l.b16 %v266
        %v354 = vunpack.c.l.b16 %v267
        %v355 = vunpack.c.l.b16 %v268
        %v356 = vunpack.c.l.b16 %v269
        %v357 = vunpack.c.l.b16 %v270
        %v358 = vunpack.c.l.b16 %v271
        %v359 = vunpack.c.l.b16 %v272
        %v360 = vunpack.c.l.b16 %v273
        %v361 = vunpack.c.l.b16 %v274
        %v362 = vunpack.c.l.b16 %v275
        %v363 = vunpack.c.l.b16 %v276
        %v364 = vpack.c.b16 %v329, %v328
        %v365 = vpack.c.b16 %v331, %v330
        %v366 = vpack.c.b16 %v333, %v332
        %v367 = vpack.c.b16 %v335, %v334
        %v368 = vpack.c.b16 %v337, %v336
        %v369 = vpack.c.b16 %v339, %v338
        %v370 = vpack.c.b16 %v341, %v340
        %v371 = vpack.c.b16 %v343, %v342
        %v372 = vpack.c.b16 %v345, %v344
        %v373 = vpack.c.b16 %v347, %v346
        %v374 = vpack.c.b16 %v349, %v348
        %v375 = vpack.c.b16 %v351, %v350
        %v376 = vpack.c.b16 %v353, %v352
        %v377 = vpack.c.b16 %v355, %v354
        %v378 = vpack.c.b16 %v357, %v356
        %v379 = vpack.c.b16 %v359, %v358
        %v380 = vpack.c.b16 %v361, %v360
        %v381 = vpack.c.b16 %v363, %v362
        %vm400 = vcmask 261120
        %v402 = vsel %vm400, %v289, 0
        %404 = vmatprep.subr.bf16.mxu0 0
        %405 = vmatpush1.bf16.msra.mxu0 %v364
        %406 = vmatprep.subr.bf16.mxu0 0
        %407 = vmatpush1.bf16.msra.mxu0 %v365
        %408 = vmatprep.subr.bf16.mxu0 0
        %409 = vmatpush1.bf16.msra.mxu0 %v366
        %410 = vmatprep.subr.bf16.mxu0 0
        %411 = vmatpush1.bf16.msra.mxu0 %v367
        %412 = vmatprep.subr.bf16.mxu0 0
        %413 = vmatpush1.bf16.msra.mxu0 %v368
        %414 = vmatprep.subr.bf16.mxu0 0
        %415 = vmatpush1.bf16.msra.mxu0 %v369
        %416 = vmatprep.subr.bf16.mxu0 0
        %417 = vmatpush1.bf16.msra.mxu0 %v370
        %418 = vmatprep.subr.bf16.mxu0 0
        %419 = vmatpush1.bf16.msra.mxu0 %v371
        %420 = vmatprep.subr.bf16.mxu0 0
        %421 = vmatpush1.bf16.msra.mxu0 %v372
        %422 = vmatprep.subr.bf16.mxu0 0
        %423 = vmatpush1.bf16.msra.mxu0 %v373
        %424 = vmatprep.subr.bf16.mxu0 0
        %425 = vmatpush1.bf16.msra.mxu0 %v374
        %426 = vmatprep.subr.bf16.mxu0 0
        %427 = vmatpush1.bf16.msra.mxu0 %v375
        %428 = vmatprep.subr.bf16.mxu0 0
        %429 = vmatpush1.bf16.msra.mxu0 %v376
        %430 = vmatprep.subr.bf16.mxu0 0
        %431 = vmatpush1.bf16.msra.mxu0 %v377
        %432 = vmatprep.subr.bf16.mxu0 0
        %433 = vmatpush1.bf16.msra.mxu0 %v378
        %434 = vmatprep.subr.bf16.mxu0 0
        %435 = vmatpush1.bf16.msra.mxu0 %v379
        %436 = vmatprep.mubr.bf16.mxu0 %v288
        %437 = vmatmul.mubr.bf16.gmra.mrb[0].mxu0 %v287
        %v438 = vpop.f32.mrb[0].mxu0
        %v439 = vadd.f32 0.0, %v438
        %v440 = vpop.f32.mrb[0].mxu0
        %v441 = vpop.f32.mrb[0].mxu0
        %v442 = vadd.f32 0.0, %v441
        %v443 = vpop.f32.mrb[0].mxu0
        %444 = vdwg.mxu0
        %445 = vmatprep.subr.bf16.mxu0 0
        %446 = vmatpush1.bf16.msra.mxu0 %v380
        %447 = vmatprep.subr.bf16.mxu0 0
        %448 = vmatpush1.bf16.msra.mxu0 %v381
        %449 = vmatprep.subr.bf16.mxu0 0
        %450 = vmatpush1.bf16.msra.mxu0 0
        %451 = vmatprep.subr.bf16.mxu0 0
        %452 = vmatpush1.bf16.msra.mxu0 0
        %453 = vmatprep.subr.bf16.mxu0 0
        %454 = vmatpush1.bf16.msra.mxu0 0
        %455 = vmatprep.subr.bf16.mxu0 0
        %456 = vmatpush1.bf16.msra.mxu0 0
        %457 = vmatprep.subr.bf16.mxu0 0
        %458 = vmatpush1.bf16.msra.mxu0 0
        %459 = vmatprep.subr.bf16.mxu0 0
        %460 = vmatpush1.bf16.msra.mxu0 0
        %461 = vmatprep.subr.bf16.mxu0 0
        %462 = vmatpush1.bf16.msra.mxu0 0
        %463 = vmatprep.subr.bf16.mxu0 0
        %464 = vmatpush1.bf16.msra.mxu0 0
        %465 = vmatprep.subr.bf16.mxu0 0
        %466 = vmatpush1.bf16.msra.mxu0 0
        %467 = vmatprep.subr.bf16.mxu0 0
        %468 = vmatpush1.bf16.msra.mxu0 0
        %469 = vmatprep.subr.bf16.mxu0 0
        %470 = vmatpush1.bf16.msra.mxu0 0
        %471 = vmatprep.subr.bf16.mxu0 0
        %472 = vmatpush1.bf16.msra.mxu0 0
        %473 = vmatprep.subr.bf16.mxu0 0
        %474 = vmatpush1.bf16.msra.mxu0 0
        %475 = vmatprep.subr.bf16.mxu0 0
        %476 = vmatpush1.bf16.msra.mxu0 0
        %477 = vmatprep.mubr.bf16.mxu0 0
        %478 = vmatmul.mubr.bf16.gmra.mrb[0].mxu0 %v402
        %v479 = vpop.f32.mrb[0].mxu0
        %v480 = vadd.f32 %v439, %v479
        %v481 = vpop.f32.mrb[0].mxu0
        %v482 = vpop.f32.mrb[0].mxu0
        %v483 = vadd.f32 %v442, %v482
        %v484 = vpop.f32.mrb[0].mxu0
        %485 = vdwg.mxu0
        %486 = vst.msk [vmem:[%s228] sm:$0xff] %vm400, %v480
        %487 = vst.msk [vmem:[%s228 + $0x8] sm:$0xff] %vm400, %v483
        %s488 = smul.u32 %s17, 16
        %v489 = vlaneseq
        %v490 = vshrl.u32 %v489, 7
        %v491 = vadd.s32 %v490, 8
        %v492 = vstv %s488
        %v493 = vadd.s32 %v492, %v490
        %v494 = vadd.s32 %v492, %v491
        %vm495 = vcmp.lt.s32.totalorder %v493, 32
        %vm496 = vcmp.lt.s32.totalorder %v494, 32
        %v497 = vsel %vm495, 1, 0
        %v498 = vsel %vm496, 1, 0
        %vm499 = vcmp.eq.s32.totalorder %v497, 1
        %vm500 = vcmp.eq.s32.totalorder %v498, 1
        %v501 = vsel %vm499, %v480, 0.0
        %v502 = vsel %vm500, %v483, 0.0
        %v503 = vsel %vm400, %v501, 0.0
        %v504 = vsel %vm400, %v502, 0.0
        %v505 = vadd.f32 %v503, %v504
        %v506 = vrot.slane %v505, 4
        %v507 = vadd.f32 %v505, %v506
        %v508 = vrot.slane %v507, 2
        %v509 = vadd.f32 %v507, %v508
        %v510 = vrot.slane %v509, 1
        %v511 = vadd.f32 %v509, %v510
        %vm512 = vcmask 253952
        %513 = vst.msk [vmem:[%s232] sm:$0x1] %vm512, %v511
        %v514 = vmul.f32 %v501, %v501
        %v515 = vmul.f32 %v502, %v502
        %v516 = vsel %vm400, %v514, 0.0
        %v517 = vsel %vm400, %v515, 0.0
        %v518 = vadd.f32 %v516, %v517
        %v519 = vrot.slane %v518, 4
        %v520 = vadd.f32 %v518, %v519
        %v521 = vrot.slane %v520, 2
        %v522 = vadd.f32 %v520, %v521
        %v523 = vrot.slane %v522, 1
        %v524 = vadd.f32 %v522, %v523
        %525 = vst.msk [vmem:[%s235] sm:$0x1] %vm512, %v524
        %s526 = smul.u32 2, %s17
        %p527 = scmp.lt.s32.totalorder %s526, 3
        %s528 = scalar_select %p527, %s526, 3
        %s529 = smul.addr %s528, 8
        %s530 = scalar_lea.vmem %s2, %s529
        %p531 = scmp.lt.s32.totalorder %s17, 1
        %s532 = scalar_select %p531, %s17, 1
        %s533 = scalar_lea.vmem %s3, %s532
        %p534 = scmp.lt.s32.totalorder %s17, 1
        %s535 = scalar_select %p534, %s17, 1
        %s536 = scalar_lea.vmem %s4, %s535
        // Predicated region
        $region33: #{aegan_resnet_decoder_forward.12} parent=27 // pred_check
          %p537 = pneg %p82
        $region34: #{aegan_resnet_decoder_forward.12} parent=27 // pred_check_branch
          %539 = sbr.rel (%p537) target = $region36
        $region35: #{aegan_resnet_decoder_forward.12} parent=27 // pred_region
          %s540 = smul.u32 2, %s17
        $region36: #{aegan_resnet_decoder_forward.12} parent=27 // pred_fallthru
          _
        // Predicated region
        $region37: #{aegan_resnet_decoder_forward.12} parent=27 // pred_check
          %p541 = pneg %p108
        $region38: #{aegan_resnet_decoder_forward.12} parent=27 // pred_check_branch
          %543 = sbr.rel (%p541) target = $region40
        $region39: #{aegan_resnet_decoder_forward.12} parent=27 // pred_region
          _
        $region40: #{aegan_resnet_decoder_forward.12} parent=27 // pred_fallthru
          _
        // Predicated region
        $region41: #{aegan_resnet_decoder_forward.12} parent=27 // pred_check
          %p544 = pneg %p134
        $region42: #{aegan_resnet_decoder_forward.12} parent=27 // pred_check_branch
          %546 = sbr.rel (%p544) target = $region44
        $region43: #{aegan_resnet_decoder_forward.12} parent=27 // pred_region
          _
        $region44: #{aegan_resnet_decoder_forward.12} parent=27 // pred_fallthru
          _
      $region28: #{aegan_resnet_decoder_forward.12} parent=5 // pred_fallthru
        _
      %p547 = scmp.le.s32.totalorder 2, %s12
      // Predicated region
      $region45: #{aegan_resnet_decoder_forward.12} parent=5 // pred_check
        %p548 = pneg %p547
      $region46: #{aegan_resnet_decoder_forward.12} parent=5 // pred_check_branch
        %550 = sbr.rel (%p548) target = $region48
      $region47: #{aegan_resnet_decoder_forward.12} parent=5 // pred_region
        %s551 = ssub.s32 %s12, 2
        // Predicated region
        $region49: #{aegan_resnet_decoder_forward.12} parent=47 // pred_check
          %p552 = pneg %p88
        $region50: #{aegan_resnet_decoder_forward.12} parent=47 // pred_check_branch
          %554 = sbr.rel (%p552) target = $region52
        $region51: #{aegan_resnet_decoder_forward.12} parent=47 // pred_region
          %s555 = smul.u32 2, %s18
          %p556 = scmp.lt.s32.totalorder %s555, 3
          %s557 = scalar_select %p556, %s555, 3
          %s558 = smul.addr %s557, 8
          %s559 = scalar_lea.vmem %s2, %s558
        $region52: #{aegan_resnet_decoder_forward.12} parent=47 // pred_fallthru
          _
        // Predicated region
        $region53: #{aegan_resnet_decoder_forward.12} parent=47 // pred_check
          %p560 = pneg %p114
        $region54: #{aegan_resnet_decoder_forward.12} parent=47 // pred_check_branch
          %562 = sbr.rel (%p560) target = $region56
        $region55: #{aegan_resnet_decoder_forward.12} parent=47 // pred_region
          %p563 = scmp.lt.s32.totalorder %s18, 1
          %s564 = scalar_select %p563, %s18, 1
          %s565 = scalar_lea.vmem %s3, %s564
        $region56: #{aegan_resnet_decoder_forward.12} parent=47 // pred_fallthru
          _
        // Predicated region
        $region57: #{aegan_resnet_decoder_forward.12} parent=47 // pred_check
          %p566 = pneg %p140
        $region58: #{aegan_resnet_decoder_forward.12} parent=47 // pred_check_branch
          %568 = sbr.rel (%p566) target = $region60
        $region59: #{aegan_resnet_decoder_forward.12} parent=47 // pred_region
          %p569 = scmp.lt.s32.totalorder %s18, 1
          %s570 = scalar_select %p569, %s18, 1
          %s571 = scalar_lea.vmem %s4, %s570
        $region60: #{aegan_resnet_decoder_forward.12} parent=47 // pred_fallthru
          _
      $region48: #{aegan_resnet_decoder_forward.12} parent=5 // pred_fallthru
        _
    $region6: #{aegan_resnet_decoder_forward.12} parent=1 // loop_footer
      %s16 = sadd.s32 1, %s12
    $region7: #{aegan_resnet_decoder_forward.12} parent=1 // loop_footer_branch
      %11 = sbr.rel target = $region3
    $region8: #{aegan_resnet_decoder_forward.12} parent=1 // loop_exit
      _
    %572 = vsyncpa [#allocation3], 1
    %s573 = scalar_lea.sflag [#allocation3], 1
    %574 = vsyncpa %s573, 1

// kernel: aegan_resnet_decoder_forward.14
$region0: #{aegan_resnet_decoder_forward.14}
  #allocation0 [shape = 'u32[]', space=smem, size = 0x4, offset = 0x4, fixed_abs, tag = 'smem constant byte address 0x4 - core index']
  #allocation1 [shape = 'u32[144,128]{1,0:T(1,128)}', space=vmem, size = 0x12000, scoped, tag = 'internal scratch']
  %s0 = inlined_call_operand.vmem [shape: f32[8,128], index: 0, kind: input, shape index: {}]
  %s1 = inlined_call_operand.vmem [shape: f32[8,128], index: 1, kind: input, shape index: {}]
  %s2 = inlined_call_operand.vmem [shape: f32[1,128], index: 2, kind: input, shape index: {}]
  %s3 = inlined_call_operand.vmem [shape: f32[1,128], index: 3, kind: input, shape index: {}]
  %s4 = inlined_call_operand.vmem [shape: f32[8,128], index: 4, kind: output, shape index: {}]
  %s5 = sld [smem:[#allocation0]]
  $region26: #{aegan_resnet_decoder_forward.14} parent=0
    _
  %s7 = ssub.s32 1, %s5
  %s8 = scalar_select 0, %s7, %s5
  // Predicated region
  $region2: #{aegan_resnet_decoder_forward.14} parent=0 // pred_check
    _
  $region3: #{aegan_resnet_decoder_forward.14} parent=0 // pred_check_branch
    %10 = sbr.rel (0) target = $region5
  $region4: #{aegan_resnet_decoder_forward.14} parent=0 // pred_region
    _
  $region5: #{aegan_resnet_decoder_forward.14} parent=0 // pred_fallthru
    _
  // Predicated region
  $region6: #{aegan_resnet_decoder_forward.14} parent=0 // pred_check
    _
  $region7: #{aegan_resnet_decoder_forward.14} parent=0 // pred_check_branch
    %12 = sbr.rel (0) target = $region9
  $region8: #{aegan_resnet_decoder_forward.14} parent=0 // pred_region
    _
  $region9: #{aegan_resnet_decoder_forward.14} parent=0 // pred_fallthru
    _
  // Predicated region
  $region10: #{aegan_resnet_decoder_forward.14} parent=0 // pred_check
    _
  $region11: #{aegan_resnet_decoder_forward.14} parent=0 // pred_check_branch
    %14 = sbr.rel (0) target = $region13
  $region12: #{aegan_resnet_decoder_forward.14} parent=0 // pred_region
    _
  $region13: #{aegan_resnet_decoder_forward.14} parent=0 // pred_fallthru
    _
  // Predicated region
  $region14: #{aegan_resnet_decoder_forward.14} parent=0 // pred_check
    _
  $region15: #{aegan_resnet_decoder_forward.14} parent=0 // pred_check_branch
    %16 = sbr.rel (0) target = $region17
  $region16: #{aegan_resnet_decoder_forward.14} parent=0 // pred_region
    _
  $region17: #{aegan_resnet_decoder_forward.14} parent=0 // pred_fallthru
    _
  %v17 = vld [vmem:[%s1] sm:$0xff]
  %v18 = vld [vmem:[%s0] sm:$0xff]
  %v19 = vld [vmem:[%s2] sm:$0x1]
  %v21 = vlaneseq
  %v22 = vshrl.u32 %v21, 7
  %v23 = vsub.s32 0, %v22
  %v24 = vrot.slane %v19, %v23
  %v26 = vmul.f32 %v18, %v24
  %v27 = vadd.f32 %v17, %v26
  %v28 = vld [vmem:[%s3] sm:$0x1]
  %v30 = vlaneseq
  %v31 = vshrl.u32 %v30, 7
  %v32 = vsub.s32 0, %v31
  %v33 = vrot.slane %v28, %v32
  %v35 = vadd.f32 %v27, %v33
  %36 = vst [vmem:[%s4] sm:$0xff] %v35
  // Predicated region
  $region18: #{aegan_resnet_decoder_forward.14} parent=0 // pred_check
    _
  $region19: #{aegan_resnet_decoder_forward.14} parent=0 // pred_check_branch
    %38 = sbr.rel (0) target = $region21
  $region20: #{aegan_resnet_decoder_forward.14} parent=0 // pred_region
    _
  $region21: #{aegan_resnet_decoder_forward.14} parent=0 // pred_fallthru
    _
  // Predicated region
  $region22: #{aegan_resnet_decoder_forward.14} parent=0 // pred_check
    _
  $region23: #{aegan_resnet_decoder_forward.14} parent=0 // pred_check_branch
    %40 = sbr.rel (0) target = $region25
  $region24: #{aegan_resnet_decoder_forward.14} parent=0 // pred_region
    _
  $region25: #{aegan_resnet_decoder_forward.14} parent=0 // pred_fallthru
    _

// kernel: aegan_resnet_decoder_forward.13
$region0: #{aegan_resnet_decoder_forward.13}
  #allocation0 [shape = 'u32[]', space=smem, size = 0x4, offset = 0x4, fixed_abs, tag = 'smem constant byte address 0x4 - core index']
  #allocation1 [shape = 'u32[144,128]{1,0:T(1,128)}', space=vmem, size = 0x12000, scoped, tag = 'internal scratch']
  %s0 = inlined_call_operand.vmem [shape: bf16[32,288], index: 0, kind: input, shape index: {}]
  %s1 = inlined_call_operand.hbm [shape: bf16[288,32], index: 1, kind: input, shape index: {}]
  %s2 = inlined_call_operand.vmem [shape: f32[1,288], index: 2, kind: input, shape index: {}]
  %s3 = inlined_call_operand.vmem [shape: f32[1,288], index: 3, kind: input, shape index: {}]
  %s4 = inlined_call_operand.vmem [shape: f32[32,32], index: 4, kind: output, shape index: {0}]
  %s5 = inlined_call_operand.vmem [shape: f32[2,1,32], index: 5, kind: output, shape index: {1}]
  %s6 = inlined_call_operand.vmem [shape: f32[2,1,32], index: 6, kind: output, shape index: {2}]
  %7 = xla_tuple %s4, %s5, %s6
  %s8 = sld [smem:[#allocation0]]
  $region69: #{aegan_resnet_decoder_forward.13} parent=0
    _
  %s10 = ssub.s32 1, %s8
  %s11 = scalar_select 0, %s10, %s8
  $region1: #{aegan_resnet_decoder_forward.13} parent=0
    #allocation2 [shape = 'u8[73728]{0}', space=vmem, size = 0x12000, scoped, tag = 'input window, operand 1, single buffered']
    #allocation3 [shape = 's32[2]{0}', space=sflag, size = 0x8, scoped, tag = 'scoped memory for aegan_resnet_decoder_forward.13']
    %12 = vsyncpa [#allocation3], 0
    loop: start=0, step=1, limit=4
    $region2: #{aegan_resnet_decoder_forward.13} parent=1 // loop_pre_header
      _
    $region3: #{aegan_resnet_decoder_forward.13} parent=1 // loop_header
      %s14 = sphi 0, %s18
      %p15 = scmp.ge.s32.totalorder %s14, 4
      %s24 = sphi 0, %s26
      %s27 = sphi 0, %s24
      %s28 = sphi 0, %s27
      %s44 = sphi 0, %s28
      %s48 = sphi 0, %s48
      %s50 = sphi 0, %s48
      %s51 = sphi 0, %s50
      %s65 = sphi 0, %s51
      %s69 = sphi 0, %s69
      %s71 = sphi 0, %s69
      %s72 = sphi 0, %s71
      %s86 = sphi 0, %s72
      %s90 = sphi 0, %s90
      %s92 = sphi 0, %s90
      %s93 = sphi 0, %s92
      %s107 = sphi 0, %s93
      %s113 = sphi 0, %s115
      %s116 = sphi 0, %s113
      %s117 = sphi 0, %s116
      %s133 = sphi 0, %s117
      %s139 = sphi 0, %s141
      %s142 = sphi 0, %s139
      %s143 = sphi 0, %s142
      %s159 = sphi 0, %s143
      %s165 = sphi 0, %s167
      %s168 = sphi 0, %s165
      %s169 = sphi 0, %s168
      %s185 = sphi 0, %s169
    $region4: #{aegan_resnet_decoder_forward.13} parent=1 // loop_header_branch
      %17 = sbr.rel (%p15) target = $region8
    $region5: #{aegan_resnet_decoder_forward.13} parent=1 // loop_body
      %s19 = ssub.s32 %s14, 1
      %s20 = ssub.s32 %s14, 2
      %s21 = sadd.s32 %s14, 1
      %s22 = ssub.s32 %s14, %s21
      %p23 = scmp.eq.s32.totalorder %s22, 0
      %s25 = sadd.s32 %s24, 1
      %s26 = scalar_select %p23, %s24, %s25
      %p29 = pneg %p23
      %p30 = scmp.eq.s32.totalorder %s14, 1
      %p31 = por %p29, %p30
      %p32 = scmp.ne.s32.totalorder %s24, %s27
      %p33 = scmp.eq.s32.totalorder %s14, 0
      %p34 = por %p32, %p33
      %p35 = scmp.ne.s32.totalorder %s24, %s27
      %p36 = scmp.eq.s32.totalorder %s19, 1
      %p37 = por %p35, %p36
      %p38 = scmp.ne.s32.totalorder %s27, %s28
      %p39 = scmp.eq.s32.totalorder %s19, 0
      %p40 = por %p38, %p39
      %p41 = scmp.ne.s32.totalorder %s27, %s28
      %p42 = scmp.eq.s32.totalorder %s20, 1
      %p43 = por %p41, %p42
      %p45 = scmp.ne.s32.totalorder %s28, %s44
      %p46 = scmp.eq.s32.totalorder %s20, 0
      %p47 = por %p45, %p46
      %s49 = sadd.s32 %s48, 1
      %p52 = scmp.eq.s32.totalorder %s14, 1
      %p53 = scmp.ne.s32.totalorder %s48, %s50
      %p54 = scmp.eq.s32.totalorder %s14, 0
      %p55 = por %p53, %p54
      %p56 = scmp.ne.s32.totalorder %s48, %s50
      %p57 = scmp.eq.s32.totalorder %s19, 1
      %p58 = por %p56, %p57
      %p59 = scmp.ne.s32.totalorder %s50, %s51
      %p60 = scmp.eq.s32.totalorder %s19, 0
      %p61 = por %p59, %p60
      %p62 = scmp.ne.s32.totalorder %s50, %s51
      %p63 = scmp.eq.s32.totalorder %s20, 1
      %p64 = por %p62, %p63
      %p66 = scmp.ne.s32.totalorder %s51, %s65
      %p67 = scmp.eq.s32.totalorder %s20, 0
      %p68 = por %p66, %p67
      %s70 = sadd.s32 %s69, 1
      %p73 = scmp.eq.s32.totalorder %s14, 1
      %p74 = scmp.ne.s32.totalorder %s69, %s71
      %p75 = scmp.eq.s32.totalorder %s14, 0
      %p76 = por %p74, %p75
      %p77 = scmp.ne.s32.totalorder %s69, %s71
      %p78 = scmp.eq.s32.totalorder %s19, 1
      %p79 = por %p77, %p78
      %p80 = scmp.ne.s32.totalorder %s71, %s72
      %p81 = scmp.eq.s32.totalorder %s19, 0
      %p82 = por %p80, %p81
      %p83 = scmp.ne.s32.totalorder %s71, %s72
      %p84 = scmp.eq.s32.totalorder %s20, 1
      %p85 = por %p83, %p84
      %p87 = scmp.ne.s32.totalorder %s72, %s86
      %p88 = scmp.eq.s32.totalorder %s20, 0
      %p89 = por %p87, %p88
      %s91 = sadd.s32 %s90, 1
      %p94 = scmp.eq.s32.totalorder %s14, 1
      %p95 = scmp.ne.s32.totalorder %s90, %s92
      %p96 = scmp.eq.s32.totalorder %s14, 0
      %p97 = por %p95, %p96
      %p98 = scmp.ne.s32.totalorder %s90, %s92
      %p99 = scmp.eq.s32.totalorder %s19, 1
      %p100 = por %p98, %p99
      %p101 = scmp.ne.s32.totalorder %s92, %s93
      %p102 = scmp.eq.s32.totalorder %s19, 0
      %p103 = por %p101, %p102
      %p104 = scmp.ne.s32.totalorder %s92, %s93
      %p105 = scmp.eq.s32.totalorder %s20, 1
      %p106 = por %p104, %p105
      %p108 = scmp.ne.s32.totalorder %s93, %s107
      %p109 = scmp.eq.s32.totalorder %s20, 0
      %p110 = por %p108, %p109
      %s111 = ssub.s32 %s14, %s21
      %p112 = scmp.eq.s32.totalorder %s111, 0
      %s114 = sadd.s32 %s113, 1
      %s115 = scalar_select %p112, %s113, %s114
      %p118 = pneg %p112
      %p119 = scmp.eq.s32.totalorder %s14, 1
      %p120 = por %p118, %p119
      %p121 = scmp.ne.s32.totalorder %s113, %s116
      %p122 = scmp.eq.s32.totalorder %s14, 0
      %p123 = por %p121, %p122
      %p124 = scmp.ne.s32.totalorder %s113, %s116
      %p125 = scmp.eq.s32.totalorder %s19, 1
      %p126 = por %p124, %p125
      %p127 = scmp.ne.s32.totalorder %s116, %s117
      %p128 = scmp.eq.s32.totalorder %s19, 0
      %p129 = por %p127, %p128
      %p130 = scmp.ne.s32.totalorder %s116, %s117
      %p131 = scmp.eq.s32.totalorder %s20, 1
      %p132 = por %p130, %p131
      %p134 = scmp.ne.s32.totalorder %s117, %s133
      %p135 = scmp.eq.s32.totalorder %s20, 0
      %p136 = por %p134, %p135
      %s137 = ssub.s32 %s14, %s21
      %p138 = scmp.eq.s32.totalorder %s137, 0
      %s140 = sadd.s32 %s139, 1
      %s141 = scalar_select %p138, %s139, %s140
      %p144 = pneg %p138
      %p145 = scmp.eq.s32.totalorder %s14, 1
      %p146 = por %p144, %p145
      %p147 = scmp.ne.s32.totalorder %s139, %s142
      %p148 = scmp.eq.s32.totalorder %s14, 0
      %p149 = por %p147, %p148
      %p150 = scmp.ne.s32.totalorder %s139, %s142
      %p151 = scmp.eq.s32.totalorder %s19, 1
      %p152 = por %p150, %p151
      %p153 = scmp.ne.s32.totalorder %s142, %s143
      %p154 = scmp.eq.s32.totalorder %s19, 0
      %p155 = por %p153, %p154
      %p156 = scmp.ne.s32.totalorder %s142, %s143
      %p157 = scmp.eq.s32.totalorder %s20, 1
      %p158 = por %p156, %p157
      %p160 = scmp.ne.s32.totalorder %s143, %s159
      %p161 = scmp.eq.s32.totalorder %s20, 0
      %p162 = por %p160, %p161
      %s163 = ssub.s32 %s14, %s21
      %p164 = scmp.eq.s32.totalorder %s163, 0
      %s166 = sadd.s32 %s165, 1
      %s167 = scalar_select %p164, %s165, %s166
      %p170 = pneg %p164
      %p171 = scmp.eq.s32.totalorder %s14, 1
      %p172 = por %p170, %p171
      %p173 = scmp.ne.s32.totalorder %s165, %s168
      %p174 = scmp.eq.s32.totalorder %s14, 0
      %p175 = por %p173, %p174
      %p176 = scmp.ne.s32.totalorder %s165, %s168
      %p177 = scmp.eq.s32.totalorder %s19, 1
      %p178 = por %p176, %p177
      %p179 = scmp.ne.s32.totalorder %s168, %s169
      %p180 = scmp.eq.s32.totalorder %s19, 0
      %p181 = por %p179, %p180
      %p182 = scmp.ne.s32.totalorder %s168, %s169
      %p183 = scmp.eq.s32.totalorder %s20, 1
      %p184 = por %p182, %p183
      %p186 = scmp.ne.s32.totalorder %s169, %s185
      %p187 = scmp.eq.s32.totalorder %s20, 0
      %p188 = por %p186, %p187
      %p189 = scmp.le.s32.totalorder 1, %s14
      %p190 = scmp.lt.s32.totalorder %s14, 3
      %p191 = pnand %p189, %p190
      %p192 = pneg %p191
      // Predicated region
      $region9: #{aegan_resnet_decoder_forward.13} parent=5 // pred_check
        _
      $region10: #{aegan_resnet_decoder_forward.13} parent=5 // pred_check_branch
        %194 = sbr.rel (%p191) target = $region12
      $region11: #{aegan_resnet_decoder_forward.13} parent=5 // pred_region
        %s195 = ssub.s32 %s14, 1
        // Predicated region
        $region13: #{aegan_resnet_decoder_forward.13} parent=11 // pred_check
          %p196 = pneg %p61
        $region14: #{aegan_resnet_decoder_forward.13} parent=11 // pred_check_branch
          %198 = sbr.rel (%p196) target = $region16
        $region15: #{aegan_resnet_decoder_forward.13} parent=11 // pred_region
          %s200 = ssub.s32 2304, 2304
          %201 = vsyncadd [#allocation3], %s200
          %s202 = sshll.u32 [#allocation2], 4
          %s203 = int_to_ptr.vmem [resolvable:$true] %s202
          %208 = dma.hbm_to_vmem [thread:$0]  %s1, 2304, %s203, [#allocation3], 64, 64, 4
        $region16: #{aegan_resnet_decoder_forward.13} parent=11 // pred_fallthru
          _
        // Predicated region
        $region17: #{aegan_resnet_decoder_forward.13} parent=11 // pred_check
          %p209 = pneg %p82
        $region18: #{aegan_resnet_decoder_forward.13} parent=11 // pred_check_branch
          %211 = sbr.rel (%p209) target = $region20
        $region19: #{aegan_resnet_decoder_forward.13} parent=11 // pred_region
          _
        $region20: #{aegan_resnet_decoder_forward.13} parent=11 // pred_fallthru
          _
        // Predicated region
        $region21: #{aegan_resnet_decoder_forward.13} parent=11 // pred_check
          %p212 = pneg %p103
        $region22: #{aegan_resnet_decoder_forward.13} parent=11 // pred_check_branch
          %214 = sbr.rel (%p212) target = $region24
        $region23: #{aegan_resnet_decoder_forward.13} parent=11 // pred_region
          _
        $region24: #{aegan_resnet_decoder_forward.13} parent=11 // pred_fallthru
          _
      $region12: #{aegan_resnet_decoder_forward.13} parent=5 // pred_fallthru
        _
      %p215 = scmp.lt.s32.totalorder %s14, 2
      // Predicated region
      $region25: #{aegan_resnet_decoder_forward.13} parent=5 // pred_check
        %p216 = pneg %p215
      $region26: #{aegan_resnet_decoder_forward.13} parent=5 // pred_check_branch
        %218 = sbr.rel (%p216) target = $region28
      $region27: #{aegan_resnet_decoder_forward.13} parent=5 // pred_region
        // Predicated region
        $region29: #{aegan_resnet_decoder_forward.13} parent=27 // pred_check
          %p219 = pneg %p34
        $region30: #{aegan_resnet_decoder_forward.13} parent=27 // pred_check_branch
          %221 = sbr.rel (%p219) target = $region32
        $region31: #{aegan_resnet_decoder_forward.13} parent=27 // pred_region
          %s222 = smul.u32 2, %s14
          %p223 = scmp.lt.s32.totalorder %s222, 3
          %s224 = scalar_select %p223, %s222, 3
          %s225 = smul.addr %s224, 3
          %s226 = smul.addr %s225, 4
          %s227 = scalar_lea.vmem %s0, %s226
          %s228 = smul.u32 2, %s14
        $region32: #{aegan_resnet_decoder_forward.13} parent=27 // pred_fallthru
          _
      $region28: #{aegan_resnet_decoder_forward.13} parent=5 // pred_fallthru
        _
      %p229 = scmp.le.s32.totalorder 1, %s14
      %p230 = scmp.lt.s32.totalorder %s14, 3
      %p231 = pnand %p229, %p230
      %p232 = pneg %p231
      // Predicated region
      $region33: #{aegan_resnet_decoder_forward.13} parent=5 // pred_check
        _
      $region34: #{aegan_resnet_decoder_forward.13} parent=5 // pred_check_branch
        %234 = sbr.rel (%p231) target = $region36
      $region35: #{aegan_resnet_decoder_forward.13} parent=5 // pred_region
        %s235 = ssub.s32 %s14, 1
        // Predicated region
        $region37: #{aegan_resnet_decoder_forward.13} parent=35 // pred_check
          %p236 = pneg %p61
        $region38: #{aegan_resnet_decoder_forward.13} parent=35 // pred_check_branch
          %238 = sbr.rel (%p236) target = $region40
        $region39: #{aegan_resnet_decoder_forward.13} parent=35 // pred_region
          %239 = dma.done [#allocation3], 2304
        $region40: #{aegan_resnet_decoder_forward.13} parent=35 // pred_fallthru
          _
        %s240 = smul.u32 2, %s19
        %p241 = scmp.lt.s32.totalorder %s240, 3
        %s242 = scalar_select %p241, %s240, 3
        %s243 = smul.addr %s242, 3
        %s244 = smul.addr %s243, 4
        %s245 = scalar_lea.vmem %s0, %s244
        %p246 = pneg %p40
        %p247 = pneg %p37
        %p248 = pneg %p61
        %p249 = pneg %p58
        %p250 = pneg %p82
        %p251 = pneg %p79
        %p252 = pneg %p103
        %p253 = pneg %p100
        %p254 = pneg %p129
        %p255 = pneg %p126
        %s256 = smul.u32 2, %s19
        %p257 = scmp.lt.s32.totalorder %s256, 3
        %s258 = scalar_select %p257, %s256, 3
        %s259 = smul.addr %s258, 8
        %s260 = scalar_lea.vmem %s4, %s259
        %p261 = pneg %p155
        %p262 = pneg %p152
        %p263 = scmp.lt.s32.totalorder %s19, 1
        %s264 = scalar_select %p263, %s19, 1
        %s265 = scalar_lea.vmem %s5, %s264
        %p266 = pneg %p181
        %p267 = pneg %p178
        %p268 = scmp.lt.s32.totalorder %s19, 1
        %s269 = scalar_select %p268, %s19, 1
        %s270 = scalar_lea.vmem %s6, %s269
        %s271 = smul.u32 2, %s19
        %p272 = scmp.lt.s32.totalorder %s271, 3
        %s273 = scalar_select %p272, %s271, 3
        %s274 = smul.addr %s273, 3
        %s275 = smul.addr %s274, 4
        %s276 = scalar_lea.vmem %s0, %s275
        %s277 = smul.u32 2, %s19
        %s278 = smul.u32 2, %s19
        %p279 = scmp.lt.s32.totalorder %s278, 3
        %s280 = scalar_select %p279, %s278, 3
        %s281 = smul.addr %s280, 8
        %s282 = scalar_lea.vmem %s4, %s281
        %s283 = smul.u32 2, %s19
        %p284 = scmp.lt.s32.totalorder %s19, 1
        %s285 = scalar_select %p284, %s19, 1
        %s286 = scalar_lea.vmem %s5, %s285
        %p287 = scmp.lt.s32.totalorder %s19, 1
        %s288 = scalar_select %p287, %s19, 1
        %s289 = scalar_lea.vmem %s6, %s288
        %v291 = vld [vmem:[%s276] sm:$0xff]
        %v292 = vld [vmem:[%s276 + $0x8] sm:$0xf]
        %v293 = vld [vmem:[%s276 + $0xc] sm:$0xff]
        %v294 = vld [vmem:[%s276 + $0x14] sm:$0xf]
        %v295 = vunpack.c.l.bf16 %v291
        %v296 = vunpack.c.h.bf16 %v291
        %v297 = vunpack.c.l.bf16 %v292
        %v298 = vunpack.c.l.bf16 %v293
        %v299 = vunpack.c.h.bf16 %v293
        %v300 = vunpack.c.l.bf16 %v294
        %v301 = vld [vmem:[%s2] sm:$0x7]
        %v303 = vlaneseq
        %v304 = vshrl.u32 %v303, 7
        %v305 = vsub.s32 0, %v304
        %v306 = vrot.slane %v301, %v305
        %v307 = vlaneseq
        %v308 = vshrl.u32 %v307, 7
        %v309 = vsub.s32 1, %v308
        %v310 = vrot.slane %v301, %v309
        %v311 = vlaneseq
        %v312 = vshrl.u32 %v311, 7
        %v313 = vsub.s32 2, %v312
        %v314 = vrot.slane %v301, %v313
        %v318 = vmul.f32 %v295, %v306
        %v319 = vmul.f32 %v296, %v310
        %v320 = vmul.f32 %v297, %v314
        %v321 = vmul.f32 %v298, %v306
        %v322 = vmul.f32 %v299, %v310
        %v323 = vmul.f32 %v300, %v314
        %v324 = vld [vmem:[%s3] sm:$0x7]
        %v326 = vlaneseq
        %v327 = vshrl.u32 %v326, 7
        %v328 = vsub.s32 0, %v327
        %v329 = vrot.slane %v324, %v328
        %v330 = vlaneseq
        %v331 = vshrl.u32 %v330, 7
        %v332 = vsub.s32 1, %v331
        %v333 = vrot.slane %v324, %v332
        %v334 = vlaneseq
        %v335 = vshrl.u32 %v334, 7
        %v336 = vsub.s32 2, %v335
        %v337 = vrot.slane %v324, %v336
        %v341 = vadd.f32 %v318, %v329
        %v342 = vadd.f32 %v319, %v333
        %v343 = vadd.f32 %v320, %v337
        %v344 = vadd.f32 %v321, %v329
        %v345 = vadd.f32 %v322, %v333
        %v346 = vadd.f32 %v323, %v337
        %v347 = vmax.f32 %v341, 0.0
        %v348 = vmax.f32 %v342, 0.0
        %v349 = vmax.f32 %v343, 0.0
        %v350 = vmax.f32 %v344, 0.0
        %v351 = vmax.f32 %v345, 0.0
        %v352 = vmax.f32 %v346, 0.0
        %v353 = vpack.c.bf16 %v350, %v347
        %v354 = vpack.c.bf16 %v351, %v348
        %v355 = vpack.c.bf16 %v352, %v349
        %v356 = vld [vmem:[#allocation2] sm:$0xf]
        %v357 = vld [vmem:[#allocation2 + $0x4] sm:$0xf]
        %v358 = vld [vmem:[#allocation2 + $0x8] sm:$0xf]
        %v359 = vld [vmem:[#allocation2 + $0xc] sm:$0xf]
        %v360 = vld [vmem:[#allocation2 + $0x10] sm:$0xf]
        %v361 = vld [vmem:[#allocation2 + $0x14] sm:$0xf]
        %v362 = vld [vmem:[#allocation2 + $0x18] sm:$0xf]
        %v363 = vld [vmem:[#allocation2 + $0x1c] sm:$0xf]
        %v364 = vld [vmem:[#allocation2 + $0x20] sm:$0xf]
        %v365 = vld [vmem:[#allocation2 + $0x24] sm:$0xf]
        %v366 = vld [vmem:[#allocation2 + $0x28] sm:$0xf]
        %v367 = vld [vmem:[#allocation2 + $0x2c] sm:$0xf]
        %v368 = vld [vmem:[#allocation2 + $0x30] sm:$0xf]
        %v369 = vld [vmem:[#allocation2 + $0x34] sm:$0xf]
        %v370 = vld [vmem:[#allocation2 + $0x38] sm:$0xf]
        %v371 = vld [vmem:[#allocation2 + $0x3c] sm:$0xf]
        %v372 = vld [vmem:[#allocation2 + $0x40] sm:$0xf]
        %v373 = vld [vmem:[#allocation2 + $0x44] sm:$0xf]
        %v374 = vld [vmem:[#allocation2 + $0x48] sm:$0xf]
        %v375 = vld [vmem:[#allocation2 + $0x4c] sm:$0xf]
        %v376 = vld [vmem:[#allocation2 + $0x50] sm:$0xf]
        %v377 = vld [vmem:[#allocation2 + $0x54] sm:$0xf]
        %v378 = vld [vmem:[#allocation2 + $0x58] sm:$0xf]
        %v379 = vld [vmem:[#allocation2 + $0x5c] sm:$0xf]
        %v380 = vld [vmem:[#allocation2 + $0x60] sm:$0xf]
        %v381 = vld [vmem:[#allocation2 + $0x64] sm:$0xf]
        %v382 = vld [vmem:[#allocation2 + $0x68] sm:$0xf]
        %v383 = vld [vmem:[#allocation2 + $0x6c] sm:$0xf]
        %v384 = vld [vmem:[#allocation2 + $0x70] sm:$0xf]
        %v385 = vld [vmem:[#allocation2 + $0x74] sm:$0xf]
        %v386 = vld [vmem:[#allocation2 + $0x78] sm:$0xf]
        %v387 = vld [vmem:[#allocation2 + $0x7c] sm:$0xf]
        %v388 = vld [vmem:[#allocation2 + $0x80] sm:$0xf]
        %v389 = vld [vmem:[#allocation2 + $0x84] sm:$0xf]
        %v390 = vld [vmem:[#allocation2 + $0x88] sm:$0xf]
        %v391 = vld [vmem:[#allocation2 + $0x8c] sm:$0xf]
        %v428 = vunpack.c.l.b16 %v356
        %v429 = vunpack.c.l.b16 %v357
        %v430 = vunpack.c.l.b16 %v358
        %v431 = vunpack.c.l.b16 %v359
        %v432 = vunpack.c.l.b16 %v360
        %v433 = vunpack.c.l.b16 %v361
        %v434 = vunpack.c.l.b16 %v362
        %v435 = vunpack.c.l.b16 %v363
        %v436 = vunpack.c.l.b16 %v364
        %v437 = vunpack.c.l.b16 %v365
        %v438 = vunpack.c.l.b16 %v366
        %v439 = vunpack.c.l.b16 %v367
        %v440 = vunpack.c.l.b16 %v368
        %v441 = vunpack.c.l.b16 %v369
        %v442 = vunpack.c.l.b16 %v370
        %v443 = vunpack.c.l.b16 %v371
        %v444 = vunpack.c.l.b16 %v372
        %v445 = vunpack.c.l.b16 %v373
        %v446 = vunpack.c.l.b16 %v374
        %v447 = vunpack.c.l.b16 %v375
        %v448 = vunpack.c.l.b16 %v376
        %v449 = vunpack.c.l.b16 %v377
        %v450 = vunpack.c.l.b16 %v378
        %v451 = vunpack.c.l.b16 %v379
        %v452 = vunpack.c.l.b16 %v380
        %v453 = vunpack.c.l.b16 %v381
        %v454 = vunpack.c.l.b16 %v382
        %v455 = vunpack.c.l.b16 %v383
        %v456 = vunpack.c.l.b16 %v384
        %v457 = vunpack.c.l.b16 %v385
        %v458 = vunpack.c.l.b16 %v386
        %v459 = vunpack.c.l.b16 %v387
        %v460 = vunpack.c.l.b16 %v388
        %v461 = vunpack.c.l.b16 %v389
        %v462 = vunpack.c.l.b16 %v390
        %v463 = vunpack.c.l.b16 %v391
        %v464 = vpack.c.b16 %v429, %v428
        %v465 = vpack.c.b16 %v431, %v430
        %v466 = vpack.c.b16 %v433, %v432
        %v467 = vpack.c.b16 %v435, %v434
        %v468 = vpack.c.b16 %v437, %v436
        %v469 = vpack.c.b16 %v439, %v438
        %v470 = vpack.c.b16 %v441, %v440
        %v471 = vpack.c.b16 %v443, %v442
        %v472 = vpack.c.b16 %v445, %v444
        %v473 = vpack.c.b16 %v447, %v446
        %v474 = vpack.c.b16 %v449, %v448
        %v475 = vpack.c.b16 %v451, %v450
        %v476 = vpack.c.b16 %v453, %v452
        %v477 = vpack.c.b16 %v455, %v454
        %v478 = vpack.c.b16 %v457, %v456
        %v479 = vpack.c.b16 %v459, %v458
        %v480 = vpack.c.b16 %v461, %v460
        %v481 = vpack.c.b16 %v463, %v462
        %vm500 = vcmask 261120
        %v502 = vsel %vm500, %v355, 0
        %504 = vmatprep.subr.bf16.mxu0 0
        %505 = vmatpush1.bf16.msra.mxu0 %v464
        %506 = vmatprep.subr.bf16.mxu0 0
        %507 = vmatpush1.bf16.msra.mxu0 %v465
        %508 = vmatprep.subr.bf16.mxu0 0
        %509 = vmatpush1.bf16.msra.mxu0 %v466
        %510 = vmatprep.subr.bf16.mxu0 0
        %511 = vmatpush1.bf16.msra.mxu0 %v467
        %512 = vmatprep.subr.bf16.mxu0 0
        %513 = vmatpush1.bf16.msra.mxu0 %v468
        %514 = vmatprep.subr.bf16.mxu0 0
        %515 = vmatpush1.bf16.msra.mxu0 %v469
        %516 = vmatprep.subr.bf16.mxu0 0
        %517 = vmatpush1.bf16.msra.mxu0 %v470
        %518 = vmatprep.subr.bf16.mxu0 0
        %519 = vmatpush1.bf16.msra.mxu0 %v471
        %520 = vmatprep.subr.bf16.mxu0 0
        %521 = vmatpush1.bf16.msra.mxu0 %v472
        %522 = vmatprep.subr.bf16.mxu0 0
        %523 = vmatpush1.bf16.msra.mxu0 %v473
        %524 = vmatprep.subr.bf16.mxu0 0
        %525 = vmatpush1.bf16.msra.mxu0 %v474
        %526 = vmatprep.subr.bf16.mxu0 0
        %527 = vmatpush1.bf16.msra.mxu0 %v475
        %528 = vmatprep.subr.bf16.mxu0 0
        %529 = vmatpush1.bf16.msra.mxu0 %v476
        %530 = vmatprep.subr.bf16.mxu0 0
        %531 = vmatpush1.bf16.msra.mxu0 %v477
        %532 = vmatprep.subr.bf16.mxu0 0
        %533 = vmatpush1.bf16.msra.mxu0 %v478
        %534 = vmatprep.subr.bf16.mxu0 0
        %535 = vmatpush1.bf16.msra.mxu0 %v479
        %536 = vmatprep.mubr.bf16.mxu0 %v354
        %537 = vmatmul.mubr.bf16.gmra.mrb[0].mxu0 %v353
        %v538 = vpop.f32.mrb[0].mxu0
        %v539 = vadd.f32 0.0, %v538
        %v540 = vpop.f32.mrb[0].mxu0
        %v541 = vpop.f32.mrb[0].mxu0
        %v542 = vadd.f32 0.0, %v541
        %v543 = vpop.f32.mrb[0].mxu0
        %544 = vdwg.mxu0
        %545 = vmatprep.subr.bf16.mxu0 0
        %546 = vmatpush1.bf16.msra.mxu0 %v480
        %547 = vmatprep.subr.bf16.mxu0 0
        %548 = vmatpush1.bf16.msra.mxu0 %v481
        %549 = vmatprep.subr.bf16.mxu0 0
        %550 = vmatpush1.bf16.msra.mxu0 0
        %551 = vmatprep.subr.bf16.mxu0 0
        %552 = vmatpush1.bf16.msra.mxu0 0
        %553 = vmatprep.subr.bf16.mxu0 0
        %554 = vmatpush1.bf16.msra.mxu0 0
        %555 = vmatprep.subr.bf16.mxu0 0
        %556 = vmatpush1.bf16.msra.mxu0 0
        %557 = vmatprep.subr.bf16.mxu0 0
        %558 = vmatpush1.bf16.msra.mxu0 0
        %559 = vmatprep.subr.bf16.mxu0 0
        %560 = vmatpush1.bf16.msra.mxu0 0
        %561 = vmatprep.subr.bf16.mxu0 0
        %562 = vmatpush1.bf16.msra.mxu0 0
        %563 = vmatprep.subr.bf16.mxu0 0
        %564 = vmatpush1.bf16.msra.mxu0 0
        %565 = vmatprep.subr.bf16.mxu0 0
        %566 = vmatpush1.bf16.msra.mxu0 0
        %567 = vmatprep.subr.bf16.mxu0 0
        %568 = vmatpush1.bf16.msra.mxu0 0
        %569 = vmatprep.subr.bf16.mxu0 0
        %570 = vmatpush1.bf16.msra.mxu0 0
        %571 = vmatprep.subr.bf16.mxu0 0
        %572 = vmatpush1.bf16.msra.mxu0 0
        %573 = vmatprep.subr.bf16.mxu0 0
        %574 = vmatpush1.bf16.msra.mxu0 0
        %575 = vmatprep.subr.bf16.mxu0 0
        %576 = vmatpush1.bf16.msra.mxu0 0
        %577 = vmatprep.mubr.bf16.mxu0 0
        %578 = vmatmul.mubr.bf16.gmra.mrb[0].mxu0 %v502
        %v579 = vpop.f32.mrb[0].mxu0
        %v580 = vadd.f32 %v539, %v579
        %v581 = vpop.f32.mrb[0].mxu0
        %v582 = vpop.f32.mrb[0].mxu0
        %v583 = vadd.f32 %v542, %v582
        %v584 = vpop.f32.mrb[0].mxu0
        %585 = vdwg.mxu0
        %586 = vst.msk [vmem:[%s282] sm:$0xff] %vm500, %v580
        %587 = vst.msk [vmem:[%s282 + $0x8] sm:$0xff] %vm500, %v583
        %s588 = smul.u32 %s19, 16
        %v589 = vlaneseq
        %v590 = vshrl.u32 %v589, 7
        %v591 = vadd.s32 %v590, 8
        %v592 = vstv %s588
        %v593 = vadd.s32 %v592, %v590
        %v594 = vadd.s32 %v592, %v591
        %vm595 = vcmp.lt.s32.totalorder %v593, 32
        %vm596 = vcmp.lt.s32.totalorder %v594, 32
        %v597 = vsel %vm595, 1, 0
        %v598 = vsel %vm596, 1, 0
        %vm599 = vcmp.eq.s32.totalorder %v597, 1
        %vm600 = vcmp.eq.s32.totalorder %v598, 1
        %v601 = vsel %vm599, %v580, 0.0
        %v602 = vsel %vm600, %v583, 0.0
        %v603 = vsel %vm500, %v601, 0.0
        %v604 = vsel %vm500, %v602, 0.0
        %v605 = vadd.f32 %v603, %v604
        %v606 = vrot.slane %v605, 4
        %v607 = vadd.f32 %v605, %v606
        %v608 = vrot.slane %v607, 2
        %v609 = vadd.f32 %v607, %v608
        %v610 = vrot.slane %v609, 1
        %v611 = vadd.f32 %v609, %v610
        %vm612 = vcmask 253952
        %613 = vst.msk [vmem:[%s286] sm:$0x1] %vm612, %v611
        %v614 = vmul.f32 %v601, %v601
        %v615 = vmul.f32 %v602, %v602
        %v616 = vsel %vm500, %v614, 0.0
        %v617 = vsel %vm500, %v615, 0.0
        %v618 = vadd.f32 %v616, %v617
        %v619 = vrot.slane %v618, 4
        %v620 = vadd.f32 %v618, %v619
        %v621 = vrot.slane %v620, 2
        %v622 = vadd.f32 %v620, %v621
        %v623 = vrot.slane %v622, 1
        %v624 = vadd.f32 %v622, %v623
        %625 = vst.msk [vmem:[%s289] sm:$0x1] %vm612, %v624
        %s626 = smul.u32 2, %s19
        %p627 = scmp.lt.s32.totalorder %s626, 3
        %s628 = scalar_select %p627, %s626, 3
        %s629 = smul.addr %s628, 8
        %s630 = scalar_lea.vmem %s4, %s629
        %p631 = scmp.lt.s32.totalorder %s19, 1
        %s632 = scalar_select %p631, %s19, 1
        %s633 = scalar_lea.vmem %s5, %s632
        %p634 = scmp.lt.s32.totalorder %s19, 1
        %s635 = scalar_select %p634, %s19, 1
        %s636 = scalar_lea.vmem %s6, %s635
        // Predicated region
        $region41: #{aegan_resnet_decoder_forward.13} parent=35 // pred_check
          %p637 = pneg %p126
        $region42: #{aegan_resnet_decoder_forward.13} parent=35 // pred_check_branch
          %639 = sbr.rel (%p637) target = $region44
        $region43: #{aegan_resnet_decoder_forward.13} parent=35 // pred_region
          %s640 = smul.u32 2, %s19
        $region44: #{aegan_resnet_decoder_forward.13} parent=35 // pred_fallthru
          _
        // Predicated region
        $region45: #{aegan_resnet_decoder_forward.13} parent=35 // pred_check
          %p641 = pneg %p152
        $region46: #{aegan_resnet_decoder_forward.13} parent=35 // pred_check_branch
          %643 = sbr.rel (%p641) target = $region48
        $region47: #{aegan_resnet_decoder_forward.13} parent=35 // pred_region
          _
        $region48: #{aegan_resnet_decoder_forward.13} parent=35 // pred_fallthru
          _
        // Predicated region
        $region49: #{aegan_resnet_decoder_forward.13} parent=35 // pred_check
          %p644 = pneg %p178
        $region50: #{aegan_resnet_decoder_forward.13} parent=35 // pred_check_branch
          %646 = sbr.rel (%p644) target = $region52
        $region51: #{aegan_resnet_decoder_forward.13} parent=35 // pred_region
          _
        $region52: #{aegan_resnet_decoder_forward.13} parent=35 // pred_fallthru
          _
      $region36: #{aegan_resnet_decoder_forward.13} parent=5 // pred_fallthru
        _
      %p647 = scmp.le.s32.totalorder 2, %s14
      // Predicated region
      $region53: #{aegan_resnet_decoder_forward.13} parent=5 // pred_check
        %p648 = pneg %p647
      $region54: #{aegan_resnet_decoder_forward.13} parent=5 // pred_check_branch
        %650 = sbr.rel (%p648) target = $region56
      $region55: #{aegan_resnet_decoder_forward.13} parent=5 // pred_region
        %s651 = ssub.s32 %s14, 2
        // Predicated region
        $region57: #{aegan_resnet_decoder_forward.13} parent=55 // pred_check
          %p652 = pneg %p132
        $region58: #{aegan_resnet_decoder_forward.13} parent=55 // pred_check_branch
          %654 = sbr.rel (%p652) target = $region60
        $region59: #{aegan_resnet_decoder_forward.13} parent=55 // pred_region
          %s655 = smul.u32 2, %s20
          %p656 = scmp.lt.s32.totalorder %s655, 3
          %s657 = scalar_select %p656, %s655, 3
          %s658 = smul.addr %s657, 8
          %s659 = scalar_lea.vmem %s4, %s658
        $region60: #{aegan_resnet_decoder_forward.13} parent=55 // pred_fallthru
          _
        // Predicated region
        $region61: #{aegan_resnet_decoder_forward.13} parent=55 // pred_check
          %p660 = pneg %p158
        $region62: #{aegan_resnet_decoder_forward.13} parent=55 // pred_check_branch
          %662 = sbr.rel (%p660) target = $region64
        $region63: #{aegan_resnet_decoder_forward.13} parent=55 // pred_region
          %p663 = scmp.lt.s32.totalorder %s20, 1
          %s664 = scalar_select %p663, %s20, 1
          %s665 = scalar_lea.vmem %s5, %s664
        $region64: #{aegan_resnet_decoder_forward.13} parent=55 // pred_fallthru
          _
        // Predicated region
        $region65: #{aegan_resnet_decoder_forward.13} parent=55 // pred_check
          %p666 = pneg %p184
        $region66: #{aegan_resnet_decoder_forward.13} parent=55 // pred_check_branch
          %668 = sbr.rel (%p666) target = $region68
        $region67: #{aegan_resnet_decoder_forward.13} parent=55 // pred_region
          %p669 = scmp.lt.s32.totalorder %s20, 1
          %s670 = scalar_select %p669, %s20, 1
          %s671 = scalar_lea.vmem %s6, %s670
        $region68: #{aegan_resnet_decoder_forward.13} parent=55 // pred_fallthru
          _
      $region56: #{aegan_resnet_decoder_forward.13} parent=5 // pred_fallthru
        _
    $region6: #{aegan_resnet_decoder_forward.13} parent=1 // loop_footer
      %s18 = sadd.s32 1, %s14
    $region7: #{aegan_resnet_decoder_forward.13} parent=1 // loop_footer_branch
      %13 = sbr.rel target = $region3
    $region8: #{aegan_resnet_decoder_forward.13} parent=1 // loop_exit
      _
    %672 = vsyncpa [#allocation3], 1
    %s673 = scalar_lea.sflag [#allocation3], 1
    %674 = vsyncpa %s673, 1

// kernel: aegan_resnet_decoder_forward.15
$region0: #{aegan_resnet_decoder_forward.15}
  #allocation0 [shape = 'u32[]', space=smem, size = 0x4, offset = 0x4, fixed_abs, tag = 'smem constant byte address 0x4 - core index']
  #allocation1 [shape = 'u32[144,128]{1,0:T(1,128)}', space=vmem, size = 0x12000, scoped, tag = 'internal scratch']
  %s0 = inlined_call_operand.vmem [shape: bf16[32,128], index: 0, kind: input, shape index: {}]
  %s1 = inlined_call_operand.hbm [shape: bf16[128,64], index: 1, kind: input, shape index: {}]
  %s2 = inlined_call_operand.vmem [shape: f32[32,64], index: 2, kind: output, shape index: {0}]
  %s3 = inlined_call_operand.vmem [shape: f32[2,1,64], index: 3, kind: output, shape index: {1}]
  %s4 = inlined_call_operand.vmem [shape: f32[2,1,64], index: 4, kind: output, shape index: {2}]
  %5 = xla_tuple %s2, %s3, %s4
  %s6 = sld [smem:[#allocation0]]
  $region61: #{aegan_resnet_decoder_forward.15} parent=0
    _
  %s8 = ssub.s32 1, %s6
  %s9 = scalar_select 0, %s8, %s6
  $region1: #{aegan_resnet_decoder_forward.15} parent=0
    #allocation2 [shape = 'u8[32768]{0}', space=vmem, size = 0x8000, scoped, tag = 'input window, operand 1, single buffered']
    #allocation3 [shape = 's32[2]{0}', space=sflag, size = 0x8, scoped, tag = 'scoped memory for aegan_resnet_decoder_forward.15']
    %10 = vsyncpa [#allocation3], 0
    loop: start=0, step=1, limit=4
    $region2: #{aegan_resnet_decoder_forward.15} parent=1 // loop_pre_header
      _
    $region3: #{aegan_resnet_decoder_forward.15} parent=1 // loop_header
      %s12 = sphi 0, %s16
      %p13 = scmp.ge.s32.totalorder %s12, 4
      %s22 = sphi 0, %s24
      %s25 = sphi 0, %s22
      %s26 = sphi 0, %s25
      %s42 = sphi 0, %s26
      %s46 = sphi 0, %s46
      %s48 = sphi 0, %s46
      %s49 = sphi 0, %s48
      %s63 = sphi 0, %s49
      %s69 = sphi 0, %s71
      %s72 = sphi 0, %s69
      %s73 = sphi 0, %s72
      %s89 = sphi 0, %s73
      %s95 = sphi 0, %s97
      %s98 = sphi 0, %s95
      %s99 = sphi 0, %s98
      %s115 = sphi 0, %s99
      %s121 = sphi 0, %s123
      %s124 = sphi 0, %s121
      %s125 = sphi 0, %s124
      %s141 = sphi 0, %s125
    $region4: #{aegan_resnet_decoder_forward.15} parent=1 // loop_header_branch
      %15 = sbr.rel (%p13) target = $region8
    $region5: #{aegan_resnet_decoder_forward.15} parent=1 // loop_body
      %s17 = ssub.s32 %s12, 1
      %s18 = ssub.s32 %s12, 2
      %s19 = sadd.s32 %s12, 1
      %s20 = ssub.s32 %s12, %s19
      %p21 = scmp.eq.s32.totalorder %s20, 0
      %s23 = sadd.s32 %s22, 1
      %s24 = scalar_select %p21, %s22, %s23
      %p27 = pneg %p21
      %p28 = scmp.eq.s32.totalorder %s12, 1
      %p29 = por %p27, %p28
      %p30 = scmp.ne.s32.totalorder %s22, %s25
      %p31 = scmp.eq.s32.totalorder %s12, 0
      %p32 = por %p30, %p31
      %p33 = scmp.ne.s32.totalorder %s22, %s25
      %p34 = scmp.eq.s32.totalorder %s17, 1
      %p35 = por %p33, %p34
      %p36 = scmp.ne.s32.totalorder %s25, %s26
      %p37 = scmp.eq.s32.totalorder %s17, 0
      %p38 = por %p36, %p37
      %p39 = scmp.ne.s32.totalorder %s25, %s26
      %p40 = scmp.eq.s32.totalorder %s18, 1
      %p41 = por %p39, %p40
      %p43 = scmp.ne.s32.totalorder %s26, %s42
      %p44 = scmp.eq.s32.totalorder %s18, 0
      %p45 = por %p43, %p44
      %s47 = sadd.s32 %s46, 1
      %p50 = scmp.eq.s32.totalorder %s12, 1
      %p51 = scmp.ne.s32.totalorder %s46, %s48
      %p52 = scmp.eq.s32.totalorder %s12, 0
      %p53 = por %p51, %p52
      %p54 = scmp.ne.s32.totalorder %s46, %s48
      %p55 = scmp.eq.s32.totalorder %s17, 1
      %p56 = por %p54, %p55
      %p57 = scmp.ne.s32.totalorder %s48, %s49
      %p58 = scmp.eq.s32.totalorder %s17, 0
      %p59 = por %p57, %p58
      %p60 = scmp.ne.s32.totalorder %s48, %s49
      %p61 = scmp.eq.s32.totalorder %s18, 1
      %p62 = por %p60, %p61
      %p64 = scmp.ne.s32.totalorder %s49, %s63
      %p65 = scmp.eq.s32.totalorder %s18, 0
      %p66 = por %p64, %p65
      %s67 = ssub.s32 %s12, %s19
      %p68 = scmp.eq.s32.totalorder %s67, 0
      %s70 = sadd.s32 %s69, 1
      %s71 = scalar_select %p68, %s69, %s70
      %p74 = pneg %p68
      %p75 = scmp.eq.s32.totalorder %s12, 1
      %p76 = por %p74, %p75
      %p77 = scmp.ne.s32.totalorder %s69, %s72
      %p78 = scmp.eq.s32.totalorder %s12, 0
      %p79 = por %p77, %p78
      %p80 = scmp.ne.s32.totalorder %s69, %s72
      %p81 = scmp.eq.s32.totalorder %s17, 1
      %p82 = por %p80, %p81
      %p83 = scmp.ne.s32.totalorder %s72, %s73
      %p84 = scmp.eq.s32.totalorder %s17, 0
      %p85 = por %p83, %p84
      %p86 = scmp.ne.s32.totalorder %s72, %s73
      %p87 = scmp.eq.s32.totalorder %s18, 1
      %p88 = por %p86, %p87
      %p90 = scmp.ne.s32.totalorder %s73, %s89
      %p91 = scmp.eq.s32.totalorder %s18, 0
      %p92 = por %p90, %p91
      %s93 = ssub.s32 %s12, %s19
      %p94 = scmp.eq.s32.totalorder %s93, 0
      %s96 = sadd.s32 %s95, 1
      %s97 = scalar_select %p94, %s95, %s96
      %p100 = pneg %p94
      %p101 = scmp.eq.s32.totalorder %s12, 1
      %p102 = por %p100, %p101
      %p103 = scmp.ne.s32.totalorder %s95, %s98
      %p104 = scmp.eq.s32.totalorder %s12, 0
      %p105 = por %p103, %p104
      %p106 = scmp.ne.s32.totalorder %s95, %s98
      %p107 = scmp.eq.s32.totalorder %s17, 1
      %p108 = por %p106, %p107
      %p109 = scmp.ne.s32.totalorder %s98, %s99
      %p110 = scmp.eq.s32.totalorder %s17, 0
      %p111 = por %p109, %p110
      %p112 = scmp.ne.s32.totalorder %s98, %s99
      %p113 = scmp.eq.s32.totalorder %s18, 1
      %p114 = por %p112, %p113
      %p116 = scmp.ne.s32.totalorder %s99, %s115
      %p117 = scmp.eq.s32.totalorder %s18, 0
      %p118 = por %p116, %p117
      %s119 = ssub.s32 %s12, %s19
      %p120 = scmp.eq.s32.totalorder %s119, 0
      %s122 = sadd.s32 %s121, 1
      %s123 = scalar_select %p120, %s121, %s122
      %p126 = pneg %p120
      %p127 = scmp.eq.s32.totalorder %s12, 1
      %p128 = por %p126, %p127
      %p129 = scmp.ne.s32.totalorder %s121, %s124
      %p130 = scmp.eq.s32.totalorder %s12, 0
      %p131 = por %p129, %p130
      %p132 = scmp.ne.s32.totalorder %s121, %s124
      %p133 = scmp.eq.s32.totalorder %s17, 1
      %p134 = por %p132, %p133
      %p135 = scmp.ne.s32.totalorder %s124, %s125
      %p136 = scmp.eq.s32.totalorder %s17, 0
      %p137 = por %p135, %p136
      %p138 = scmp.ne.s32.totalorder %s124, %s125
      %p139 = scmp.eq.s32.totalorder %s18, 1
      %p140 = por %p138, %p139
      %p142 = scmp.ne.s32.totalorder %s125, %s141
      %p143 = scmp.eq.s32.totalorder %s18, 0
      %p144 = por %p142, %p143
      %p145 = scmp.le.s32.totalorder 1, %s12
      %p146 = scmp.lt.s32.totalorder %s12, 3
      %p147 = pnand %p145, %p146
      %p148 = pneg %p147
      // Predicated region
      $region9: #{aegan_resnet_decoder_forward.15} parent=5 // pred_check
        _
      $region10: #{aegan_resnet_decoder_forward.15} parent=5 // pred_check_branch
        %150 = sbr.rel (%p147) target = $region12
      $region11: #{aegan_resnet_decoder_forward.15} parent=5 // pred_region
        %s151 = ssub.s32 %s12, 1
        // Predicated region
        $region13: #{aegan_resnet_decoder_forward.15} parent=11 // pred_check
          %p152 = pneg %p59
        $region14: #{aegan_resnet_decoder_forward.15} parent=11 // pred_check_branch
          %154 = sbr.rel (%p152) target = $region16
        $region15: #{aegan_resnet_decoder_forward.15} parent=11 // pred_region
          %s156 = ssub.s32 1024, 1024
          %157 = vsyncadd [#allocation3], %s156
          %s158 = sshll.u32 [#allocation2], 4
          %s159 = int_to_ptr.vmem [resolvable:$true] %s158
          %164 = dma.hbm_to_vmem [thread:$0]  %s1, 1024, %s159, [#allocation3], 64, 64, 4
        $region16: #{aegan_resnet_decoder_forward.15} parent=11 // pred_fallthru
          _
      $region12: #{aegan_resnet_decoder_forward.15} parent=5 // pred_fallthru
        _
      %p165 = scmp.lt.s32.totalorder %s12, 2
      // Predicated region
      $region17: #{aegan_resnet_decoder_forward.15} parent=5 // pred_check
        %p166 = pneg %p165
      $region18: #{aegan_resnet_decoder_forward.15} parent=5 // pred_check_branch
        %168 = sbr.rel (%p166) target = $region20
      $region19: #{aegan_resnet_decoder_forward.15} parent=5 // pred_region
        // Predicated region
        $region21: #{aegan_resnet_decoder_forward.15} parent=19 // pred_check
          %p169 = pneg %p32
        $region22: #{aegan_resnet_decoder_forward.15} parent=19 // pred_check_branch
          %171 = sbr.rel (%p169) target = $region24
        $region23: #{aegan_resnet_decoder_forward.15} parent=19 // pred_region
          %s172 = smul.u32 2, %s12
          %p173 = scmp.lt.s32.totalorder %s172, 3
          %s174 = scalar_select %p173, %s172, 3
          %s175 = smul.addr %s174, 4
          %s176 = scalar_lea.vmem %s0, %s175
          %s177 = smul.u32 2, %s12
        $region24: #{aegan_resnet_decoder_forward.15} parent=19 // pred_fallthru
          _
      $region20: #{aegan_resnet_decoder_forward.15} parent=5 // pred_fallthru
        _
      %p178 = scmp.le.s32.totalorder 1, %s12
      %p179 = scmp.lt.s32.totalorder %s12, 3
      %p180 = pnand %p178, %p179
      %p181 = pneg %p180
      // Predicated region
      $region25: #{aegan_resnet_decoder_forward.15} parent=5 // pred_check
        _
      $region26: #{aegan_resnet_decoder_forward.15} parent=5 // pred_check_branch
        %183 = sbr.rel (%p180) target = $region28
      $region27: #{aegan_resnet_decoder_forward.15} parent=5 // pred_region
        %s184 = ssub.s32 %s12, 1
        // Predicated region
        $region29: #{aegan_resnet_decoder_forward.15} parent=27 // pred_check
          %p185 = pneg %p59
        $region30: #{aegan_resnet_decoder_forward.15} parent=27 // pred_check_branch
          %187 = sbr.rel (%p185) target = $region32
        $region31: #{aegan_resnet_decoder_forward.15} parent=27 // pred_region
          %188 = dma.done [#allocation3], 1024
        $region32: #{aegan_resnet_decoder_forward.15} parent=27 // pred_fallthru
          _
        %s189 = smul.u32 2, %s17
        %p190 = scmp.lt.s32.totalorder %s189, 3
        %s191 = scalar_select %p190, %s189, 3
        %s192 = smul.addr %s191, 4
        %s193 = scalar_lea.vmem %s0, %s192
        %p194 = pneg %p38
        %p195 = pneg %p35
        %p196 = pneg %p59
        %p197 = pneg %p56
        %p198 = pneg %p85
        %p199 = pneg %p82
        %s200 = smul.u32 2, %s17
        %p201 = scmp.lt.s32.totalorder %s200, 3
        %s202 = scalar_select %p201, %s200, 3
        %s203 = smul.addr %s202, 8
        %s204 = scalar_lea.vmem %s2, %s203
        %p205 = pneg %p111
        %p206 = pneg %p108
        %p207 = scmp.lt.s32.totalorder %s17, 1
        %s208 = scalar_select %p207, %s17, 1
        %s209 = scalar_lea.vmem %s3, %s208
        %p210 = pneg %p137
        %p211 = pneg %p134
        %p212 = scmp.lt.s32.totalorder %s17, 1
        %s213 = scalar_select %p212, %s17, 1
        %s214 = scalar_lea.vmem %s4, %s213
        %s215 = smul.u32 2, %s17
        %p216 = scmp.lt.s32.totalorder %s215, 3
        %s217 = scalar_select %p216, %s215, 3
        %s218 = smul.addr %s217, 4
        %s219 = scalar_lea.vmem %s0, %s218
        %s220 = smul.u32 2, %s17
        %s221 = smul.u32 2, %s17
        %p222 = scmp.lt.s32.totalorder %s221, 3
        %s223 = scalar_select %p222, %s221, 3
        %s224 = smul.addr %s223, 8
        %s225 = scalar_lea.vmem %s2, %s224
        %s226 = smul.u32 2, %s17
        %p227 = scmp.lt.s32.totalorder %s17, 1
        %s228 = scalar_select %p227, %s17, 1
        %s229 = scalar_lea.vmem %s3, %s228
        %p230 = scmp.lt.s32.totalorder %s17, 1
        %s231 = scalar_select %p230, %s17, 1
        %s232 = scalar_lea.vmem %s4, %s231
        %v234 = vld [vmem:[%s219] sm:$0xf]
        %v235 = vld [vmem:[%s219 + $0x4] sm:$0xf]
        %v236 = vld [vmem:[#allocation2] sm:$0xf]
        %v237 = vld [vmem:[#allocation2 + $0x4] sm:$0xf]
        %v238 = vld [vmem:[#allocation2 + $0x8] sm:$0xf]
        %v239 = vld [vmem:[#allocation2 + $0xc] sm:$0xf]
        %v240 = vld [vmem:[#allocation2 + $0x10] sm:$0xf]
        %v241 = vld [vmem:[#allocation2 + $0x14] sm:$0xf]
        %v242 = vld [vmem:[#allocation2 + $0x18] sm:$0xf]
        %v243 = vld [vmem:[#allocation2 + $0x1c] sm:$0xf]
        %v244 = vld [vmem:[#allocation2 + $0x20] sm:$0xf]
        %v245 = vld [vmem:[#allocation2 + $0x24] sm:$0xf]
        %v246 = vld [vmem:[#allocation2 + $0x28] sm:$0xf]
        %v247 = vld [vmem:[#allocation2 + $0x2c] sm:$0xf]
        %v248 = vld [vmem:[#allocation2 + $0x30] sm:$0xf]
        %v249 = vld [vmem:[#allocation2 + $0x34] sm:$0xf]
        %v250 = vld [vmem:[#allocation2 + $0x38] sm:$0xf]
        %v251 = vld [vmem:[#allocation2 + $0x3c] sm:$0xf]
        %v254 = vunpack.c.l.b16 %v234
        %v255 = vunpack.c.l.b16 %v235
        %v256 = vpack.c.b16 %v255, %v254
        %v274 = vunpack.c.l.b16 %v236
        %v275 = vunpack.c.l.b16 %v237
        %v276 = vunpack.c.l.b16 %v238
        %v277 = vunpack.c.l.b16 %v239
        %v278 = vunpack.c.l.b16 %v240
        %v279 = vunpack.c.l.b16 %v241
        %v280 = vunpack.c.l.b16 %v242
        %v281 = vunpack.c.l.b16 %v243
        %v282 = vunpack.c.l.b16 %v244
        %v283 = vunpack.c.l.b16 %v245
        %v284 = vunpack.c.l.b16 %v246
        %v285 = vunpack.c.l.b16 %v247
        %v286 = vunpack.c.l.b16 %v248
        %v287 = vunpack.c.l.b16 %v249
        %v288 = vunpack.c.l.b16 %v250
        %v289 = vunpack.c.l.b16 %v251
        %v290 = vpack.c.b16 %v275, %v274
        %v291 = vpack.c.b16 %v277, %v276
        %v292 = vpack.c.b16 %v279, %v278
        %v293 = vpack.c.b16 %v281, %v280
        %v294 = vpack.c.b16 %v283, %v282
        %v295 = vpack.c.b16 %v285, %v284
        %v296 = vpack.c.b16 %v287, %v286
        %v297 = vpack.c.b16 %v289, %v288
        %306 = vmatprep.subr.bf16.mxu0 0
        %307 = vmatpush1.bf16.msra.mxu0 %v290
        %308 = vmatprep.subr.bf16.mxu0 0
        %309 = vmatpush1.bf16.msra.mxu0 %v291
        %310 = vmatprep.subr.bf16.mxu0 0
        %311 = vmatpush1.bf16.msra.mxu0 %v292
        %312 = vmatprep.subr.bf16.mxu0 0
        %313 = vmatpush1.bf16.msra.mxu0 %v293
        %314 = vmatprep.subr.bf16.mxu0 0
        %315 = vmatpush1.bf16.msra.mxu0 %v294
        %316 = vmatprep.subr.bf16.mxu0 0
        %317 = vmatpush1.bf16.msra.mxu0 %v295
        %318 = vmatprep.subr.bf16.mxu0 0
        %319 = vmatpush1.bf16.msra.mxu0 %v296
        %320 = vmatprep.subr.bf16.mxu0 0
        %321 = vmatpush1.bf16.msra.mxu0 %v297
        %322 = vmatprep.subr.bf16.mxu0 0
        %323 = vmatpush1.bf16.msra.mxu0 0
        %324 = vmatprep.subr.bf16.mxu0 0
        %325 = vmatpush1.bf16.msra.mxu0 0
        %326 = vmatprep.subr.bf16.mxu0 0
        %327 = vmatpush1.bf16.msra.mxu0 0
        %328 = vmatprep.subr.bf16.mxu0 0
        %329 = vmatpush1.bf16.msra.mxu0 0
        %330 = vmatprep.subr.bf16.mxu0 0
        %331 = vmatpush1.bf16.msra.mxu0 0
        %332 = vmatprep.subr.bf16.mxu0 0
        %333 = vmatpush1.bf16.msra.mxu0 0
        %334 = vmatprep.subr.bf16.mxu0 0
        %335 = vmatpush1.bf16.msra.mxu0 0
        %336 = vmatprep.subr.bf16.mxu0 0
        %337 = vmatpush1.bf16.msra.mxu0 0
        %338 = vmatprep.mubr.bf16.mxu0 0
        %339 = vmatmul.mubr.bf16.gmra.mrb[0].mxu0 %v256
        %v340 = vpop.f32.mrb[0].mxu0
        %v341 = vadd.f32 0.0, %v340
        %v342 = vpop.f32.mrb[0].mxu0
        %v343 = vpop.f32.mrb[0].mxu0
        %v344 = vadd.f32 0.0, %v343
        %v345 = vpop.f32.mrb[0].mxu0
        %346 = vdwg.mxu0
        %vm347 = vcmask 523264
        %348 = vst.msk [vmem:[%s225] sm:$0xff] %vm347, %v341
        %349 = vst.msk [vmem:[%s225 + $0x8] sm:$0xff] %vm347, %v344
        %s350 = smul.u32 %s17, 16
        %v351 = vlaneseq
        %v352 = vshrl.u32 %v351, 7
        %v353 = vadd.s32 %v352, 8
        %v354 = vstv %s350
        %v355 = vadd.s32 %v354, %v352
        %v356 = vadd.s32 %v354, %v353
        %vm357 = vcmp.lt.s32.totalorder %v355, 32
        %vm358 = vcmp.lt.s32.totalorder %v356, 32
        %v359 = vsel %vm357, 1, 0
        %v360 = vsel %vm358, 1, 0
        %vm361 = vcmp.eq.s32.totalorder %v359, 1
        %vm362 = vcmp.eq.s32.totalorder %v360, 1
        %v363 = vsel %vm361, %v341, 0.0
        %v364 = vsel %vm362, %v344, 0.0
        %v365 = vsel %vm347, %v363, 0.0
        %v366 = vsel %vm347, %v364, 0.0
        %v367 = vadd.f32 %v365, %v366
        %v368 = vrot.slane %v367, 4
        %v369 = vadd.f32 %v367, %v368
        %v370 = vrot.slane %v369, 2
        %v371 = vadd.f32 %v369, %v370
        %v372 = vrot.slane %v371, 1
        %v373 = vadd.f32 %v371, %v372
        %vm374 = vcmask 516096
        %375 = vst.msk [vmem:[%s229] sm:$0x1] %vm374, %v373
        %v376 = vmul.f32 %v363, %v363
        %v377 = vmul.f32 %v364, %v364
        %v378 = vsel %vm347, %v376, 0.0
        %v379 = vsel %vm347, %v377, 0.0
        %v380 = vadd.f32 %v378, %v379
        %v381 = vrot.slane %v380, 4
        %v382 = vadd.f32 %v380, %v381
        %v383 = vrot.slane %v382, 2
        %v384 = vadd.f32 %v382, %v383
        %v385 = vrot.slane %v384, 1
        %v386 = vadd.f32 %v384, %v385
        %387 = vst.msk [vmem:[%s232] sm:$0x1] %vm374, %v386
        %s388 = smul.u32 2, %s17
        %p389 = scmp.lt.s32.totalorder %s388, 3
        %s390 = scalar_select %p389, %s388, 3
        %s391 = smul.addr %s390, 8
        %s392 = scalar_lea.vmem %s2, %s391
        %p393 = scmp.lt.s32.totalorder %s17, 1
        %s394 = scalar_select %p393, %s17, 1
        %s395 = scalar_lea.vmem %s3, %s394
        %p396 = scmp.lt.s32.totalorder %s17, 1
        %s397 = scalar_select %p396, %s17, 1
        %s398 = scalar_lea.vmem %s4, %s397
        // Predicated region
        $region33: #{aegan_resnet_decoder_forward.15} parent=27 // pred_check
          %p399 = pneg %p82
        $region34: #{aegan_resnet_decoder_forward.15} parent=27 // pred_check_branch
          %401 = sbr.rel (%p399) target = $region36
        $region35: #{aegan_resnet_decoder_forward.15} parent=27 // pred_region
          %s402 = smul.u32 2, %s17
        $region36: #{aegan_resnet_decoder_forward.15} parent=27 // pred_fallthru
          _
        // Predicated region
        $region37: #{aegan_resnet_decoder_forward.15} parent=27 // pred_check
          %p403 = pneg %p108
        $region38: #{aegan_resnet_decoder_forward.15} parent=27 // pred_check_branch
          %405 = sbr.rel (%p403) target = $region40
        $region39: #{aegan_resnet_decoder_forward.15} parent=27 // pred_region
          _
        $region40: #{aegan_resnet_decoder_forward.15} parent=27 // pred_fallthru
          _
        // Predicated region
        $region41: #{aegan_resnet_decoder_forward.15} parent=27 // pred_check
          %p406 = pneg %p134
        $region42: #{aegan_resnet_decoder_forward.15} parent=27 // pred_check_branch
          %408 = sbr.rel (%p406) target = $region44
        $region43: #{aegan_resnet_decoder_forward.15} parent=27 // pred_region
          _
        $region44: #{aegan_resnet_decoder_forward.15} parent=27 // pred_fallthru
          _
      $region28: #{aegan_resnet_decoder_forward.15} parent=5 // pred_fallthru
        _
      %p409 = scmp.le.s32.totalorder 2, %s12
      // Predicated region
      $region45: #{aegan_resnet_decoder_forward.15} parent=5 // pred_check
        %p410 = pneg %p409
      $region46: #{aegan_resnet_decoder_forward.15} parent=5 // pred_check_branch
        %412 = sbr.rel (%p410) target = $region48
      $region47: #{aegan_resnet_decoder_forward.15} parent=5 // pred_region
        %s413 = ssub.s32 %s12, 2
        // Predicated region
        $region49: #{aegan_resnet_decoder_forward.15} parent=47 // pred_check
          %p414 = pneg %p88
        $region50: #{aegan_resnet_decoder_forward.15} parent=47 // pred_check_branch
          %416 = sbr.rel (%p414) target = $region52
        $region51: #{aegan_resnet_decoder_forward.15} parent=47 // pred_region
          %s417 = smul.u32 2, %s18
          %p418 = scmp.lt.s32.totalorder %s417, 3
          %s419 = scalar_select %p418, %s417, 3
          %s420 = smul.addr %s419, 8
          %s421 = scalar_lea.vmem %s2, %s420
        $region52: #{aegan_resnet_decoder_forward.15} parent=47 // pred_fallthru
          _
        // Predicated region
        $region53: #{aegan_resnet_decoder_forward.15} parent=47 // pred_check
          %p422 = pneg %p114
        $region54: #{aegan_resnet_decoder_forward.15} parent=47 // pred_check_branch
          %424 = sbr.rel (%p422) target = $region56
        $region55: #{aegan_resnet_decoder_forward.15} parent=47 // pred_region
          %p425 = scmp.lt.s32.totalorder %s18, 1
          %s426 = scalar_select %p425, %s18, 1
          %s427 = scalar_lea.vmem %s3, %s426
        $region56: #{aegan_resnet_decoder_forward.15} parent=47 // pred_fallthru
          _
        // Predicated region
        $region57: #{aegan_resnet_decoder_forward.15} parent=47 // pred_check
          %p428 = pneg %p140
        $region58: #{aegan_resnet_decoder_forward.15} parent=47 // pred_check_branch
          %430 = sbr.rel (%p428) target = $region60
        $region59: #{aegan_resnet_decoder_forward.15} parent=47 // pred_region
          %p431 = scmp.lt.s32.totalorder %s18, 1
          %s432 = scalar_select %p431, %s18, 1
          %s433 = scalar_lea.vmem %s4, %s432
        $region60: #{aegan_resnet_decoder_forward.15} parent=47 // pred_fallthru
          _
      $region48: #{aegan_resnet_decoder_forward.15} parent=5 // pred_fallthru
        _
    $region6: #{aegan_resnet_decoder_forward.15} parent=1 // loop_footer
      %s16 = sadd.s32 1, %s12
    $region7: #{aegan_resnet_decoder_forward.15} parent=1 // loop_footer_branch
      %11 = sbr.rel target = $region3
    $region8: #{aegan_resnet_decoder_forward.15} parent=1 // loop_exit
      _
    %434 = vsyncpa [#allocation3], 1
    %s435 = scalar_lea.sflag [#allocation3], 1
    %436 = vsyncpa %s435, 1

// kernel: aegan_resnet_decoder_forward.18
$region0: #{aegan_resnet_decoder_forward.18}
  #allocation0 [shape = 'u32[]', space=smem, size = 0x4, offset = 0x4, fixed_abs, tag = 'smem constant byte address 0x4 - core index']
  #allocation1 [shape = 'u32[144,128]{1,0:T(1,128)}', space=vmem, size = 0x12000, scoped, tag = 'internal scratch']
  %s0 = inlined_call_operand.vmem [shape: f32[16,128], index: 0, kind: input, shape index: {}]
  %s1 = inlined_call_operand.vmem [shape: f32[16,128], index: 1, kind: input, shape index: {}]
  %s2 = inlined_call_operand.vmem [shape: f32[1,128], index: 2, kind: input, shape index: {}]
  %s3 = inlined_call_operand.vmem [shape: f32[1,128], index: 3, kind: input, shape index: {}]
  %s4 = inlined_call_operand.vmem [shape: f32[1,128], index: 4, kind: input, shape index: {}]
  %s5 = inlined_call_operand.vmem [shape: f32[1,128], index: 5, kind: input, shape index: {}]
  %s6 = inlined_call_operand.vmem [shape: f32[16,128], index: 6, kind: output, shape index: {}]
  %s7 = sld [smem:[#allocation0]]
  $region57: #{aegan_resnet_decoder_forward.18} parent=0
    _
  %s9 = ssub.s32 1, %s7
  %s10 = scalar_select 0, %s9, %s7
  loop: start=0, step=1, limit=4
  $region2: #{aegan_resnet_decoder_forward.18} parent=0 // loop_pre_header
    _
  $region3: #{aegan_resnet_decoder_forward.18} parent=0 // loop_header
    %s12 = sphi 0, %s16
    %p13 = scmp.ge.s32.totalorder %s12, 4
    %s22 = sphi 0, %s24
    %s25 = sphi 0, %s22
    %s26 = sphi 0, %s25
    %s42 = sphi 0, %s26
    %s48 = sphi 0, %s50
    %s51 = sphi 0, %s48
    %s52 = sphi 0, %s51
    %s68 = sphi 0, %s52
    %s72 = sphi 0, %s72
    %s74 = sphi 0, %s72
    %s75 = sphi 0, %s74
    %s89 = sphi 0, %s75
    %s93 = sphi 0, %s93
    %s95 = sphi 0, %s93
    %s96 = sphi 0, %s95
    %s110 = sphi 0, %s96
    %s114 = sphi 0, %s114
    %s116 = sphi 0, %s114
    %s117 = sphi 0, %s116
    %s131 = sphi 0, %s117
    %s135 = sphi 0, %s135
    %s137 = sphi 0, %s135
    %s138 = sphi 0, %s137
    %s152 = sphi 0, %s138
    %s158 = sphi 0, %s160
    %s161 = sphi 0, %s158
    %s162 = sphi 0, %s161
    %s178 = sphi 0, %s162
  $region4: #{aegan_resnet_decoder_forward.18} parent=0 // loop_header_branch
    %15 = sbr.rel (%p13) target = $region8
  $region5: #{aegan_resnet_decoder_forward.18} parent=0 // loop_body
    %s17 = ssub.s32 %s12, 1
    %s18 = ssub.s32 %s12, 2
    %s19 = sadd.s32 %s12, 1
    %s20 = ssub.s32 %s12, %s19
    %p21 = scmp.eq.s32.totalorder %s20, 0
    %s23 = sadd.s32 %s22, 1
    %s24 = scalar_select %p21, %s22, %s23
    %p27 = pneg %p21
    %p28 = scmp.eq.s32.totalorder %s12, 1
    %p29 = por %p27, %p28
    %p30 = scmp.ne.s32.totalorder %s22, %s25
    %p31 = scmp.eq.s32.totalorder %s12, 0
    %p32 = por %p30, %p31
    %p33 = scmp.ne.s32.totalorder %s22, %s25
    %p34 = scmp.eq.s32.totalorder %s17, 1
    %p35 = por %p33, %p34
    %p36 = scmp.ne.s32.totalorder %s25, %s26
    %p37 = scmp.eq.s32.totalorder %s17, 0
    %p38 = por %p36, %p37
    %p39 = scmp.ne.s32.totalorder %s25, %s26
    %p40 = scmp.eq.s32.totalorder %s18, 1
    %p41 = por %p39, %p40
    %p43 = scmp.ne.s32.totalorder %s26, %s42
    %p44 = scmp.eq.s32.totalorder %s18, 0
    %p45 = por %p43, %p44
    %s46 = ssub.s32 %s12, %s19
    %p47 = scmp.eq.s32.totalorder %s46, 0
    %s49 = sadd.s32 %s48, 1
    %s50 = scalar_select %p47, %s48, %s49
    %p53 = pneg %p47
    %p54 = scmp.eq.s32.totalorder %s12, 1
    %p55 = por %p53, %p54
    %p56 = scmp.ne.s32.totalorder %s48, %s51
    %p57 = scmp.eq.s32.totalorder %s12, 0
    %p58 = por %p56, %p57
    %p59 = scmp.ne.s32.totalorder %s48, %s51
    %p60 = scmp.eq.s32.totalorder %s17, 1
    %p61 = por %p59, %p60
    %p62 = scmp.ne.s32.totalorder %s51, %s52
    %p63 = scmp.eq.s32.totalorder %s17, 0
    %p64 = por %p62, %p63
    %p65 = scmp.ne.s32.totalorder %s51, %s52
    %p66 = scmp.eq.s32.totalorder %s18, 1
    %p67 = por %p65, %p66
    %p69 = scmp.ne.s32.totalorder %s52, %s68
    %p70 = scmp.eq.s32.totalorder %s18, 0
    %p71 = por %p69, %p70
    %s73 = sadd.s32 %s72, 1
    %p76 = scmp.eq.s32.totalorder %s12, 1
    %p77 = scmp.ne.s32.totalorder %s72, %s74
    %p78 = scmp.eq.s32.totalorder %s12, 0
    %p79 = por %p77, %p78
    %p80 = scmp.ne.s32.totalorder %s72, %s74
    %p81 = scmp.eq.s32.totalorder %s17, 1
    %p82 = por %p80, %p81
    %p83 = scmp.ne.s32.totalorder %s74, %s75
    %p84 = scmp.eq.s32.totalorder %s17, 0
    %p85 = por %p83, %p84
    %p86 = scmp.ne.s32.totalorder %s74, %s75
    %p87 = scmp.eq.s32.totalorder %s18, 1
    %p88 = por %p86, %p87
    %p90 = scmp.ne.s32.totalorder %s75, %s89
    %p91 = scmp.eq.s32.totalorder %s18, 0
    %p92 = por %p90, %p91
    %s94 = sadd.s32 %s93, 1
    %p97 = scmp.eq.s32.totalorder %s12, 1
    %p98 = scmp.ne.s32.totalorder %s93, %s95
    %p99 = scmp.eq.s32.totalorder %s12, 0
    %p100 = por %p98, %p99
    %p101 = scmp.ne.s32.totalorder %s93, %s95
    %p102 = scmp.eq.s32.totalorder %s17, 1
    %p103 = por %p101, %p102
    %p104 = scmp.ne.s32.totalorder %s95, %s96
    %p105 = scmp.eq.s32.totalorder %s17, 0
    %p106 = por %p104, %p105
    %p107 = scmp.ne.s32.totalorder %s95, %s96
    %p108 = scmp.eq.s32.totalorder %s18, 1
    %p109 = por %p107, %p108
    %p111 = scmp.ne.s32.totalorder %s96, %s110
    %p112 = scmp.eq.s32.totalorder %s18, 0
    %p113 = por %p111, %p112
    %s115 = sadd.s32 %s114, 1
    %p118 = scmp.eq.s32.totalorder %s12, 1
    %p119 = scmp.ne.s32.totalorder %s114, %s116
    %p120 = scmp.eq.s32.totalorder %s12, 0
    %p121 = por %p119, %p120
    %p122 = scmp.ne.s32.totalorder %s114, %s116
    %p123 = scmp.eq.s32.totalorder %s17, 1
    %p124 = por %p122, %p123
    %p125 = scmp.ne.s32.totalorder %s116, %s117
    %p126 = scmp.eq.s32.totalorder %s17, 0
    %p127 = por %p125, %p126
    %p128 = scmp.ne.s32.totalorder %s116, %s117
    %p129 = scmp.eq.s32.totalorder %s18, 1
    %p130 = por %p128, %p129
    %p132 = scmp.ne.s32.totalorder %s117, %s131
    %p133 = scmp.eq.s32.totalorder %s18, 0
    %p134 = por %p132, %p133
    %s136 = sadd.s32 %s135, 1
    %p139 = scmp.eq.s32.totalorder %s12, 1
    %p140 = scmp.ne.s32.totalorder %s135, %s137
    %p141 = scmp.eq.s32.totalorder %s12, 0
    %p142 = por %p140, %p141
    %p143 = scmp.ne.s32.totalorder %s135, %s137
    %p144 = scmp.eq.s32.totalorder %s17, 1
    %p145 = por %p143, %p144
    %p146 = scmp.ne.s32.totalorder %s137, %s138
    %p147 = scmp.eq.s32.totalorder %s17, 0
    %p148 = por %p146, %p147
    %p149 = scmp.ne.s32.totalorder %s137, %s138
    %p150 = scmp.eq.s32.totalorder %s18, 1
    %p151 = por %p149, %p150
    %p153 = scmp.ne.s32.totalorder %s138, %s152
    %p154 = scmp.eq.s32.totalorder %s18, 0
    %p155 = por %p153, %p154
    %s156 = ssub.s32 %s12, %s19
    %p157 = scmp.eq.s32.totalorder %s156, 0
    %s159 = sadd.s32 %s158, 1
    %s160 = scalar_select %p157, %s158, %s159
    %p163 = pneg %p157
    %p164 = scmp.eq.s32.totalorder %s12, 1
    %p165 = por %p163, %p164
    %p166 = scmp.ne.s32.totalorder %s158, %s161
    %p167 = scmp.eq.s32.totalorder %s12, 0
    %p168 = por %p166, %p167
    %p169 = scmp.ne.s32.totalorder %s158, %s161
    %p170 = scmp.eq.s32.totalorder %s17, 1
    %p171 = por %p169, %p170
    %p172 = scmp.ne.s32.totalorder %s161, %s162
    %p173 = scmp.eq.s32.totalorder %s17, 0
    %p174 = por %p172, %p173
    %p175 = scmp.ne.s32.totalorder %s161, %s162
    %p176 = scmp.eq.s32.totalorder %s18, 1
    %p177 = por %p175, %p176
    %p179 = scmp.ne.s32.totalorder %s162, %s178
    %p180 = scmp.eq.s32.totalorder %s18, 0
    %p181 = por %p179, %p180
    %p182 = scmp.le.s32.totalorder 1, %s12
    %p183 = scmp.lt.s32.totalorder %s12, 3
    %p184 = pnand %p182, %p183
    %p185 = pneg %p184
    // Predicated region
    $region9: #{aegan_resnet_decoder_forward.18} parent=5 // pred_check
      _
    $region10: #{aegan_resnet_decoder_forward.18} parent=5 // pred_check_branch
      %187 = sbr.rel (%p184) target = $region12
    $region11: #{aegan_resnet_decoder_forward.18} parent=5 // pred_region
      %s188 = ssub.s32 %s12, 1
      // Predicated region
      $region13: #{aegan_resnet_decoder_forward.18} parent=11 // pred_check
        %p189 = pneg %p85
      $region14: #{aegan_resnet_decoder_forward.18} parent=11 // pred_check_branch
        %191 = sbr.rel (%p189) target = $region16
      $region15: #{aegan_resnet_decoder_forward.18} parent=11 // pred_region
        _
      $region16: #{aegan_resnet_decoder_forward.18} parent=11 // pred_fallthru
        _
      // Predicated region
      $region17: #{aegan_resnet_decoder_forward.18} parent=11 // pred_check
        %p192 = pneg %p106
      $region18: #{aegan_resnet_decoder_forward.18} parent=11 // pred_check_branch
        %194 = sbr.rel (%p192) target = $region20
      $region19: #{aegan_resnet_decoder_forward.18} parent=11 // pred_region
        _
      $region20: #{aegan_resnet_decoder_forward.18} parent=11 // pred_fallthru
        _
      // Predicated region
      $region21: #{aegan_resnet_decoder_forward.18} parent=11 // pred_check
        %p195 = pneg %p127
      $region22: #{aegan_resnet_decoder_forward.18} parent=11 // pred_check_branch
        %197 = sbr.rel (%p195) target = $region24
      $region23: #{aegan_resnet_decoder_forward.18} parent=11 // pred_region
        _
      $region24: #{aegan_resnet_decoder_forward.18} parent=11 // pred_fallthru
        _
      // Predicated region
      $region25: #{aegan_resnet_decoder_forward.18} parent=11 // pred_check
        %p198 = pneg %p148
      $region26: #{aegan_resnet_decoder_forward.18} parent=11 // pred_check_branch
        %200 = sbr.rel (%p198) target = $region28
      $region27: #{aegan_resnet_decoder_forward.18} parent=11 // pred_region
        _
      $region28: #{aegan_resnet_decoder_forward.18} parent=11 // pred_fallthru
        _
    $region12: #{aegan_resnet_decoder_forward.18} parent=5 // pred_fallthru
      _
    %p201 = scmp.lt.s32.totalorder %s12, 2
    // Predicated region
    $region29: #{aegan_resnet_decoder_forward.18} parent=5 // pred_check
      %p202 = pneg %p201
    $region30: #{aegan_resnet_decoder_forward.18} parent=5 // pred_check_branch
      %204 = sbr.rel (%p202) target = $region32
    $region31: #{aegan_resnet_decoder_forward.18} parent=5 // pred_region
      // Predicated region
      $region33: #{aegan_resnet_decoder_forward.18} parent=31 // pred_check
        %p205 = pneg %p32
      $region34: #{aegan_resnet_decoder_forward.18} parent=31 // pred_check_branch
        %207 = sbr.rel (%p205) target = $region36
      $region35: #{aegan_resnet_decoder_forward.18} parent=31 // pred_region
        %p208 = scmp.lt.s32.totalorder %s12, 1
        %s209 = scalar_select %p208, %s12, 1
        %s210 = smul.addr %s209, 8
        %s211 = scalar_lea.vmem %s0, %s210
      $region36: #{aegan_resnet_decoder_forward.18} parent=31 // pred_fallthru
        _
      // Predicated region
      $region37: #{aegan_resnet_decoder_forward.18} parent=31 // pred_check
        %p212 = pneg %p58
      $region38: #{aegan_resnet_decoder_forward.18} parent=31 // pred_check_branch
        %214 = sbr.rel (%p212) target = $region40
      $region39: #{aegan_resnet_decoder_forward.18} parent=31 // pred_region
        %p215 = scmp.lt.s32.totalorder %s12, 1
        %s216 = scalar_select %p215, %s12, 1
        %s217 = smul.addr %s216, 8
        %s218 = scalar_lea.vmem %s1, %s217
      $region40: #{aegan_resnet_decoder_forward.18} parent=31 // pred_fallthru
        _
    $region32: #{aegan_resnet_decoder_forward.18} parent=5 // pred_fallthru
      _
    %p219 = scmp.le.s32.totalorder 1, %s12
    %p220 = scmp.lt.s32.totalorder %s12, 3
    %p221 = pnand %p219, %p220
    %p222 = pneg %p221
    // Predicated region
    $region41: #{aegan_resnet_decoder_forward.18} parent=5 // pred_check
      _
    $region42: #{aegan_resnet_decoder_forward.18} parent=5 // pred_check_branch
      %224 = sbr.rel (%p221) target = $region44
    $region43: #{aegan_resnet_decoder_forward.18} parent=5 // pred_region
      %s225 = ssub.s32 %s12, 1
      %p226 = scmp.lt.s32.totalorder %s17, 1
      %s227 = scalar_select %p226, %s17, 1
      %s228 = smul.addr %s227, 8
      %s229 = scalar_lea.vmem %s0, %s228
      %p230 = pneg %p38
      %p231 = pneg %p35
      %p232 = scmp.lt.s32.totalorder %s17, 1
      %s233 = scalar_select %p232, %s17, 1
      %s234 = smul.addr %s233, 8
      %s235 = scalar_lea.vmem %s1, %s234
      %p236 = pneg %p64
      %p237 = pneg %p61
      %p238 = pneg %p85
      %p239 = pneg %p82
      %p240 = pneg %p106
      %p241 = pneg %p103
      %p242 = pneg %p127
      %p243 = pneg %p124
      %p244 = pneg %p148
      %p245 = pneg %p145
      %p246 = pneg %p174
      %p247 = pneg %p171
      %p248 = scmp.lt.s32.totalorder %s17, 1
      %s249 = scalar_select %p248, %s17, 1
      %s250 = smul.addr %s249, 8
      %s251 = scalar_lea.vmem %s6, %s250
      %p252 = scmp.lt.s32.totalorder %s17, 1
      %s253 = scalar_select %p252, %s17, 1
      %s254 = smul.addr %s253, 8
      %s255 = scalar_lea.vmem %s0, %s254
      %p256 = scmp.lt.s32.totalorder %s17, 1
      %s257 = scalar_select %p256, %s17, 1
      %s258 = smul.addr %s257, 8
      %s259 = scalar_lea.vmem %s1, %s258
      %p260 = scmp.lt.s32.totalorder %s17, 1
      %s261 = scalar_select %p260, %s17, 1
      %s262 = smul.addr %s261, 8
      %s263 = scalar_lea.vmem %s6, %s262
      %v264 = vld [vmem:[%s259] sm:$0xff]
      %v265 = vld [vmem:[%s4] sm:$0x1]
      %v267 = vlaneseq
      %v268 = vshrl.u32 %v267, 7
      %v269 = vsub.s32 0, %v268
      %v270 = vrot.slane %v265, %v269
      %v272 = vmul.f32 %v264, %v270
      %v273 = vld [vmem:[%s5] sm:$0x1]
      %v275 = vlaneseq
      %v276 = vshrl.u32 %v275, 7
      %v277 = vsub.s32 0, %v276
      %v278 = vrot.slane %v273, %v277
      %v280 = vadd.f32 %v272, %v278
      %v281 = vmax.f32 %v280, 0.0
      %v282 = vld [vmem:[%s255] sm:$0xff]
      %v283 = vld [vmem:[%s2] sm:$0x1]
      %v285 = vlaneseq
      %v286 = vshrl.u32 %v285, 7
      %v287 = vsub.s32 0, %v286
      %v288 = vrot.slane %v283, %v287
      %v290 = vmul.f32 %v282, %v288
      %v291 = vadd.f32 %v281, %v290
      %v292 = vld [vmem:[%s3] sm:$0x1]
      %v294 = vlaneseq
      %v295 = vshrl.u32 %v294, 7
      %v296 = vsub.s32 0, %v295
      %v297 = vrot.slane %v292, %v296
      %v299 = vadd.f32 %v291, %v297
      %300 = vst [vmem:[%s263] sm:$0xff] %v299
      %p301 = scmp.lt.s32.totalorder %s17, 1
      %s302 = scalar_select %p301, %s17, 1
      %s303 = smul.addr %s302, 8
      %s304 = scalar_lea.vmem %s6, %s303
      // Predicated region
      $region45: #{aegan_resnet_decoder_forward.18} parent=43 // pred_check
        %p305 = pneg %p171
      $region46: #{aegan_resnet_decoder_forward.18} parent=43 // pred_check_branch
        %307 = sbr.rel (%p305) target = $region48
      $region47: #{aegan_resnet_decoder_forward.18} parent=43 // pred_region
        _
      $region48: #{aegan_resnet_decoder_forward.18} parent=43 // pred_fallthru
        _
    $region44: #{aegan_resnet_decoder_forward.18} parent=5 // pred_fallthru
      _
    %p308 = scmp.le.s32.totalorder 2, %s12
    // Predicated region
    $region49: #{aegan_resnet_decoder_forward.18} parent=5 // pred_check
      %p309 = pneg %p308
    $region50: #{aegan_resnet_decoder_forward.18} parent=5 // pred_check_branch
      %311 = sbr.rel (%p309) target = $region52
    $region51: #{aegan_resnet_decoder_forward.18} parent=5 // pred_region
      %s312 = ssub.s32 %s12, 2
      // Predicated region
      $region53: #{aegan_resnet_decoder_forward.18} parent=51 // pred_check
        %p313 = pneg %p177
      $region54: #{aegan_resnet_decoder_forward.18} parent=51 // pred_check_branch
        %315 = sbr.rel (%p313) target = $region56
      $region55: #{aegan_resnet_decoder_forward.18} parent=51 // pred_region
        %p316 = scmp.lt.s32.totalorder %s18, 1
        %s317 = scalar_select %p316, %s18, 1
        %s318 = smul.addr %s317, 8
        %s319 = scalar_lea.vmem %s6, %s318
      $region56: #{aegan_resnet_decoder_forward.18} parent=51 // pred_fallthru
        _
    $region52: #{aegan_resnet_decoder_forward.18} parent=5 // pred_fallthru
      _
  $region6: #{aegan_resnet_decoder_forward.18} parent=0 // loop_footer
    %s16 = sadd.s32 1, %s12
  $region7: #{aegan_resnet_decoder_forward.18} parent=0 // loop_footer_branch
    %11 = sbr.rel target = $region3
  $region8: #{aegan_resnet_decoder_forward.18} parent=0 // loop_exit
    _

// kernel: aegan_resnet_decoder_forward.16
$region0: #{aegan_resnet_decoder_forward.16}
  #allocation0 [shape = 'u32[]', space=smem, size = 0x4, offset = 0x4, fixed_abs, tag = 'smem constant byte address 0x4 - core index']
  #allocation1 [shape = 'u32[144,128]{1,0:T(1,128)}', space=vmem, size = 0x12000, scoped, tag = 'internal scratch']
  %s0 = inlined_call_operand.vmem [shape: bf16[128,144], index: 0, kind: input, shape index: {}]
  %s1 = inlined_call_operand.vmem [shape: bf16[144,16], index: 1, kind: input, shape index: {}]
  %s2 = inlined_call_operand.vmem [shape: f32[1,144], index: 2, kind: input, shape index: {}]
  %s3 = inlined_call_operand.vmem [shape: f32[1,144], index: 3, kind: input, shape index: {}]
  %s4 = inlined_call_operand.vmem [shape: f32[128,16], index: 4, kind: output, shape index: {0}]
  %s5 = inlined_call_operand.vmem [shape: f32[2,1,16], index: 5, kind: output, shape index: {1}]
  %s6 = inlined_call_operand.vmem [shape: f32[2,1,16], index: 6, kind: output, shape index: {2}]
  %7 = xla_tuple %s4, %s5, %s6
  %s8 = sld [smem:[#allocation0]]
  $region65: #{aegan_resnet_decoder_forward.16} parent=0
    _
  %s10 = ssub.s32 1, %s8
  %s11 = scalar_select 0, %s10, %s8
  loop: start=0, step=1, limit=4
  $region2: #{aegan_resnet_decoder_forward.16} parent=0 // loop_pre_header
    _
  $region3: #{aegan_resnet_decoder_forward.16} parent=0 // loop_header
    %s13 = sphi 0, %s17
    %p14 = scmp.ge.s32.totalorder %s13, 4
    %s23 = sphi 0, %s25
    %s26 = sphi 0, %s23
    %s27 = sphi 0, %s26
    %s43 = sphi 0, %s27
    %s47 = sphi 0, %s47
    %s49 = sphi 0, %s47
    %s50 = sphi 0, %s49
    %s64 = sphi 0, %s50
    %s68 = sphi 0, %s68
    %s70 = sphi 0, %s68
    %s71 = sphi 0, %s70
    %s85 = sphi 0, %s71
    %s89 = sphi 0, %s89
    %s91 = sphi 0, %s89
    %s92 = sphi 0, %s91
    %s106 = sphi 0, %s92
    %s112 = sphi 0, %s114
    %s115 = sphi 0, %s112
    %s116 = sphi 0, %s115
    %s132 = sphi 0, %s116
    %s138 = sphi 0, %s140
    %s141 = sphi 0, %s138
    %s142 = sphi 0, %s141
    %s158 = sphi 0, %s142
    %s164 = sphi 0, %s166
    %s167 = sphi 0, %s164
    %s168 = sphi 0, %s167
    %s184 = sphi 0, %s168
  $region4: #{aegan_resnet_decoder_forward.16} parent=0 // loop_header_branch
    %16 = sbr.rel (%p14) target = $region8
  $region5: #{aegan_resnet_decoder_forward.16} parent=0 // loop_body
    %s18 = ssub.s32 %s13, 1
    %s19 = ssub.s32 %s13, 2
    %s20 = sadd.s32 %s13, 1
    %s21 = ssub.s32 %s13, %s20
    %p22 = scmp.eq.s32.totalorder %s21, 0
    %s24 = sadd.s32 %s23, 1
    %s25 = scalar_select %p22, %s23, %s24
    %p28 = pneg %p22
    %p29 = scmp.eq.s32.totalorder %s13, 1
    %p30 = por %p28, %p29
    %p31 = scmp.ne.s32.totalorder %s23, %s26
    %p32 = scmp.eq.s32.totalorder %s13, 0
    %p33 = por %p31, %p32
    %p34 = scmp.ne.s32.totalorder %s23, %s26
    %p35 = scmp.eq.s32.totalorder %s18, 1
    %p36 = por %p34, %p35
    %p37 = scmp.ne.s32.totalorder %s26, %s27
    %p38 = scmp.eq.s32.totalorder %s18, 0
    %p39 = por %p37, %p38
    %p40 = scmp.ne.s32.totalorder %s26, %s27
    %p41 = scmp.eq.s32.totalorder %s19, 1
    %p42 = por %p40, %p41
    %p44 = scmp.ne.s32.totalorder %s27, %s43
    %p45 = scmp.eq.s32.totalorder %s19, 0
    %p46 = por %p44, %p45
    %s48 = sadd.s32 %s47, 1
    %p51 = scmp.eq.s32.totalorder %s13, 1
    %p52 = scmp.ne.s32.totalorder %s47, %s49
    %p53 = scmp.eq.s32.totalorder %s13, 0
    %p54 = por %p52, %p53
    %p55 = scmp.ne.s32.totalorder %s47, %s49
    %p56 = scmp.eq.s32.totalorder %s18, 1
    %p57 = por %p55, %p56
    %p58 = scmp.ne.s32.totalorder %s49, %s50
    %p59 = scmp.eq.s32.totalorder %s18, 0
    %p60 = por %p58, %p59
    %p61 = scmp.ne.s32.totalorder %s49, %s50
    %p62 = scmp.eq.s32.totalorder %s19, 1
    %p63 = por %p61, %p62
    %p65 = scmp.ne.s32.totalorder %s50, %s64
    %p66 = scmp.eq.s32.totalorder %s19, 0
    %p67 = por %p65, %p66
    %s69 = sadd.s32 %s68, 1
    %p72 = scmp.eq.s32.totalorder %s13, 1
    %p73 = scmp.ne.s32.totalorder %s68, %s70
    %p74 = scmp.eq.s32.totalorder %s13, 0
    %p75 = por %p73, %p74
    %p76 = scmp.ne.s32.totalorder %s68, %s70
    %p77 = scmp.eq.s32.totalorder %s18, 1
    %p78 = por %p76, %p77
    %p79 = scmp.ne.s32.totalorder %s70, %s71
    %p80 = scmp.eq.s32.totalorder %s18, 0
    %p81 = por %p79, %p80
    %p82 = scmp.ne.s32.totalorder %s70, %s71
    %p83 = scmp.eq.s32.totalorder %s19, 1
    %p84 = por %p82, %p83
    %p86 = scmp.ne.s32.totalorder %s71, %s85
    %p87 = scmp.eq.s32.totalorder %s19, 0
    %p88 = por %p86, %p87
    %s90 = sadd.s32 %s89, 1
    %p93 = scmp.eq.s32.totalorder %s13, 1
    %p94 = scmp.ne.s32.totalorder %s89, %s91
    %p95 = scmp.eq.s32.totalorder %s13, 0
    %p96 = por %p94, %p95
    %p97 = scmp.ne.s32.totalorder %s89, %s91
    %p98 = scmp.eq.s32.totalorder %s18, 1
    %p99 = por %p97, %p98
    %p100 = scmp.ne.s32.totalorder %s91, %s92
    %p101 = scmp.eq.s32.totalorder %s18, 0
    %p102 = por %p100, %p101
    %p103 = scmp.ne.s32.totalorder %s91, %s92
    %p104 = scmp.eq.s32.totalorder %s19, 1
    %p105 = por %p103, %p104
    %p107 = scmp.ne.s32.totalorder %s92, %s106
    %p108 = scmp.eq.s32.totalorder %s19, 0
    %p109 = por %p107, %p108
    %s110 = ssub.s32 %s13, %s20
    %p111 = scmp.eq.s32.totalorder %s110, 0
    %s113 = sadd.s32 %s112, 1
    %s114 = scalar_select %p111, %s112, %s113
    %p117 = pneg %p111
    %p118 = scmp.eq.s32.totalorder %s13, 1
    %p119 = por %p117, %p118
    %p120 = scmp.ne.s32.totalorder %s112, %s115
    %p121 = scmp.eq.s32.totalorder %s13, 0
    %p122 = por %p120, %p121
    %p123 = scmp.ne.s32.totalorder %s112, %s115
    %p124 = scmp.eq.s32.totalorder %s18, 1
    %p125 = por %p123, %p124
    %p126 = scmp.ne.s32.totalorder %s115, %s116
    %p127 = scmp.eq.s32.totalorder %s18, 0
    %p128 = por %p126, %p127
    %p129 = scmp.ne.s32.totalorder %s115, %s116
    %p130 = scmp.eq.s32.totalorder %s19, 1
    %p131 = por %p129, %p130
    %p133 = scmp.ne.s32.totalorder %s116, %s132
    %p134 = scmp.eq.s32.totalorder %s19, 0
    %p135 = por %p133, %p134
    %s136 = ssub.s32 %s13, %s20
    %p137 = scmp.eq.s32.totalorder %s136, 0
    %s139 = sadd.s32 %s138, 1
    %s140 = scalar_select %p137, %s138, %s139
    %p143 = pneg %p137
    %p144 = scmp.eq.s32.totalorder %s13, 1
    %p145 = por %p143, %p144
    %p146 = scmp.ne.s32.totalorder %s138, %s141
    %p147 = scmp.eq.s32.totalorder %s13, 0
    %p148 = por %p146, %p147
    %p149 = scmp.ne.s32.totalorder %s138, %s141
    %p150 = scmp.eq.s32.totalorder %s18, 1
    %p151 = por %p149, %p150
    %p152 = scmp.ne.s32.totalorder %s141, %s142
    %p153 = scmp.eq.s32.totalorder %s18, 0
    %p154 = por %p152, %p153
    %p155 = scmp.ne.s32.totalorder %s141, %s142
    %p156 = scmp.eq.s32.totalorder %s19, 1
    %p157 = por %p155, %p156
    %p159 = scmp.ne.s32.totalorder %s142, %s158
    %p160 = scmp.eq.s32.totalorder %s19, 0
    %p161 = por %p159, %p160
    %s162 = ssub.s32 %s13, %s20
    %p163 = scmp.eq.s32.totalorder %s162, 0
    %s165 = sadd.s32 %s164, 1
    %s166 = scalar_select %p163, %s164, %s165
    %p169 = pneg %p163
    %p170 = scmp.eq.s32.totalorder %s13, 1
    %p171 = por %p169, %p170
    %p172 = scmp.ne.s32.totalorder %s164, %s167
    %p173 = scmp.eq.s32.totalorder %s13, 0
    %p174 = por %p172, %p173
    %p175 = scmp.ne.s32.totalorder %s164, %s167
    %p176 = scmp.eq.s32.totalorder %s18, 1
    %p177 = por %p175, %p176
    %p178 = scmp.ne.s32.totalorder %s167, %s168
    %p179 = scmp.eq.s32.totalorder %s18, 0
    %p180 = por %p178, %p179
    %p181 = scmp.ne.s32.totalorder %s167, %s168
    %p182 = scmp.eq.s32.totalorder %s19, 1
    %p183 = por %p181, %p182
    %p185 = scmp.ne.s32.totalorder %s168, %s184
    %p186 = scmp.eq.s32.totalorder %s19, 0
    %p187 = por %p185, %p186
    %p188 = scmp.le.s32.totalorder 1, %s13
    %p189 = scmp.lt.s32.totalorder %s13, 3
    %p190 = pnand %p188, %p189
    %p191 = pneg %p190
    // Predicated region
    $region9: #{aegan_resnet_decoder_forward.16} parent=5 // pred_check
      _
    $region10: #{aegan_resnet_decoder_forward.16} parent=5 // pred_check_branch
      %193 = sbr.rel (%p190) target = $region12
    $region11: #{aegan_resnet_decoder_forward.16} parent=5 // pred_region
      %s194 = ssub.s32 %s13, 1
      // Predicated region
      $region13: #{aegan_resnet_decoder_forward.16} parent=11 // pred_check
        %p195 = pneg %p60
      $region14: #{aegan_resnet_decoder_forward.16} parent=11 // pred_check_branch
        %197 = sbr.rel (%p195) target = $region16
      $region15: #{aegan_resnet_decoder_forward.16} parent=11 // pred_region
        _
      $region16: #{aegan_resnet_decoder_forward.16} parent=11 // pred_fallthru
        _
      // Predicated region
      $region17: #{aegan_resnet_decoder_forward.16} parent=11 // pred_check
        %p198 = pneg %p81
      $region18: #{aegan_resnet_decoder_forward.16} parent=11 // pred_check_branch
        %200 = sbr.rel (%p198) target = $region20
      $region19: #{aegan_resnet_decoder_forward.16} parent=11 // pred_region
        _
      $region20: #{aegan_resnet_decoder_forward.16} parent=11 // pred_fallthru
        _
      // Predicated region
      $region21: #{aegan_resnet_decoder_forward.16} parent=11 // pred_check
        %p201 = pneg %p102
      $region22: #{aegan_resnet_decoder_forward.16} parent=11 // pred_check_branch
        %203 = sbr.rel (%p201) target = $region24
      $region23: #{aegan_resnet_decoder_forward.16} parent=11 // pred_region
        _
      $region24: #{aegan_resnet_decoder_forward.16} parent=11 // pred_fallthru
        _
    $region12: #{aegan_resnet_decoder_forward.16} parent=5 // pred_fallthru
      _
    %p204 = scmp.lt.s32.totalorder %s13, 2
    // Predicated region
    $region25: #{aegan_resnet_decoder_forward.16} parent=5 // pred_check
      %p205 = pneg %p204
    $region26: #{aegan_resnet_decoder_forward.16} parent=5 // pred_check_branch
      %207 = sbr.rel (%p205) target = $region28
    $region27: #{aegan_resnet_decoder_forward.16} parent=5 // pred_region
      // Predicated region
      $region29: #{aegan_resnet_decoder_forward.16} parent=27 // pred_check
        %p208 = pneg %p33
      $region30: #{aegan_resnet_decoder_forward.16} parent=27 // pred_check_branch
        %210 = sbr.rel (%p208) target = $region32
      $region31: #{aegan_resnet_decoder_forward.16} parent=27 // pred_region
        %s211 = smul.u32 8, %s13
        %p212 = scmp.lt.s32.totalorder %s211, 15
        %s213 = scalar_select %p212, %s211, 15
        %s214 = smul.addr %s213, 2
        %s215 = smul.addr %s214, 4
        %s216 = scalar_lea.vmem %s0, %s215
        %s217 = smul.u32 8, %s13
      $region32: #{aegan_resnet_decoder_forward.16} parent=27 // pred_fallthru
        _
    $region28: #{aegan_resnet_decoder_forward.16} parent=5 // pred_fallthru
      _
    %p218 = scmp.le.s32.totalorder 1, %s13
    %p219 = scmp.lt.s32.totalorder %s13, 3
    %p220 = pnand %p218, %p219
    %p221 = pneg %p220
    // Predicated region
    $region33: #{aegan_resnet_decoder_forward.16} parent=5 // pred_check
      _
    $region34: #{aegan_resnet_decoder_forward.16} parent=5 // pred_check_branch
      %223 = sbr.rel (%p220) target = $region36
    $region35: #{aegan_resnet_decoder_forward.16} parent=5 // pred_region
      %s224 = ssub.s32 %s13, 1
      %s225 = smul.u32 8, %s18
      %p226 = scmp.lt.s32.totalorder %s225, 15
      %s227 = scalar_select %p226, %s225, 15
      %s228 = smul.addr %s227, 2
      %s229 = smul.addr %s228, 4
      %s230 = scalar_lea.vmem %s0, %s229
      %p231 = pneg %p39
      %p232 = pneg %p36
      %p233 = pneg %p60
      %p234 = pneg %p57
      %p235 = pneg %p81
      %p236 = pneg %p78
      %p237 = pneg %p102
      %p238 = pneg %p99
      %p239 = pneg %p128
      %p240 = pneg %p125
      %s241 = smul.u32 8, %s18
      %p242 = scmp.lt.s32.totalorder %s241, 15
      %s243 = scalar_select %p242, %s241, 15
      %s244 = smul.addr %s243, 8
      %s245 = scalar_lea.vmem %s4, %s244
      %p246 = pneg %p154
      %p247 = pneg %p151
      %p248 = scmp.lt.s32.totalorder %s18, 1
      %s249 = scalar_select %p248, %s18, 1
      %s250 = scalar_lea.vmem %s5, %s249
      %p251 = pneg %p180
      %p252 = pneg %p177
      %p253 = scmp.lt.s32.totalorder %s18, 1
      %s254 = scalar_select %p253, %s18, 1
      %s255 = scalar_lea.vmem %s6, %s254
      %s256 = smul.u32 8, %s18
      %p257 = scmp.lt.s32.totalorder %s256, 15
      %s258 = scalar_select %p257, %s256, 15
      %s259 = smul.addr %s258, 2
      %s260 = smul.addr %s259, 4
      %s261 = scalar_lea.vmem %s0, %s260
      %s262 = smul.u32 8, %s18
      %s263 = smul.u32 8, %s18
      %p264 = scmp.lt.s32.totalorder %s263, 15
      %s265 = scalar_select %p264, %s263, 15
      %s266 = smul.addr %s265, 8
      %s267 = scalar_lea.vmem %s4, %s266
      %s268 = smul.u32 8, %s18
      %p269 = scmp.lt.s32.totalorder %s18, 1
      %s270 = scalar_select %p269, %s18, 1
      %s271 = scalar_lea.vmem %s5, %s270
      %p272 = scmp.lt.s32.totalorder %s18, 1
      %s273 = scalar_select %p272, %s18, 1
      %s274 = scalar_lea.vmem %s6, %s273
      %v276 = vld [vmem:[%s261] sm:$0xff]
      %v277 = vld [vmem:[%s261 + $0x8] sm:$0xff]
      %v278 = vld [vmem:[%s261 + $0x10] sm:$0xff]
      %v279 = vld [vmem:[%s261 + $0x18] sm:$0xff]
      %v280 = vld [vmem:[%s261 + $0x20] sm:$0xff]
      %v281 = vld [vmem:[%s261 + $0x28] sm:$0xff]
      %v282 = vld [vmem:[%s261 + $0x30] sm:$0xff]
      %v283 = vld [vmem:[%s261 + $0x38] sm:$0xff]
      %v284 = vunpack.c.l.bf16 %v276
      %v285 = vunpack.c.h.bf16 %v276
      %v286 = vunpack.c.l.bf16 %v277
      %v287 = vunpack.c.h.bf16 %v277
      %v288 = vunpack.c.l.bf16 %v278
      %v289 = vunpack.c.h.bf16 %v278
      %v290 = vunpack.c.l.bf16 %v279
      %v291 = vunpack.c.h.bf16 %v279
      %v292 = vunpack.c.l.bf16 %v280
      %v293 = vunpack.c.h.bf16 %v280
      %v294 = vunpack.c.l.bf16 %v281
      %v295 = vunpack.c.h.bf16 %v281
      %v296 = vunpack.c.l.bf16 %v282
      %v297 = vunpack.c.h.bf16 %v282
      %v298 = vunpack.c.l.bf16 %v283
      %v299 = vunpack.c.h.bf16 %v283
      %v300 = vld [vmem:[%s2] sm:$0x3]
      %v302 = vlaneseq
      %v303 = vshrl.u32 %v302, 7
      %v304 = vsub.s32 0, %v303
      %v305 = vrot.slane %v300, %v304
      %v306 = vlaneseq
      %v307 = vshrl.u32 %v306, 7
      %v308 = vsub.s32 1, %v307
      %v309 = vrot.slane %v300, %v308
      %v312 = vmul.f32 %v284, %v305
      %v313 = vmul.f32 %v285, %v309
      %v314 = vmul.f32 %v286, %v305
      %v315 = vmul.f32 %v287, %v309
      %v316 = vmul.f32 %v288, %v305
      %v317 = vmul.f32 %v289, %v309
      %v318 = vmul.f32 %v290, %v305
      %v319 = vmul.f32 %v291, %v309
      %v320 = vmul.f32 %v292, %v305
      %v321 = vmul.f32 %v293, %v309
      %v322 = vmul.f32 %v294, %v305
      %v323 = vmul.f32 %v295, %v309
      %v324 = vmul.f32 %v296, %v305
      %v325 = vmul.f32 %v297, %v309
      %v326 = vmul.f32 %v298, %v305
      %v327 = vmul.f32 %v299, %v309
      %v328 = vld [vmem:[%s3] sm:$0x3]
      %v330 = vlaneseq
      %v331 = vshrl.u32 %v330, 7
      %v332 = vsub.s32 0, %v331
      %v333 = vrot.slane %v328, %v332
      %v334 = vlaneseq
      %v335 = vshrl.u32 %v334, 7
      %v336 = vsub.s32 1, %v335
      %v337 = vrot.slane %v328, %v336
      %v340 = vadd.f32 %v312, %v333
      %v341 = vadd.f32 %v313, %v337
      %v342 = vadd.f32 %v314, %v333
      %v343 = vadd.f32 %v315, %v337
      %v344 = vadd.f32 %v316, %v333
      %v345 = vadd.f32 %v317, %v337
      %v346 = vadd.f32 %v318, %v333
      %v347 = vadd.f32 %v319, %v337
      %v348 = vadd.f32 %v320, %v333
      %v349 = vadd.f32 %v321, %v337
      %v350 = vadd.f32 %v322, %v333
      %v351 = vadd.f32 %v323, %v337
      %v352 = vadd.f32 %v324, %v333
      %v353 = vadd.f32 %v325, %v337
      %v354 = vadd.f32 %v326, %v333
      %v355 = vadd.f32 %v327, %v337
      %v356 = vmax.f32 %v340, 0.0
      %v357 = vmax.f32 %v341, 0.0
      %v358 = vmax.f32 %v342, 0.0
      %v359 = vmax.f32 %v343, 0.0
      %v360 = vmax.f32 %v344, 0.0
      %v361 = vmax.f32 %v345, 0.0
      %v362 = vmax.f32 %v346, 0.0
      %v363 = vmax.f32 %v347, 0.0
      %v364 = vmax.f32 %v348, 0.0
      %v365 = vmax.f32 %v349, 0.0
      %v366 = vmax.f32 %v350, 0.0
      %v367 = vmax.f32 %v351, 0.0
      %v368 = vmax.f32 %v352, 0.0
      %v369 = vmax.f32 %v353, 0.0
      %v370 = vmax.f32 %v354, 0.0
      %v371 = vmax.f32 %v355, 0.0
      %v372 = vpack.c.bf16 %v358, %v356
      %v373 = vpack.c.bf16 %v359, %v357
      %v374 = vpack.c.bf16 %v362, %v360
      %v375 = vpack.c.bf16 %v363, %v361
      %v376 = vpack.c.bf16 %v366, %v364
      %v377 = vpack.c.bf16 %v367, %v365
      %v378 = vpack.c.bf16 %v370, %v368
      %v379 = vpack.c.bf16 %v371, %v369
      %v380 = vld [vmem:[%s1] sm:$0xf]
      %v381 = vld [vmem:[%s1 + $0x4] sm:$0xf]
      %v382 = vld [vmem:[%s1 + $0x8] sm:$0xf]
      %v383 = vld [vmem:[%s1 + $0xc] sm:$0xf]
      %v384 = vld [vmem:[%s1 + $0x10] sm:$0xf]
      %v385 = vld [vmem:[%s1 + $0x14] sm:$0xf]
      %v386 = vld [vmem:[%s1 + $0x18] sm:$0xf]
      %v387 = vld [vmem:[%s1 + $0x1c] sm:$0xf]
      %v388 = vld [vmem:[%s1 + $0x20] sm:$0xf]
      %v389 = vld [vmem:[%s1 + $0x24] sm:$0xf]
      %v390 = vld [vmem:[%s1 + $0x28] sm:$0xf]
      %v391 = vld [vmem:[%s1 + $0x2c] sm:$0xf]
      %v392 = vld [vmem:[%s1 + $0x30] sm:$0xf]
      %v393 = vld [vmem:[%s1 + $0x34] sm:$0xf]
      %v394 = vld [vmem:[%s1 + $0x38] sm:$0xf]
      %v395 = vld [vmem:[%s1 + $0x3c] sm:$0xf]
      %v396 = vld [vmem:[%s1 + $0x40] sm:$0xf]
      %v397 = vld [vmem:[%s1 + $0x44] sm:$0xf]
      %v416 = vunpack.c.l.b16 %v380
      %v417 = vunpack.c.l.b16 %v381
      %v418 = vunpack.c.l.b16 %v382
      %v419 = vunpack.c.l.b16 %v383
      %v420 = vunpack.c.l.b16 %v384
      %v421 = vunpack.c.l.b16 %v385
      %v422 = vunpack.c.l.b16 %v386
      %v423 = vunpack.c.l.b16 %v387
      %v424 = vunpack.c.l.b16 %v388
      %v425 = vunpack.c.l.b16 %v389
      %v426 = vunpack.c.l.b16 %v390
      %v427 = vunpack.c.l.b16 %v391
      %v428 = vunpack.c.l.b16 %v392
      %v429 = vunpack.c.l.b16 %v393
      %v430 = vunpack.c.l.b16 %v394
      %v431 = vunpack.c.l.b16 %v395
      %v432 = vunpack.c.l.b16 %v396
      %v433 = vunpack.c.l.b16 %v397
      %v434 = vpack.c.b16 %v417, %v416
      %v435 = vpack.c.b16 %v419, %v418
      %v436 = vpack.c.b16 %v421, %v420
      %v437 = vpack.c.b16 %v423, %v422
      %v438 = vpack.c.b16 %v425, %v424
      %v439 = vpack.c.b16 %v427, %v426
      %v440 = vpack.c.b16 %v429, %v428
      %v441 = vpack.c.b16 %v431, %v430
      %v442 = vpack.c.b16 %v433, %v432
      %vm452 = vcmask 130048
      %v454 = vsel %vm452, %v373, 0
      %v457 = vsel %vm452, %v375, 0
      %v460 = vsel %vm452, %v377, 0
      %v463 = vsel %vm452, %v379, 0
      %465 = vmatprep.subr.bf16.mxu0 0
      %466 = vmatpush1.bf16.msra.mxu0 %v434
      %467 = vmatprep.subr.bf16.mxu0 0
      %468 = vmatpush1.bf16.msra.mxu0 %v435
      %469 = vmatprep.subr.bf16.mxu0 0
      %470 = vmatpush1.bf16.msra.mxu0 %v436
      %471 = vmatprep.subr.bf16.mxu0 0
      %472 = vmatpush1.bf16.msra.mxu0 %v437
      %473 = vmatprep.subr.bf16.mxu0 0
      %474 = vmatpush1.bf16.msra.mxu0 %v438
      %475 = vmatprep.subr.bf16.mxu0 0
      %476 = vmatpush1.bf16.msra.mxu0 %v439
      %477 = vmatprep.subr.bf16.mxu0 0
      %478 = vmatpush1.bf16.msra.mxu0 %v440
      %479 = vmatprep.subr.bf16.mxu0 0
      %480 = vmatpush1.bf16.msra.mxu0 %v441
      %481 = vmatprep.subr.bf16.mxu0 0
      %482 = vmatpush1.bf16.msra.mxu0 %v442
      %483 = vmatprep.subr.bf16.mxu0 0
      %484 = vmatpush1.bf16.msra.mxu0 0
      %485 = vmatprep.subr.bf16.mxu0 0
      %486 = vmatpush1.bf16.msra.mxu0 0
      %487 = vmatprep.subr.bf16.mxu0 0
      %488 = vmatpush1.bf16.msra.mxu0 0
      %489 = vmatprep.subr.bf16.mxu0 0
      %490 = vmatpush1.bf16.msra.mxu0 0
      %491 = vmatprep.subr.bf16.mxu0 0
      %492 = vmatpush1.bf16.msra.mxu0 0
      %493 = vmatprep.subr.bf16.mxu0 0
      %494 = vmatpush1.bf16.msra.mxu0 0
      %495 = vmatprep.subr.bf16.mxu0 0
      %496 = vmatpush1.bf16.msra.mxu0 0
      %497 = vmatprep.mubr.bf16.mxu0 %v454
      %498 = vmatmul.mubr.bf16.gmra.mrb[0].mxu0 %v372
      %v499 = vpop.f32.mrb[0].mxu0
      %v500 = vadd.f32 0.0, %v499
      %v501 = vpop.f32.mrb[0].mxu0
      %v502 = vpop.f32.mrb[0].mxu0
      %v503 = vadd.f32 0.0, %v502
      %v504 = vpop.f32.mrb[0].mxu0
      %505 = vmatprep.mubr.bf16.mxu0 %v457
      %506 = vmatmul.mubr.bf16.gmra.mrb[0].mxu0 %v374
      %v507 = vpop.f32.mrb[0].mxu0
      %v508 = vadd.f32 0.0, %v507
      %v509 = vpop.f32.mrb[0].mxu0
      %v510 = vpop.f32.mrb[0].mxu0
      %v511 = vadd.f32 0.0, %v510
      %v512 = vpop.f32.mrb[0].mxu0
      %513 = vmatprep.mubr.bf16.mxu0 %v460
      %514 = vmatmul.mubr.bf16.gmra.mrb[0].mxu0 %v376
      %v515 = vpop.f32.mrb[0].mxu0
      %v516 = vadd.f32 0.0, %v515
      %v517 = vpop.f32.mrb[0].mxu0
      %v518 = vpop.f32.mrb[0].mxu0
      %v519 = vadd.f32 0.0, %v518
      %v520 = vpop.f32.mrb[0].mxu0
      %521 = vmatprep.mubr.bf16.mxu0 %v463
      %522 = vmatmul.mubr.bf16.gmra.mrb[0].mxu0 %v378
      %v523 = vpop.f32.mrb[0].mxu0
      %v524 = vadd.f32 0.0, %v523
      %v525 = vpop.f32.mrb[0].mxu0
      %v526 = vpop.f32.mrb[0].mxu0
      %v527 = vadd.f32 0.0, %v526
      %v528 = vpop.f32.mrb[0].mxu0
      %529 = vdwg.mxu0
      %530 = vst.msk [vmem:[%s267] sm:$0xff] %vm452, %v500
      %531 = vst.msk [vmem:[%s267 + $0x8] sm:$0xff] %vm452, %v503
      %532 = vst.msk [vmem:[%s267 + $0x10] sm:$0xff] %vm452, %v508
      %533 = vst.msk [vmem:[%s267 + $0x18] sm:$0xff] %vm452, %v511
      %534 = vst.msk [vmem:[%s267 + $0x20] sm:$0xff] %vm452, %v516
      %535 = vst.msk [vmem:[%s267 + $0x28] sm:$0xff] %vm452, %v519
      %536 = vst.msk [vmem:[%s267 + $0x30] sm:$0xff] %vm452, %v524
      %537 = vst.msk [vmem:[%s267 + $0x38] sm:$0xff] %vm452, %v527
      %s538 = smul.u32 %s18, 64
      %v539 = vlaneseq
      %v540 = vshrl.u32 %v539, 7
      %v541 = vadd.s32 %v540, 8
      %v542 = vadd.s32 %v540, 16
      %v543 = vadd.s32 %v540, 24
      %v544 = vadd.s32 %v540, 32
      %v545 = vadd.s32 %v540, 40
      %v546 = vadd.s32 %v540, 48
      %v547 = vadd.s32 %v540, 56
      %v548 = vstv %s538
      %v549 = vadd.s32 %v548, %v540
      %v550 = vadd.s32 %v548, %v541
      %v551 = vadd.s32 %v548, %v542
      %v552 = vadd.s32 %v548, %v543
      %v553 = vadd.s32 %v548, %v544
      %v554 = vadd.s32 %v548, %v545
      %v555 = vadd.s32 %v548, %v546
      %v556 = vadd.s32 %v548, %v547
      %vm557 = vcmp.lt.s32.totalorder %v549, 128
      %vm558 = vcmp.lt.s32.totalorder %v550, 128
      %vm559 = vcmp.lt.s32.totalorder %v551, 128
      %vm560 = vcmp.lt.s32.totalorder %v552, 128
      %vm561 = vcmp.lt.s32.totalorder %v553, 128
      %vm562 = vcmp.lt.s32.totalorder %v554, 128
      %vm563 = vcmp.lt.s32.totalorder %v555, 128
      %vm564 = vcmp.lt.s32.totalorder %v556, 128
      %v565 = vsel %vm557, 1, 0
      %v566 = vsel %vm558, 1, 0
      %v567 = vsel %vm559, 1, 0
      %v568 = vsel %vm560, 1, 0
      %v569 = vsel %vm561, 1, 0
      %v570 = vsel %vm562, 1, 0
      %v571 = vsel %vm563, 1, 0
      %v572 = vsel %vm564, 1, 0
      %vm573 = vcmp.eq.s32.totalorder %v565, 1
      %vm574 = vcmp.eq.s32.totalorder %v566, 1
      %vm575 = vcmp.eq.s32.totalorder %v567, 1
      %vm576 = vcmp.eq.s32.totalorder %v568, 1
      %vm577 = vcmp.eq.s32.totalorder %v569, 1
      %vm578 = vcmp.eq.s32.totalorder %v570, 1
      %vm579 = vcmp.eq.s32.totalorder %v571, 1
      %vm580 = vcmp.eq.s32.totalorder %v572, 1
      %v581 = vsel %vm573, %v500, 0.0
      %v582 = vsel %vm574, %v503, 0.0
      %v583 = vsel %vm575, %v508, 0.0
      %v584 = vsel %vm576, %v511, 0.0
      %v585 = vsel %vm577, %v516, 0.0
      %v586 = vsel %vm578, %v519, 0.0
      %v587 = vsel %vm579, %v524, 0.0
      %v588 = vsel %vm580, %v527, 0.0
      %v589 = vsel %vm452, %v581, 0.0
      %v590 = vsel %vm452, %v582, 0.0
      %v591 = vadd.f32 %v589, %v590
      %v592 = vsel %vm452, %v583, 0.0
      %v593 = vadd.f32 %v591, %v592
      %v594 = vsel %vm452, %v584, 0.0
      %v595 = vadd.f32 %v593, %v594
      %v596 = vsel %vm452, %v585, 0.0
      %v597 = vadd.f32 %v595, %v596
      %v598 = vsel %vm452, %v586, 0.0
      %v599 = vadd.f32 %v597, %v598
      %v600 = vsel %vm452, %v587, 0.0
      %v601 = vadd.f32 %v599, %v600
      %v602 = vsel %vm452, %v588, 0.0
      %v603 = vadd.f32 %v601, %v602
      %v604 = vrot.slane %v603, 4
      %v605 = vadd.f32 %v603, %v604
      %v606 = vrot.slane %v605, 2
      %v607 = vadd.f32 %v605, %v606
      %v608 = vrot.slane %v607, 1
      %v609 = vadd.f32 %v607, %v608
      %vm610 = vcmask 122880
      %611 = vst.msk [vmem:[%s271] sm:$0x1] %vm610, %v609
      %v612 = vmul.f32 %v581, %v581
      %v613 = vmul.f32 %v582, %v582
      %v614 = vmul.f32 %v583, %v583
      %v615 = vmul.f32 %v584, %v584
      %v616 = vmul.f32 %v585, %v585
      %v617 = vmul.f32 %v586, %v586
      %v618 = vmul.f32 %v587, %v587
      %v619 = vmul.f32 %v588, %v588
      %v620 = vsel %vm452, %v612, 0.0
      %v621 = vsel %vm452, %v613, 0.0
      %v622 = vadd.f32 %v620, %v621
      %v623 = vsel %vm452, %v614, 0.0
      %v624 = vadd.f32 %v622, %v623
      %v625 = vsel %vm452, %v615, 0.0
      %v626 = vadd.f32 %v624, %v625
      %v627 = vsel %vm452, %v616, 0.0
      %v628 = vadd.f32 %v626, %v627
      %v629 = vsel %vm452, %v617, 0.0
      %v630 = vadd.f32 %v628, %v629
      %v631 = vsel %vm452, %v618, 0.0
      %v632 = vadd.f32 %v630, %v631
      %v633 = vsel %vm452, %v619, 0.0
      %v634 = vadd.f32 %v632, %v633
      %v635 = vrot.slane %v634, 4
      %v636 = vadd.f32 %v634, %v635
      %v637 = vrot.slane %v636, 2
      %v638 = vadd.f32 %v636, %v637
      %v639 = vrot.slane %v638, 1
      %v640 = vadd.f32 %v638, %v639
      %641 = vst.msk [vmem:[%s274] sm:$0x1] %vm610, %v640
      %s642 = smul.u32 8, %s18
      %p643 = scmp.lt.s32.totalorder %s642, 15
      %s644 = scalar_select %p643, %s642, 15
      %s645 = smul.addr %s644, 8
      %s646 = scalar_lea.vmem %s4, %s645
      %p647 = scmp.lt.s32.totalorder %s18, 1
      %s648 = scalar_select %p647, %s18, 1
      %s649 = scalar_lea.vmem %s5, %s648
      %p650 = scmp.lt.s32.totalorder %s18, 1
      %s651 = scalar_select %p650, %s18, 1
      %s652 = scalar_lea.vmem %s6, %s651
      // Predicated region
      $region37: #{aegan_resnet_decoder_forward.16} parent=35 // pred_check
        %p653 = pneg %p125
      $region38: #{aegan_resnet_decoder_forward.16} parent=35 // pred_check_branch
        %655 = sbr.rel (%p653) target = $region40
      $region39: #{aegan_resnet_decoder_forward.16} parent=35 // pred_region
        %s656 = smul.u32 8, %s18
      $region40: #{aegan_resnet_decoder_forward.16} parent=35 // pred_fallthru
        _
      // Predicated region
      $region41: #{aegan_resnet_decoder_forward.16} parent=35 // pred_check
        %p657 = pneg %p151
      $region42: #{aegan_resnet_decoder_forward.16} parent=35 // pred_check_branch
        %659 = sbr.rel (%p657) target = $region44
      $region43: #{aegan_resnet_decoder_forward.16} parent=35 // pred_region
        _
      $region44: #{aegan_resnet_decoder_forward.16} parent=35 // pred_fallthru
        _
      // Predicated region
      $region45: #{aegan_resnet_decoder_forward.16} parent=35 // pred_check
        %p660 = pneg %p177
      $region46: #{aegan_resnet_decoder_forward.16} parent=35 // pred_check_branch
        %662 = sbr.rel (%p660) target = $region48
      $region47: #{aegan_resnet_decoder_forward.16} parent=35 // pred_region
        _
      $region48: #{aegan_resnet_decoder_forward.16} parent=35 // pred_fallthru
        _
    $region36: #{aegan_resnet_decoder_forward.16} parent=5 // pred_fallthru
      _
    %p663 = scmp.le.s32.totalorder 2, %s13
    // Predicated region
    $region49: #{aegan_resnet_decoder_forward.16} parent=5 // pred_check
      %p664 = pneg %p663
    $region50: #{aegan_resnet_decoder_forward.16} parent=5 // pred_check_branch
      %666 = sbr.rel (%p664) target = $region52
    $region51: #{aegan_resnet_decoder_forward.16} parent=5 // pred_region
      %s667 = ssub.s32 %s13, 2
      // Predicated region
      $region53: #{aegan_resnet_decoder_forward.16} parent=51 // pred_check
        %p668 = pneg %p131
      $region54: #{aegan_resnet_decoder_forward.16} parent=51 // pred_check_branch
        %670 = sbr.rel (%p668) target = $region56
      $region55: #{aegan_resnet_decoder_forward.16} parent=51 // pred_region
        %s671 = smul.u32 8, %s19
        %p672 = scmp.lt.s32.totalorder %s671, 15
        %s673 = scalar_select %p672, %s671, 15
        %s674 = smul.addr %s673, 8
        %s675 = scalar_lea.vmem %s4, %s674
      $region56: #{aegan_resnet_decoder_forward.16} parent=51 // pred_fallthru
        _
      // Predicated region
      $region57: #{aegan_resnet_decoder_forward.16} parent=51 // pred_check
        %p676 = pneg %p157
      $region58: #{aegan_resnet_decoder_forward.16} parent=51 // pred_check_branch
        %678 = sbr.rel (%p676) target = $region60
      $region59: #{aegan_resnet_decoder_forward.16} parent=51 // pred_region
        %p679 = scmp.lt.s32.totalorder %s19, 1
        %s680 = scalar_select %p679, %s19, 1
        %s681 = scalar_lea.vmem %s5, %s680
      $region60: #{aegan_resnet_decoder_forward.16} parent=51 // pred_fallthru
        _
      // Predicated region
      $region61: #{aegan_resnet_decoder_forward.16} parent=51 // pred_check
        %p682 = pneg %p183
      $region62: #{aegan_resnet_decoder_forward.16} parent=51 // pred_check_branch
        %684 = sbr.rel (%p682) target = $region64
      $region63: #{aegan_resnet_decoder_forward.16} parent=51 // pred_region
        %p685 = scmp.lt.s32.totalorder %s19, 1
        %s686 = scalar_select %p685, %s19, 1
        %s687 = scalar_lea.vmem %s6, %s686
      $region64: #{aegan_resnet_decoder_forward.16} parent=51 // pred_fallthru
        _
    $region52: #{aegan_resnet_decoder_forward.16} parent=5 // pred_fallthru
      _
  $region6: #{aegan_resnet_decoder_forward.16} parent=0 // loop_footer
    %s17 = sadd.s32 1, %s13
  $region7: #{aegan_resnet_decoder_forward.16} parent=0 // loop_footer_branch
    %12 = sbr.rel target = $region3
  $region8: #{aegan_resnet_decoder_forward.16} parent=0 // loop_exit
    _

// kernel: aegan_resnet_decoder_forward.19
$region0: #{aegan_resnet_decoder_forward.19}
  #allocation0 [shape = 'u32[]', space=smem, size = 0x4, offset = 0x4, fixed_abs, tag = 'smem constant byte address 0x4 - core index']
  #allocation1 [shape = 'u32[144,128]{1,0:T(1,128)}', space=vmem, size = 0x12000, scoped, tag = 'internal scratch']
  %s0 = inlined_call_operand.vmem [shape: bf16[128,64], index: 0, kind: input, shape index: {}]
  %s1 = inlined_call_operand.vmem [shape: bf16[64,32], index: 1, kind: input, shape index: {}]
  %s2 = inlined_call_operand.vmem [shape: f32[128,32], index: 2, kind: output, shape index: {0}]
  %s3 = inlined_call_operand.vmem [shape: f32[2,1,32], index: 3, kind: output, shape index: {1}]
  %s4 = inlined_call_operand.vmem [shape: f32[2,1,32], index: 4, kind: output, shape index: {2}]
  %5 = xla_tuple %s2, %s3, %s4
  %s6 = sld [smem:[#allocation0]]
  $region57: #{aegan_resnet_decoder_forward.19} parent=0
    _
  %s8 = ssub.s32 1, %s6
  %s9 = scalar_select 0, %s8, %s6
  loop: start=0, step=1, limit=4
  $region2: #{aegan_resnet_decoder_forward.19} parent=0 // loop_pre_header
    _
  $region3: #{aegan_resnet_decoder_forward.19} parent=0 // loop_header
    %s11 = sphi 0, %s15
    %p12 = scmp.ge.s32.totalorder %s11, 4
    %s21 = sphi 0, %s23
    %s24 = sphi 0, %s21
    %s25 = sphi 0, %s24
    %s41 = sphi 0, %s25
    %s45 = sphi 0, %s45
    %s47 = sphi 0, %s45
    %s48 = sphi 0, %s47
    %s62 = sphi 0, %s48
    %s68 = sphi 0, %s70
    %s71 = sphi 0, %s68
    %s72 = sphi 0, %s71
    %s88 = sphi 0, %s72
    %s94 = sphi 0, %s96
    %s97 = sphi 0, %s94
    %s98 = sphi 0, %s97
    %s114 = sphi 0, %s98
    %s120 = sphi 0, %s122
    %s123 = sphi 0, %s120
    %s124 = sphi 0, %s123
    %s140 = sphi 0, %s124
  $region4: #{aegan_resnet_decoder_forward.19} parent=0 // loop_header_branch
    %14 = sbr.rel (%p12) target = $region8
  $region5: #{aegan_resnet_decoder_forward.19} parent=0 // loop_body
    %s16 = ssub.s32 %s11, 1
    %s17 = ssub.s32 %s11, 2
    %s18 = sadd.s32 %s11, 1
    %s19 = ssub.s32 %s11, %s18
    %p20 = scmp.eq.s32.totalorder %s19, 0
    %s22 = sadd.s32 %s21, 1
    %s23 = scalar_select %p20, %s21, %s22
    %p26 = pneg %p20
    %p27 = scmp.eq.s32.totalorder %s11, 1
    %p28 = por %p26, %p27
    %p29 = scmp.ne.s32.totalorder %s21, %s24
    %p30 = scmp.eq.s32.totalorder %s11, 0
    %p31 = por %p29, %p30
    %p32 = scmp.ne.s32.totalorder %s21, %s24
    %p33 = scmp.eq.s32.totalorder %s16, 1
    %p34 = por %p32, %p33
    %p35 = scmp.ne.s32.totalorder %s24, %s25
    %p36 = scmp.eq.s32.totalorder %s16, 0
    %p37 = por %p35, %p36
    %p38 = scmp.ne.s32.totalorder %s24, %s25
    %p39 = scmp.eq.s32.totalorder %s17, 1
    %p40 = por %p38, %p39
    %p42 = scmp.ne.s32.totalorder %s25, %s41
    %p43 = scmp.eq.s32.totalorder %s17, 0
    %p44 = por %p42, %p43
    %s46 = sadd.s32 %s45, 1
    %p49 = scmp.eq.s32.totalorder %s11, 1
    %p50 = scmp.ne.s32.totalorder %s45, %s47
    %p51 = scmp.eq.s32.totalorder %s11, 0
    %p52 = por %p50, %p51
    %p53 = scmp.ne.s32.totalorder %s45, %s47
    %p54 = scmp.eq.s32.totalorder %s16, 1
    %p55 = por %p53, %p54
    %p56 = scmp.ne.s32.totalorder %s47, %s48
    %p57 = scmp.eq.s32.totalorder %s16, 0
    %p58 = por %p56, %p57
    %p59 = scmp.ne.s32.totalorder %s47, %s48
    %p60 = scmp.eq.s32.totalorder %s17, 1
    %p61 = por %p59, %p60
    %p63 = scmp.ne.s32.totalorder %s48, %s62
    %p64 = scmp.eq.s32.totalorder %s17, 0
    %p65 = por %p63, %p64
    %s66 = ssub.s32 %s11, %s18
    %p67 = scmp.eq.s32.totalorder %s66, 0
    %s69 = sadd.s32 %s68, 1
    %s70 = scalar_select %p67, %s68, %s69
    %p73 = pneg %p67
    %p74 = scmp.eq.s32.totalorder %s11, 1
    %p75 = por %p73, %p74
    %p76 = scmp.ne.s32.totalorder %s68, %s71
    %p77 = scmp.eq.s32.totalorder %s11, 0
    %p78 = por %p76, %p77
    %p79 = scmp.ne.s32.totalorder %s68, %s71
    %p80 = scmp.eq.s32.totalorder %s16, 1
    %p81 = por %p79, %p80
    %p82 = scmp.ne.s32.totalorder %s71, %s72
    %p83 = scmp.eq.s32.totalorder %s16, 0
    %p84 = por %p82, %p83
    %p85 = scmp.ne.s32.totalorder %s71, %s72
    %p86 = scmp.eq.s32.totalorder %s17, 1
    %p87 = por %p85, %p86
    %p89 = scmp.ne.s32.totalorder %s72, %s88
    %p90 = scmp.eq.s32.totalorder %s17, 0
    %p91 = por %p89, %p90
    %s92 = ssub.s32 %s11, %s18
    %p93 = scmp.eq.s32.totalorder %s92, 0
    %s95 = sadd.s32 %s94, 1
    %s96 = scalar_select %p93, %s94, %s95
    %p99 = pneg %p93
    %p100 = scmp.eq.s32.totalorder %s11, 1
    %p101 = por %p99, %p100
    %p102 = scmp.ne.s32.totalorder %s94, %s97
    %p103 = scmp.eq.s32.totalorder %s11, 0
    %p104 = por %p102, %p103
    %p105 = scmp.ne.s32.totalorder %s94, %s97
    %p106 = scmp.eq.s32.totalorder %s16, 1
    %p107 = por %p105, %p106
    %p108 = scmp.ne.s32.totalorder %s97, %s98
    %p109 = scmp.eq.s32.totalorder %s16, 0
    %p110 = por %p108, %p109
    %p111 = scmp.ne.s32.totalorder %s97, %s98
    %p112 = scmp.eq.s32.totalorder %s17, 1
    %p113 = por %p111, %p112
    %p115 = scmp.ne.s32.totalorder %s98, %s114
    %p116 = scmp.eq.s32.totalorder %s17, 0
    %p117 = por %p115, %p116
    %s118 = ssub.s32 %s11, %s18
    %p119 = scmp.eq.s32.totalorder %s118, 0
    %s121 = sadd.s32 %s120, 1
    %s122 = scalar_select %p119, %s120, %s121
    %p125 = pneg %p119
    %p126 = scmp.eq.s32.totalorder %s11, 1
    %p127 = por %p125, %p126
    %p128 = scmp.ne.s32.totalorder %s120, %s123
    %p129 = scmp.eq.s32.totalorder %s11, 0
    %p130 = por %p128, %p129
    %p131 = scmp.ne.s32.totalorder %s120, %s123
    %p132 = scmp.eq.s32.totalorder %s16, 1
    %p133 = por %p131, %p132
    %p134 = scmp.ne.s32.totalorder %s123, %s124
    %p135 = scmp.eq.s32.totalorder %s16, 0
    %p136 = por %p134, %p135
    %p137 = scmp.ne.s32.totalorder %s123, %s124
    %p138 = scmp.eq.s32.totalorder %s17, 1
    %p139 = por %p137, %p138
    %p141 = scmp.ne.s32.totalorder %s124, %s140
    %p142 = scmp.eq.s32.totalorder %s17, 0
    %p143 = por %p141, %p142
    %p144 = scmp.le.s32.totalorder 1, %s11
    %p145 = scmp.lt.s32.totalorder %s11, 3
    %p146 = pnand %p144, %p145
    %p147 = pneg %p146
    // Predicated region
    $region9: #{aegan_resnet_decoder_forward.19} parent=5 // pred_check
      _
    $region10: #{aegan_resnet_decoder_forward.19} parent=5 // pred_check_branch
      %149 = sbr.rel (%p146) target = $region12
    $region11: #{aegan_resnet_decoder_forward.19} parent=5 // pred_region
      %s150 = ssub.s32 %s11, 1
      // Predicated region
      $region13: #{aegan_resnet_decoder_forward.19} parent=11 // pred_check
        %p151 = pneg %p58
      $region14: #{aegan_resnet_decoder_forward.19} parent=11 // pred_check_branch
        %153 = sbr.rel (%p151) target = $region16
      $region15: #{aegan_resnet_decoder_forward.19} parent=11 // pred_region
        _
      $region16: #{aegan_resnet_decoder_forward.19} parent=11 // pred_fallthru
        _
    $region12: #{aegan_resnet_decoder_forward.19} parent=5 // pred_fallthru
      _
    %p154 = scmp.lt.s32.totalorder %s11, 2
    // Predicated region
    $region17: #{aegan_resnet_decoder_forward.19} parent=5 // pred_check
      %p155 = pneg %p154
    $region18: #{aegan_resnet_decoder_forward.19} parent=5 // pred_check_branch
      %157 = sbr.rel (%p155) target = $region20
    $region19: #{aegan_resnet_decoder_forward.19} parent=5 // pred_region
      // Predicated region
      $region21: #{aegan_resnet_decoder_forward.19} parent=19 // pred_check
        %p158 = pneg %p31
      $region22: #{aegan_resnet_decoder_forward.19} parent=19 // pred_check_branch
        %160 = sbr.rel (%p158) target = $region24
      $region23: #{aegan_resnet_decoder_forward.19} parent=19 // pred_region
        %s161 = smul.u32 8, %s11
        %p162 = scmp.lt.s32.totalorder %s161, 15
        %s163 = scalar_select %p162, %s161, 15
        %s164 = smul.addr %s163, 4
        %s165 = scalar_lea.vmem %s0, %s164
        %s166 = smul.u32 8, %s11
      $region24: #{aegan_resnet_decoder_forward.19} parent=19 // pred_fallthru
        _
    $region20: #{aegan_resnet_decoder_forward.19} parent=5 // pred_fallthru
      _
    %p167 = scmp.le.s32.totalorder 1, %s11
    %p168 = scmp.lt.s32.totalorder %s11, 3
    %p169 = pnand %p167, %p168
    %p170 = pneg %p169
    // Predicated region
    $region25: #{aegan_resnet_decoder_forward.19} parent=5 // pred_check
      _
    $region26: #{aegan_resnet_decoder_forward.19} parent=5 // pred_check_branch
      %172 = sbr.rel (%p169) target = $region28
    $region27: #{aegan_resnet_decoder_forward.19} parent=5 // pred_region
      %s173 = ssub.s32 %s11, 1
      %s174 = smul.u32 8, %s16
      %p175 = scmp.lt.s32.totalorder %s174, 15
      %s176 = scalar_select %p175, %s174, 15
      %s177 = smul.addr %s176, 4
      %s178 = scalar_lea.vmem %s0, %s177
      %p179 = pneg %p37
      %p180 = pneg %p34
      %p181 = pneg %p58
      %p182 = pneg %p55
      %p183 = pneg %p84
      %p184 = pneg %p81
      %s185 = smul.u32 8, %s16
      %p186 = scmp.lt.s32.totalorder %s185, 15
      %s187 = scalar_select %p186, %s185, 15
      %s188 = smul.addr %s187, 8
      %s189 = scalar_lea.vmem %s2, %s188
      %p190 = pneg %p110
      %p191 = pneg %p107
      %p192 = scmp.lt.s32.totalorder %s16, 1
      %s193 = scalar_select %p192, %s16, 1
      %s194 = scalar_lea.vmem %s3, %s193
      %p195 = pneg %p136
      %p196 = pneg %p133
      %p197 = scmp.lt.s32.totalorder %s16, 1
      %s198 = scalar_select %p197, %s16, 1
      %s199 = scalar_lea.vmem %s4, %s198
      %s200 = smul.u32 8, %s16
      %p201 = scmp.lt.s32.totalorder %s200, 15
      %s202 = scalar_select %p201, %s200, 15
      %s203 = smul.addr %s202, 4
      %s204 = scalar_lea.vmem %s0, %s203
      %s205 = smul.u32 8, %s16
      %s206 = smul.u32 8, %s16
      %p207 = scmp.lt.s32.totalorder %s206, 15
      %s208 = scalar_select %p207, %s206, 15
      %s209 = smul.addr %s208, 8
      %s210 = scalar_lea.vmem %s2, %s209
      %s211 = smul.u32 8, %s16
      %p212 = scmp.lt.s32.totalorder %s16, 1
      %s213 = scalar_select %p212, %s16, 1
      %s214 = scalar_lea.vmem %s3, %s213
      %p215 = scmp.lt.s32.totalorder %s16, 1
      %s216 = scalar_select %p215, %s16, 1
      %s217 = scalar_lea.vmem %s4, %s216
      %v219 = vld [vmem:[%s204] sm:$0xf]
      %v220 = vld [vmem:[%s204 + $0x4] sm:$0xf]
      %v221 = vld [vmem:[%s204 + $0x8] sm:$0xf]
      %v222 = vld [vmem:[%s204 + $0xc] sm:$0xf]
      %v223 = vld [vmem:[%s204 + $0x10] sm:$0xf]
      %v224 = vld [vmem:[%s204 + $0x14] sm:$0xf]
      %v225 = vld [vmem:[%s204 + $0x18] sm:$0xf]
      %v226 = vld [vmem:[%s204 + $0x1c] sm:$0xf]
      %v227 = vld [vmem:[%s1] sm:$0xf]
      %v228 = vld [vmem:[%s1 + $0x4] sm:$0xf]
      %v229 = vld [vmem:[%s1 + $0x8] sm:$0xf]
      %v230 = vld [vmem:[%s1 + $0xc] sm:$0xf]
      %v231 = vld [vmem:[%s1 + $0x10] sm:$0xf]
      %v232 = vld [vmem:[%s1 + $0x14] sm:$0xf]
      %v233 = vld [vmem:[%s1 + $0x18] sm:$0xf]
      %v234 = vld [vmem:[%s1 + $0x1c] sm:$0xf]
      %v243 = vunpack.c.l.b16 %v219
      %v244 = vunpack.c.l.b16 %v220
      %v245 = vunpack.c.l.b16 %v221
      %v246 = vunpack.c.l.b16 %v222
      %v247 = vunpack.c.l.b16 %v223
      %v248 = vunpack.c.l.b16 %v224
      %v249 = vunpack.c.l.b16 %v225
      %v250 = vunpack.c.l.b16 %v226
      %v251 = vpack.c.b16 %v244, %v243
      %v252 = vpack.c.b16 %v246, %v245
      %v253 = vpack.c.b16 %v248, %v247
      %v254 = vpack.c.b16 %v250, %v249
      %v263 = vunpack.c.l.b16 %v227
      %v264 = vunpack.c.l.b16 %v228
      %v265 = vunpack.c.l.b16 %v229
      %v266 = vunpack.c.l.b16 %v230
      %v267 = vunpack.c.l.b16 %v231
      %v268 = vunpack.c.l.b16 %v232
      %v269 = vunpack.c.l.b16 %v233
      %v270 = vunpack.c.l.b16 %v234
      %v271 = vpack.c.b16 %v264, %v263
      %v272 = vpack.c.b16 %v266, %v265
      %v273 = vpack.c.b16 %v268, %v267
      %v274 = vpack.c.b16 %v270, %v269
      %vm279 = vcmask 523264
      %v281 = vsel %vm279, %v251, 0
      %v284 = vsel %vm279, %v252, 0
      %v287 = vsel %vm279, %v253, 0
      %v290 = vsel %vm279, %v254, 0
      %292 = vmatprep.subr.bf16.mxu0 0
      %293 = vmatpush1.bf16.msra.mxu0 %v271
      %294 = vmatprep.subr.bf16.mxu0 0
      %295 = vmatpush1.bf16.msra.mxu0 %v272
      %296 = vmatprep.subr.bf16.mxu0 0
      %297 = vmatpush1.bf16.msra.mxu0 %v273
      %298 = vmatprep.subr.bf16.mxu0 0
      %299 = vmatpush1.bf16.msra.mxu0 %v274
      %300 = vmatprep.subr.bf16.mxu0 0
      %301 = vmatpush1.bf16.msra.mxu0 0
      %302 = vmatprep.subr.bf16.mxu0 0
      %303 = vmatpush1.bf16.msra.mxu0 0
      %304 = vmatprep.subr.bf16.mxu0 0
      %305 = vmatpush1.bf16.msra.mxu0 0
      %306 = vmatprep.subr.bf16.mxu0 0
      %307 = vmatpush1.bf16.msra.mxu0 0
      %308 = vmatprep.subr.bf16.mxu0 0
      %309 = vmatpush1.bf16.msra.mxu0 0
      %310 = vmatprep.subr.bf16.mxu0 0
      %311 = vmatpush1.bf16.msra.mxu0 0
      %312 = vmatprep.subr.bf16.mxu0 0
      %313 = vmatpush1.bf16.msra.mxu0 0
      %314 = vmatprep.subr.bf16.mxu0 0
      %315 = vmatpush1.bf16.msra.mxu0 0
      %316 = vmatprep.subr.bf16.mxu0 0
      %317 = vmatpush1.bf16.msra.mxu0 0
      %318 = vmatprep.subr.bf16.mxu0 0
      %319 = vmatpush1.bf16.msra.mxu0 0
      %320 = vmatprep.subr.bf16.mxu0 0
      %321 = vmatpush1.bf16.msra.mxu0 0
      %322 = vmatprep.subr.bf16.mxu0 0
      %323 = vmatpush1.bf16.msra.mxu0 0
      %324 = vmatprep.mubr.bf16.mxu0 0
      %325 = vmatmul.mubr.bf16.gmra.mrb[0].mxu0 %v281
      %v326 = vpop.f32.mrb[0].mxu0
      %v327 = vadd.f32 0.0, %v326
      %v328 = vpop.f32.mrb[0].mxu0
      %v329 = vpop.f32.mrb[0].mxu0
      %v330 = vadd.f32 0.0, %v329
      %v331 = vpop.f32.mrb[0].mxu0
      %332 = vmatprep.mubr.bf16.mxu0 0
      %333 = vmatmul.mubr.bf16.gmra.mrb[0].mxu0 %v284
      %v334 = vpop.f32.mrb[0].mxu0
      %v335 = vadd.f32 0.0, %v334
      %v336 = vpop.f32.mrb[0].mxu0
      %v337 = vpop.f32.mrb[0].mxu0
      %v338 = vadd.f32 0.0, %v337
      %v339 = vpop.f32.mrb[0].mxu0
      %340 = vmatprep.mubr.bf16.mxu0 0
      %341 = vmatmul.mubr.bf16.gmra.mrb[0].mxu0 %v287
      %v342 = vpop.f32.mrb[0].mxu0
      %v343 = vadd.f32 0.0, %v342
      %v344 = vpop.f32.mrb[0].mxu0
      %v345 = vpop.f32.mrb[0].mxu0
      %v346 = vadd.f32 0.0, %v345
      %v347 = vpop.f32.mrb[0].mxu0
      %348 = vmatprep.mubr.bf16.mxu0 0
      %349 = vmatmul.mubr.bf16.gmra.mrb[0].mxu0 %v290
      %v350 = vpop.f32.mrb[0].mxu0
      %v351 = vadd.f32 0.0, %v350
      %v352 = vpop.f32.mrb[0].mxu0
      %v353 = vpop.f32.mrb[0].mxu0
      %v354 = vadd.f32 0.0, %v353
      %v355 = vpop.f32.mrb[0].mxu0
      %356 = vdwg.mxu0
      %vm357 = vcmask 261120
      %358 = vst.msk [vmem:[%s210] sm:$0xff] %vm357, %v327
      %359 = vst.msk [vmem:[%s210 + $0x8] sm:$0xff] %vm357, %v330
      %360 = vst.msk [vmem:[%s210 + $0x10] sm:$0xff] %vm357, %v335
      %361 = vst.msk [vmem:[%s210 + $0x18] sm:$0xff] %vm357, %v338
      %362 = vst.msk [vmem:[%s210 + $0x20] sm:$0xff] %vm357, %v343
      %363 = vst.msk [vmem:[%s210 + $0x28] sm:$0xff] %vm357, %v346
      %364 = vst.msk [vmem:[%s210 + $0x30] sm:$0xff] %vm357, %v351
      %365 = vst.msk [vmem:[%s210 + $0x38] sm:$0xff] %vm357, %v354
      %s366 = smul.u32 %s16, 64
      %v367 = vlaneseq
      %v368 = vshrl.u32 %v367, 7
      %v369 = vadd.s32 %v368, 8
      %v370 = vadd.s32 %v368, 16
      %v371 = vadd.s32 %v368, 24
      %v372 = vadd.s32 %v368, 32
      %v373 = vadd.s32 %v368, 40
      %v374 = vadd.s32 %v368, 48
      %v375 = vadd.s32 %v368, 56
      %v376 = vstv %s366
      %v377 = vadd.s32 %v376, %v368
      %v378 = vadd.s32 %v376, %v369
      %v379 = vadd.s32 %v376, %v370
      %v380 = vadd.s32 %v376, %v371
      %v381 = vadd.s32 %v376, %v372
      %v382 = vadd.s32 %v376, %v373
      %v383 = vadd.s32 %v376, %v374
      %v384 = vadd.s32 %v376, %v375
      %vm385 = vcmp.lt.s32.totalorder %v377, 128
      %vm386 = vcmp.lt.s32.totalorder %v378, 128
      %vm387 = vcmp.lt.s32.totalorder %v379, 128
      %vm388 = vcmp.lt.s32.totalorder %v380, 128
      %vm389 = vcmp.lt.s32.totalorder %v381, 128
      %vm390 = vcmp.lt.s32.totalorder %v382, 128
      %vm391 = vcmp.lt.s32.totalorder %v383, 128
      %vm392 = vcmp.lt.s32.totalorder %v384, 128
      %v393 = vsel %vm385, 1, 0
      %v394 = vsel %vm386, 1, 0
      %v395 = vsel %vm387, 1, 0
      %v396 = vsel %vm388, 1, 0
      %v397 = vsel %vm389, 1, 0
      %v398 = vsel %vm390, 1, 0
      %v399 = vsel %vm391, 1, 0
      %v400 = vsel %vm392, 1, 0
      %vm401 = vcmp.eq.s32.totalorder %v393, 1
      %vm402 = vcmp.eq.s32.totalorder %v394, 1
      %vm403 = vcmp.eq.s32.totalorder %v395, 1
      %vm404 = vcmp.eq.s32.totalorder %v396, 1
      %vm405 = vcmp.eq.s32.totalorder %v397, 1
      %vm406 = vcmp.eq.s32.totalorder %v398, 1
      %vm407 = vcmp.eq.s32.totalorder %v399, 1
      %vm408 = vcmp.eq.s32.totalorder %v400, 1
      %v409 = vsel %vm401, %v327, 0.0
      %v410 = vsel %vm402, %v330, 0.0
      %v411 = vsel %vm403, %v335, 0.0
      %v412 = vsel %vm404, %v338, 0.0
      %v413 = vsel %vm405, %v343, 0.0
      %v414 = vsel %vm406, %v346, 0.0
      %v415 = vsel %vm407, %v351, 0.0
      %v416 = vsel %vm408, %v354, 0.0
      %v417 = vsel %vm357, %v409, 0.0
      %v418 = vsel %vm357, %v410, 0.0
      %v419 = vadd.f32 %v417, %v418
      %v420 = vsel %vm357, %v411, 0.0
      %v421 = vadd.f32 %v419, %v420
      %v422 = vsel %vm357, %v412, 0.0
      %v423 = vadd.f32 %v421, %v422
      %v424 = vsel %vm357, %v413, 0.0
      %v425 = vadd.f32 %v423, %v424
      %v426 = vsel %vm357, %v414, 0.0
      %v427 = vadd.f32 %v425, %v426
      %v428 = vsel %vm357, %v415, 0.0
      %v429 = vadd.f32 %v427, %v428
      %v430 = vsel %vm357, %v416, 0.0
      %v431 = vadd.f32 %v429, %v430
      %v432 = vrot.slane %v431, 4
      %v433 = vadd.f32 %v431, %v432
      %v434 = vrot.slane %v433, 2
      %v435 = vadd.f32 %v433, %v434
      %v436 = vrot.slane %v435, 1
      %v437 = vadd.f32 %v435, %v436
      %vm438 = vcmask 253952
      %439 = vst.msk [vmem:[%s214] sm:$0x1] %vm438, %v437
      %v440 = vmul.f32 %v409, %v409
      %v441 = vmul.f32 %v410, %v410
      %v442 = vmul.f32 %v411, %v411
      %v443 = vmul.f32 %v412, %v412
      %v444 = vmul.f32 %v413, %v413
      %v445 = vmul.f32 %v414, %v414
      %v446 = vmul.f32 %v415, %v415
      %v447 = vmul.f32 %v416, %v416
      %v448 = vsel %vm357, %v440, 0.0
      %v449 = vsel %vm357, %v441, 0.0
      %v450 = vadd.f32 %v448, %v449
      %v451 = vsel %vm357, %v442, 0.0
      %v452 = vadd.f32 %v450, %v451
      %v453 = vsel %vm357, %v443, 0.0
      %v454 = vadd.f32 %v452, %v453
      %v455 = vsel %vm357, %v444, 0.0
      %v456 = vadd.f32 %v454, %v455
      %v457 = vsel %vm357, %v445, 0.0
      %v458 = vadd.f32 %v456, %v457
      %v459 = vsel %vm357, %v446, 0.0
      %v460 = vadd.f32 %v458, %v459
      %v461 = vsel %vm357, %v447, 0.0
      %v462 = vadd.f32 %v460, %v461
      %v463 = vrot.slane %v462, 4
      %v464 = vadd.f32 %v462, %v463
      %v465 = vrot.slane %v464, 2
      %v466 = vadd.f32 %v464, %v465
      %v467 = vrot.slane %v466, 1
      %v468 = vadd.f32 %v466, %v467
      %469 = vst.msk [vmem:[%s217] sm:$0x1] %vm438, %v468
      %s470 = smul.u32 8, %s16
      %p471 = scmp.lt.s32.totalorder %s470, 15
      %s472 = scalar_select %p471, %s470, 15
      %s473 = smul.addr %s472, 8
      %s474 = scalar_lea.vmem %s2, %s473
      %p475 = scmp.lt.s32.totalorder %s16, 1
      %s476 = scalar_select %p475, %s16, 1
      %s477 = scalar_lea.vmem %s3, %s476
      %p478 = scmp.lt.s32.totalorder %s16, 1
      %s479 = scalar_select %p478, %s16, 1
      %s480 = scalar_lea.vmem %s4, %s479
      // Predicated region
      $region29: #{aegan_resnet_decoder_forward.19} parent=27 // pred_check
        %p481 = pneg %p81
      $region30: #{aegan_resnet_decoder_forward.19} parent=27 // pred_check_branch
        %483 = sbr.rel (%p481) target = $region32
      $region31: #{aegan_resnet_decoder_forward.19} parent=27 // pred_region
        %s484 = smul.u32 8, %s16
      $region32: #{aegan_resnet_decoder_forward.19} parent=27 // pred_fallthru
        _
      // Predicated region
      $region33: #{aegan_resnet_decoder_forward.19} parent=27 // pred_check
        %p485 = pneg %p107
      $region34: #{aegan_resnet_decoder_forward.19} parent=27 // pred_check_branch
        %487 = sbr.rel (%p485) target = $region36
      $region35: #{aegan_resnet_decoder_forward.19} parent=27 // pred_region
        _
      $region36: #{aegan_resnet_decoder_forward.19} parent=27 // pred_fallthru
        _
      // Predicated region
      $region37: #{aegan_resnet_decoder_forward.19} parent=27 // pred_check
        %p488 = pneg %p133
      $region38: #{aegan_resnet_decoder_forward.19} parent=27 // pred_check_branch
        %490 = sbr.rel (%p488) target = $region40
      $region39: #{aegan_resnet_decoder_forward.19} parent=27 // pred_region
        _
      $region40: #{aegan_resnet_decoder_forward.19} parent=27 // pred_fallthru
        _
    $region28: #{aegan_resnet_decoder_forward.19} parent=5 // pred_fallthru
      _
    %p491 = scmp.le.s32.totalorder 2, %s11
    // Predicated region
    $region41: #{aegan_resnet_decoder_forward.19} parent=5 // pred_check
      %p492 = pneg %p491
    $region42: #{aegan_resnet_decoder_forward.19} parent=5 // pred_check_branch
      %494 = sbr.rel (%p492) target = $region44
    $region43: #{aegan_resnet_decoder_forward.19} parent=5 // pred_region
      %s495 = ssub.s32 %s11, 2
      // Predicated region
      $region45: #{aegan_resnet_decoder_forward.19} parent=43 // pred_check
        %p496 = pneg %p87
      $region46: #{aegan_resnet_decoder_forward.19} parent=43 // pred_check_branch
        %498 = sbr.rel (%p496) target = $region48
      $region47: #{aegan_resnet_decoder_forward.19} parent=43 // pred_region
        %s499 = smul.u32 8, %s17
        %p500 = scmp.lt.s32.totalorder %s499, 15
        %s501 = scalar_select %p500, %s499, 15
        %s502 = smul.addr %s501, 8
        %s503 = scalar_lea.vmem %s2, %s502
      $region48: #{aegan_resnet_decoder_forward.19} parent=43 // pred_fallthru
        _
      // Predicated region
      $region49: #{aegan_resnet_decoder_forward.19} parent=43 // pred_check
        %p504 = pneg %p113
      $region50: #{aegan_resnet_decoder_forward.19} parent=43 // pred_check_branch
        %506 = sbr.rel (%p504) target = $region52
      $region51: #{aegan_resnet_decoder_forward.19} parent=43 // pred_region
        %p507 = scmp.lt.s32.totalorder %s17, 1
        %s508 = scalar_select %p507, %s17, 1
        %s509 = scalar_lea.vmem %s3, %s508
      $region52: #{aegan_resnet_decoder_forward.19} parent=43 // pred_fallthru
        _
      // Predicated region
      $region53: #{aegan_resnet_decoder_forward.19} parent=43 // pred_check
        %p510 = pneg %p139
      $region54: #{aegan_resnet_decoder_forward.19} parent=43 // pred_check_branch
        %512 = sbr.rel (%p510) target = $region56
      $region55: #{aegan_resnet_decoder_forward.19} parent=43 // pred_region
        %p513 = scmp.lt.s32.totalorder %s17, 1
        %s514 = scalar_select %p513, %s17, 1
        %s515 = scalar_lea.vmem %s4, %s514
      $region56: #{aegan_resnet_decoder_forward.19} parent=43 // pred_fallthru
        _
    $region44: #{aegan_resnet_decoder_forward.19} parent=5 // pred_fallthru
      _
  $region6: #{aegan_resnet_decoder_forward.19} parent=0 // loop_footer
    %s15 = sadd.s32 1, %s11
  $region7: #{aegan_resnet_decoder_forward.19} parent=0 // loop_footer_branch
    %10 = sbr.rel target = $region3
  $region8: #{aegan_resnet_decoder_forward.19} parent=0 // loop_exit
    _

// kernel: aegan_resnet_decoder_forward.20
$region0: #{aegan_resnet_decoder_forward.20}
  #allocation0 [shape = 'u32[]', space=smem, size = 0x4, offset = 0x4, fixed_abs, tag = 'smem constant byte address 0x4 - core index']
  #allocation1 [shape = 'u32[144,128]{1,0:T(1,128)}', space=vmem, size = 0x12000, scoped, tag = 'internal scratch']
  %s0 = inlined_call_operand.vmem [shape: f32[32,128], index: 0, kind: input, shape index: {}]
  %s1 = inlined_call_operand.vmem [shape: f32[1,128], index: 1, kind: input, shape index: {}]
  %s2 = inlined_call_operand.vmem [shape: f32[1,128], index: 2, kind: input, shape index: {}]
  %s3 = inlined_call_operand.vmem [shape: f32[32,128], index: 3, kind: output, shape index: {}]
  %s4 = sld [smem:[#allocation0]]
  $region45: #{aegan_resnet_decoder_forward.20} parent=0
    _
  %s6 = ssub.s32 1, %s4
  %s7 = scalar_select 0, %s6, %s4
  loop: start=0, step=1, limit=4
  $region2: #{aegan_resnet_decoder_forward.20} parent=0 // loop_pre_header
    _
  $region3: #{aegan_resnet_decoder_forward.20} parent=0 // loop_header
    %s9 = sphi 0, %s13
    %p10 = scmp.ge.s32.totalorder %s9, 4
    %s19 = sphi 0, %s21
    %s22 = sphi 0, %s19
    %s23 = sphi 0, %s22
    %s39 = sphi 0, %s23
    %s43 = sphi 0, %s43
    %s45 = sphi 0, %s43
    %s46 = sphi 0, %s45
    %s60 = sphi 0, %s46
    %s64 = sphi 0, %s64
    %s66 = sphi 0, %s64
    %s67 = sphi 0, %s66
    %s81 = sphi 0, %s67
    %s87 = sphi 0, %s89
    %s90 = sphi 0, %s87
    %s91 = sphi 0, %s90
    %s107 = sphi 0, %s91
  $region4: #{aegan_resnet_decoder_forward.20} parent=0 // loop_header_branch
    %12 = sbr.rel (%p10) target = $region8
  $region5: #{aegan_resnet_decoder_forward.20} parent=0 // loop_body
    %s14 = ssub.s32 %s9, 1
    %s15 = ssub.s32 %s9, 2
    %s16 = sadd.s32 %s9, 1
    %s17 = ssub.s32 %s9, %s16
    %p18 = scmp.eq.s32.totalorder %s17, 0
    %s20 = sadd.s32 %s19, 1
    %s21 = scalar_select %p18, %s19, %s20
    %p24 = pneg %p18
    %p25 = scmp.eq.s32.totalorder %s9, 1
    %p26 = por %p24, %p25
    %p27 = scmp.ne.s32.totalorder %s19, %s22
    %p28 = scmp.eq.s32.totalorder %s9, 0
    %p29 = por %p27, %p28
    %p30 = scmp.ne.s32.totalorder %s19, %s22
    %p31 = scmp.eq.s32.totalorder %s14, 1
    %p32 = por %p30, %p31
    %p33 = scmp.ne.s32.totalorder %s22, %s23
    %p34 = scmp.eq.s32.totalorder %s14, 0
    %p35 = por %p33, %p34
    %p36 = scmp.ne.s32.totalorder %s22, %s23
    %p37 = scmp.eq.s32.totalorder %s15, 1
    %p38 = por %p36, %p37
    %p40 = scmp.ne.s32.totalorder %s23, %s39
    %p41 = scmp.eq.s32.totalorder %s15, 0
    %p42 = por %p40, %p41
    %s44 = sadd.s32 %s43, 1
    %p47 = scmp.eq.s32.totalorder %s9, 1
    %p48 = scmp.ne.s32.totalorder %s43, %s45
    %p49 = scmp.eq.s32.totalorder %s9, 0
    %p50 = por %p48, %p49
    %p51 = scmp.ne.s32.totalorder %s43, %s45
    %p52 = scmp.eq.s32.totalorder %s14, 1
    %p53 = por %p51, %p52
    %p54 = scmp.ne.s32.totalorder %s45, %s46
    %p55 = scmp.eq.s32.totalorder %s14, 0
    %p56 = por %p54, %p55
    %p57 = scmp.ne.s32.totalorder %s45, %s46
    %p58 = scmp.eq.s32.totalorder %s15, 1
    %p59 = por %p57, %p58
    %p61 = scmp.ne.s32.totalorder %s46, %s60
    %p62 = scmp.eq.s32.totalorder %s15, 0
    %p63 = por %p61, %p62
    %s65 = sadd.s32 %s64, 1
    %p68 = scmp.eq.s32.totalorder %s9, 1
    %p69 = scmp.ne.s32.totalorder %s64, %s66
    %p70 = scmp.eq.s32.totalorder %s9, 0
    %p71 = por %p69, %p70
    %p72 = scmp.ne.s32.totalorder %s64, %s66
    %p73 = scmp.eq.s32.totalorder %s14, 1
    %p74 = por %p72, %p73
    %p75 = scmp.ne.s32.totalorder %s66, %s67
    %p76 = scmp.eq.s32.totalorder %s14, 0
    %p77 = por %p75, %p76
    %p78 = scmp.ne.s32.totalorder %s66, %s67
    %p79 = scmp.eq.s32.totalorder %s15, 1
    %p80 = por %p78, %p79
    %p82 = scmp.ne.s32.totalorder %s67, %s81
    %p83 = scmp.eq.s32.totalorder %s15, 0
    %p84 = por %p82, %p83
    %s85 = ssub.s32 %s9, %s16
    %p86 = scmp.eq.s32.totalorder %s85, 0
    %s88 = sadd.s32 %s87, 1
    %s89 = scalar_select %p86, %s87, %s88
    %p92 = pneg %p86
    %p93 = scmp.eq.s32.totalorder %s9, 1
    %p94 = por %p92, %p93
    %p95 = scmp.ne.s32.totalorder %s87, %s90
    %p96 = scmp.eq.s32.totalorder %s9, 0
    %p97 = por %p95, %p96
    %p98 = scmp.ne.s32.totalorder %s87, %s90
    %p99 = scmp.eq.s32.totalorder %s14, 1
    %p100 = por %p98, %p99
    %p101 = scmp.ne.s32.totalorder %s90, %s91
    %p102 = scmp.eq.s32.totalorder %s14, 0
    %p103 = por %p101, %p102
    %p104 = scmp.ne.s32.totalorder %s90, %s91
    %p105 = scmp.eq.s32.totalorder %s15, 1
    %p106 = por %p104, %p105
    %p108 = scmp.ne.s32.totalorder %s91, %s107
    %p109 = scmp.eq.s32.totalorder %s15, 0
    %p110 = por %p108, %p109
    %p111 = scmp.le.s32.totalorder 1, %s9
    %p112 = scmp.lt.s32.totalorder %s9, 3
    %p113 = pnand %p111, %p112
    %p114 = pneg %p113
    // Predicated region
    $region9: #{aegan_resnet_decoder_forward.20} parent=5 // pred_check
      _
    $region10: #{aegan_resnet_decoder_forward.20} parent=5 // pred_check_branch
      %116 = sbr.rel (%p113) target = $region12
    $region11: #{aegan_resnet_decoder_forward.20} parent=5 // pred_region
      %s117 = ssub.s32 %s9, 1
      // Predicated region
      $region13: #{aegan_resnet_decoder_forward.20} parent=11 // pred_check
        %p118 = pneg %p56
      $region14: #{aegan_resnet_decoder_forward.20} parent=11 // pred_check_branch
        %120 = sbr.rel (%p118) target = $region16
      $region15: #{aegan_resnet_decoder_forward.20} parent=11 // pred_region
        _
      $region16: #{aegan_resnet_decoder_forward.20} parent=11 // pred_fallthru
        _
      // Predicated region
      $region17: #{aegan_resnet_decoder_forward.20} parent=11 // pred_check
        %p121 = pneg %p77
      $region18: #{aegan_resnet_decoder_forward.20} parent=11 // pred_check_branch
        %123 = sbr.rel (%p121) target = $region20
      $region19: #{aegan_resnet_decoder_forward.20} parent=11 // pred_region
        _
      $region20: #{aegan_resnet_decoder_forward.20} parent=11 // pred_fallthru
        _
    $region12: #{aegan_resnet_decoder_forward.20} parent=5 // pred_fallthru
      _
    %p124 = scmp.lt.s32.totalorder %s9, 2
    // Predicated region
    $region21: #{aegan_resnet_decoder_forward.20} parent=5 // pred_check
      %p125 = pneg %p124
    $region22: #{aegan_resnet_decoder_forward.20} parent=5 // pred_check_branch
      %127 = sbr.rel (%p125) target = $region24
    $region23: #{aegan_resnet_decoder_forward.20} parent=5 // pred_region
      // Predicated region
      $region25: #{aegan_resnet_decoder_forward.20} parent=23 // pred_check
        %p128 = pneg %p29
      $region26: #{aegan_resnet_decoder_forward.20} parent=23 // pred_check_branch
        %130 = sbr.rel (%p128) target = $region28
      $region27: #{aegan_resnet_decoder_forward.20} parent=23 // pred_region
        %s131 = smul.u32 2, %s9
        %p132 = scmp.lt.s32.totalorder %s131, 3
        %s133 = scalar_select %p132, %s131, 3
        %s134 = smul.addr %s133, 8
        %s135 = scalar_lea.vmem %s0, %s134
        %s136 = smul.u32 2, %s9
      $region28: #{aegan_resnet_decoder_forward.20} parent=23 // pred_fallthru
        _
    $region24: #{aegan_resnet_decoder_forward.20} parent=5 // pred_fallthru
      _
    %p137 = scmp.le.s32.totalorder 1, %s9
    %p138 = scmp.lt.s32.totalorder %s9, 3
    %p139 = pnand %p137, %p138
    %p140 = pneg %p139
    // Predicated region
    $region29: #{aegan_resnet_decoder_forward.20} parent=5 // pred_check
      _
    $region30: #{aegan_resnet_decoder_forward.20} parent=5 // pred_check_branch
      %142 = sbr.rel (%p139) target = $region32
    $region31: #{aegan_resnet_decoder_forward.20} parent=5 // pred_region
      %s143 = ssub.s32 %s9, 1
      %s144 = smul.u32 2, %s14
      %p145 = scmp.lt.s32.totalorder %s144, 3
      %s146 = scalar_select %p145, %s144, 3
      %s147 = smul.addr %s146, 8
      %s148 = scalar_lea.vmem %s0, %s147
      %p149 = pneg %p35
      %p150 = pneg %p32
      %p151 = pneg %p56
      %p152 = pneg %p53
      %p153 = pneg %p77
      %p154 = pneg %p74
      %p155 = pneg %p103
      %p156 = pneg %p100
      %s157 = smul.u32 2, %s14
      %p158 = scmp.lt.s32.totalorder %s157, 3
      %s159 = scalar_select %p158, %s157, 3
      %s160 = smul.addr %s159, 8
      %s161 = scalar_lea.vmem %s3, %s160
      %s162 = smul.u32 2, %s14
      %p163 = scmp.lt.s32.totalorder %s162, 3
      %s164 = scalar_select %p163, %s162, 3
      %s165 = smul.addr %s164, 8
      %s166 = scalar_lea.vmem %s0, %s165
      %s167 = smul.u32 2, %s14
      %s168 = smul.u32 2, %s14
      %p169 = scmp.lt.s32.totalorder %s168, 3
      %s170 = scalar_select %p169, %s168, 3
      %s171 = smul.addr %s170, 8
      %s172 = scalar_lea.vmem %s3, %s171
      %s173 = smul.u32 2, %s14
      %v174 = vld [vmem:[%s166] sm:$0xff]
      %v175 = vld [vmem:[%s166 + $0x8] sm:$0xff]
      %v176 = vld [vmem:[%s1] sm:$0x1]
      %v178 = vlaneseq
      %v179 = vshrl.u32 %v178, 7
      %v180 = vsub.s32 0, %v179
      %v181 = vrot.slane %v176, %v180
      %v183 = vmul.f32 %v174, %v181
      %v184 = vmul.f32 %v175, %v181
      %v185 = vld [vmem:[%s2] sm:$0x1]
      %v187 = vlaneseq
      %v188 = vshrl.u32 %v187, 7
      %v189 = vsub.s32 0, %v188
      %v190 = vrot.slane %v185, %v189
      %v192 = vadd.f32 %v183, %v190
      %v193 = vadd.f32 %v184, %v190
      %v194 = vmax.f32 %v192, 0.0
      %v195 = vmax.f32 %v193, 0.0
      %196 = vst [vmem:[%s172] sm:$0xff] %v194
      %197 = vst [vmem:[%s172 + $0x8] sm:$0xff] %v195
      %s198 = smul.u32 2, %s14
      %p199 = scmp.lt.s32.totalorder %s198, 3
      %s200 = scalar_select %p199, %s198, 3
      %s201 = smul.addr %s200, 8
      %s202 = scalar_lea.vmem %s3, %s201
      // Predicated region
      $region33: #{aegan_resnet_decoder_forward.20} parent=31 // pred_check
        %p203 = pneg %p100
      $region34: #{aegan_resnet_decoder_forward.20} parent=31 // pred_check_branch
        %205 = sbr.rel (%p203) target = $region36
      $region35: #{aegan_resnet_decoder_forward.20} parent=31 // pred_region
        %s206 = smul.u32 2, %s14
      $region36: #{aegan_resnet_decoder_forward.20} parent=31 // pred_fallthru
        _
    $region32: #{aegan_resnet_decoder_forward.20} parent=5 // pred_fallthru
      _
    %p207 = scmp.le.s32.totalorder 2, %s9
    // Predicated region
    $region37: #{aegan_resnet_decoder_forward.20} parent=5 // pred_check
      %p208 = pneg %p207
    $region38: #{aegan_resnet_decoder_forward.20} parent=5 // pred_check_branch
      %210 = sbr.rel (%p208) target = $region40
    $region39: #{aegan_resnet_decoder_forward.20} parent=5 // pred_region
      %s211 = ssub.s32 %s9, 2
      // Predicated region
      $region41: #{aegan_resnet_decoder_forward.20} parent=39 // pred_check
        %p212 = pneg %p106
      $region42: #{aegan_resnet_decoder_forward.20} parent=39 // pred_check_branch
        %214 = sbr.rel (%p212) target = $region44
      $region43: #{aegan_resnet_decoder_forward.20} parent=39 // pred_region
        %s215 = smul.u32 2, %s15
        %p216 = scmp.lt.s32.totalorder %s215, 3
        %s217 = scalar_select %p216, %s215, 3
        %s218 = smul.addr %s217, 8
        %s219 = scalar_lea.vmem %s3, %s218
      $region44: #{aegan_resnet_decoder_forward.20} parent=39 // pred_fallthru
        _
    $region40: #{aegan_resnet_decoder_forward.20} parent=5 // pred_fallthru
      _
  $region6: #{aegan_resnet_decoder_forward.20} parent=0 // loop_footer
    %s13 = sadd.s32 1, %s9
  $region7: #{aegan_resnet_decoder_forward.20} parent=0 // loop_footer_branch
    %8 = sbr.rel target = $region3
  $region8: #{aegan_resnet_decoder_forward.20} parent=0 // loop_exit
    _

// kernel: aegan_resnet_decoder_forward.21
$region0: #{aegan_resnet_decoder_forward.21}
  #allocation0 [shape = 'u32[]', space=smem, size = 0x4, offset = 0x4, fixed_abs, tag = 'smem constant byte address 0x4 - core index']
  #allocation1 [shape = 'u32[144,128]{1,0:T(1,128)}', space=vmem, size = 0x12000, scoped, tag = 'internal scratch']
  %s0 = inlined_call_operand.vmem [shape: bf16[512,32], index: 0, kind: input, shape index: {}]
  %s1 = inlined_call_operand.vmem [shape: bf16[32,12], index: 1, kind: input, shape index: {}]
  %s2 = inlined_call_operand.vmem [shape: f32[512,12], index: 2, kind: output, shape index: {}]
  %s3 = sld [smem:[#allocation0]]
  $region41: #{aegan_resnet_decoder_forward.21} parent=0
    _
  %s5 = ssub.s32 1, %s3
  %s6 = scalar_select 0, %s5, %s3
  loop: start=0, step=1, limit=4
  $region2: #{aegan_resnet_decoder_forward.21} parent=0 // loop_pre_header
    _
  $region3: #{aegan_resnet_decoder_forward.21} parent=0 // loop_header
    %s8 = sphi 0, %s12
    %p9 = scmp.ge.s32.totalorder %s8, 4
    %s18 = sphi 0, %s20
    %s21 = sphi 0, %s18
    %s22 = sphi 0, %s21
    %s38 = sphi 0, %s22
    %s42 = sphi 0, %s42
    %s44 = sphi 0, %s42
    %s45 = sphi 0, %s44
    %s59 = sphi 0, %s45
    %s65 = sphi 0, %s67
    %s68 = sphi 0, %s65
    %s69 = sphi 0, %s68
    %s85 = sphi 0, %s69
  $region4: #{aegan_resnet_decoder_forward.21} parent=0 // loop_header_branch
    %11 = sbr.rel (%p9) target = $region8
  $region5: #{aegan_resnet_decoder_forward.21} parent=0 // loop_body
    %s13 = ssub.s32 %s8, 1
    %s14 = ssub.s32 %s8, 2
    %s15 = sadd.s32 %s8, 1
    %s16 = ssub.s32 %s8, %s15
    %p17 = scmp.eq.s32.totalorder %s16, 0
    %s19 = sadd.s32 %s18, 1
    %s20 = scalar_select %p17, %s18, %s19
    %p23 = pneg %p17
    %p24 = scmp.eq.s32.totalorder %s8, 1
    %p25 = por %p23, %p24
    %p26 = scmp.ne.s32.totalorder %s18, %s21
    %p27 = scmp.eq.s32.totalorder %s8, 0
    %p28 = por %p26, %p27
    %p29 = scmp.ne.s32.totalorder %s18, %s21
    %p30 = scmp.eq.s32.totalorder %s13, 1
    %p31 = por %p29, %p30
    %p32 = scmp.ne.s32.totalorder %s21, %s22
    %p33 = scmp.eq.s32.totalorder %s13, 0
    %p34 = por %p32, %p33
    %p35 = scmp.ne.s32.totalorder %s21, %s22
    %p36 = scmp.eq.s32.totalorder %s14, 1
    %p37 = por %p35, %p36
    %p39 = scmp.ne.s32.totalorder %s22, %s38
    %p40 = scmp.eq.s32.totalorder %s14, 0
    %p41 = por %p39, %p40
    %s43 = sadd.s32 %s42, 1
    %p46 = scmp.eq.s32.totalorder %s8, 1
    %p47 = scmp.ne.s32.totalorder %s42, %s44
    %p48 = scmp.eq.s32.totalorder %s8, 0
    %p49 = por %p47, %p48
    %p50 = scmp.ne.s32.totalorder %s42, %s44
    %p51 = scmp.eq.s32.totalorder %s13, 1
    %p52 = por %p50, %p51
    %p53 = scmp.ne.s32.totalorder %s44, %s45
    %p54 = scmp.eq.s32.totalorder %s13, 0
    %p55 = por %p53, %p54
    %p56 = scmp.ne.s32.totalorder %s44, %s45
    %p57 = scmp.eq.s32.totalorder %s14, 1
    %p58 = por %p56, %p57
    %p60 = scmp.ne.s32.totalorder %s45, %s59
    %p61 = scmp.eq.s32.totalorder %s14, 0
    %p62 = por %p60, %p61
    %s63 = ssub.s32 %s8, %s15
    %p64 = scmp.eq.s32.totalorder %s63, 0
    %s66 = sadd.s32 %s65, 1
    %s67 = scalar_select %p64, %s65, %s66
    %p70 = pneg %p64
    %p71 = scmp.eq.s32.totalorder %s8, 1
    %p72 = por %p70, %p71
    %p73 = scmp.ne.s32.totalorder %s65, %s68
    %p74 = scmp.eq.s32.totalorder %s8, 0
    %p75 = por %p73, %p74
    %p76 = scmp.ne.s32.totalorder %s65, %s68
    %p77 = scmp.eq.s32.totalorder %s13, 1
    %p78 = por %p76, %p77
    %p79 = scmp.ne.s32.totalorder %s68, %s69
    %p80 = scmp.eq.s32.totalorder %s13, 0
    %p81 = por %p79, %p80
    %p82 = scmp.ne.s32.totalorder %s68, %s69
    %p83 = scmp.eq.s32.totalorder %s14, 1
    %p84 = por %p82, %p83
    %p86 = scmp.ne.s32.totalorder %s69, %s85
    %p87 = scmp.eq.s32.totalorder %s14, 0
    %p88 = por %p86, %p87
    %p89 = scmp.le.s32.totalorder 1, %s8
    %p90 = scmp.lt.s32.totalorder %s8, 3
    %p91 = pnand %p89, %p90
    %p92 = pneg %p91
    // Predicated region
    $region9: #{aegan_resnet_decoder_forward.21} parent=5 // pred_check
      _
    $region10: #{aegan_resnet_decoder_forward.21} parent=5 // pred_check_branch
      %94 = sbr.rel (%p91) target = $region12
    $region11: #{aegan_resnet_decoder_forward.21} parent=5 // pred_region
      %s95 = ssub.s32 %s8, 1
      // Predicated region
      $region13: #{aegan_resnet_decoder_forward.21} parent=11 // pred_check
        %p96 = pneg %p55
      $region14: #{aegan_resnet_decoder_forward.21} parent=11 // pred_check_branch
        %98 = sbr.rel (%p96) target = $region16
      $region15: #{aegan_resnet_decoder_forward.21} parent=11 // pred_region
        _
      $region16: #{aegan_resnet_decoder_forward.21} parent=11 // pred_fallthru
        _
    $region12: #{aegan_resnet_decoder_forward.21} parent=5 // pred_fallthru
      _
    %p99 = scmp.lt.s32.totalorder %s8, 2
    // Predicated region
    $region17: #{aegan_resnet_decoder_forward.21} parent=5 // pred_check
      %p100 = pneg %p99
    $region18: #{aegan_resnet_decoder_forward.21} parent=5 // pred_check_branch
      %102 = sbr.rel (%p100) target = $region20
    $region19: #{aegan_resnet_decoder_forward.21} parent=5 // pred_region
      // Predicated region
      $region21: #{aegan_resnet_decoder_forward.21} parent=19 // pred_check
        %p103 = pneg %p28
      $region22: #{aegan_resnet_decoder_forward.21} parent=19 // pred_check_branch
        %105 = sbr.rel (%p103) target = $region24
      $region23: #{aegan_resnet_decoder_forward.21} parent=19 // pred_region
        %s106 = smul.u32 32, %s8
        %p107 = scmp.lt.s32.totalorder %s106, 63
        %s108 = scalar_select %p107, %s106, 63
        %s109 = smul.addr %s108, 4
        %s110 = scalar_lea.vmem %s0, %s109
        %s111 = smul.u32 32, %s8
      $region24: #{aegan_resnet_decoder_forward.21} parent=19 // pred_fallthru
        _
    $region20: #{aegan_resnet_decoder_forward.21} parent=5 // pred_fallthru
      _
    %p112 = scmp.le.s32.totalorder 1, %s8
    %p113 = scmp.lt.s32.totalorder %s8, 3
    %p114 = pnand %p112, %p113
    %p115 = pneg %p114
    // Predicated region
    $region25: #{aegan_resnet_decoder_forward.21} parent=5 // pred_check
      _
    $region26: #{aegan_resnet_decoder_forward.21} parent=5 // pred_check_branch
      %117 = sbr.rel (%p114) target = $region28
    $region27: #{aegan_resnet_decoder_forward.21} parent=5 // pred_region
      %s118 = ssub.s32 %s8, 1
      %s119 = smul.u32 32, %s13
      %p120 = scmp.lt.s32.totalorder %s119, 63
      %s121 = scalar_select %p120, %s119, 63
      %s122 = smul.addr %s121, 4
      %s123 = scalar_lea.vmem %s0, %s122
      %p124 = pneg %p34
      %p125 = pneg %p31
      %p126 = pneg %p55
      %p127 = pneg %p52
      %p128 = pneg %p81
      %p129 = pneg %p78
      %s130 = smul.u32 32, %s13
      %p131 = scmp.lt.s32.totalorder %s130, 63
      %s132 = scalar_select %p131, %s130, 63
      %s133 = smul.addr %s132, 8
      %s134 = scalar_lea.vmem %s2, %s133
      %s135 = smul.u32 32, %s13
      %p136 = scmp.lt.s32.totalorder %s135, 63
      %s137 = scalar_select %p136, %s135, 63
      %s138 = smul.addr %s137, 4
      %s139 = scalar_lea.vmem %s0, %s138
      %s140 = smul.u32 32, %s13
      %s141 = smul.u32 32, %s13
      %p142 = scmp.lt.s32.totalorder %s141, 63
      %s143 = scalar_select %p142, %s141, 63
      %s144 = smul.addr %s143, 8
      %s145 = scalar_lea.vmem %s2, %s144
      %s146 = smul.u32 32, %s13
      %v148 = vld [vmem:[%s139] sm:$0xf]
      %v149 = vld [vmem:[%s139 + $0x4] sm:$0xf]
      %v150 = vld [vmem:[%s139 + $0x8] sm:$0xf]
      %v151 = vld [vmem:[%s139 + $0xc] sm:$0xf]
      %v152 = vld [vmem:[%s139 + $0x10] sm:$0xf]
      %v153 = vld [vmem:[%s139 + $0x14] sm:$0xf]
      %v154 = vld [vmem:[%s139 + $0x18] sm:$0xf]
      %v155 = vld [vmem:[%s139 + $0x1c] sm:$0xf]
      %v156 = vld [vmem:[%s139 + $0x20] sm:$0xf]
      %v157 = vld [vmem:[%s139 + $0x24] sm:$0xf]
      %v158 = vld [vmem:[%s139 + $0x28] sm:$0xf]
      %v159 = vld [vmem:[%s139 + $0x2c] sm:$0xf]
      %v160 = vld [vmem:[%s139 + $0x30] sm:$0xf]
      %v161 = vld [vmem:[%s139 + $0x34] sm:$0xf]
      %v162 = vld [vmem:[%s139 + $0x38] sm:$0xf]
      %v163 = vld [vmem:[%s139 + $0x3c] sm:$0xf]
      %v164 = vld [vmem:[%s139 + $0x40] sm:$0xf]
      %v165 = vld [vmem:[%s139 + $0x44] sm:$0xf]
      %v166 = vld [vmem:[%s139 + $0x48] sm:$0xf]
      %v167 = vld [vmem:[%s139 + $0x4c] sm:$0xf]
      %v168 = vld [vmem:[%s139 + $0x50] sm:$0xf]
      %v169 = vld [vmem:[%s139 + $0x54] sm:$0xf]
      %v170 = vld [vmem:[%s139 + $0x58] sm:$0xf]
      %v171 = vld [vmem:[%s139 + $0x5c] sm:$0xf]
      %v172 = vld [vmem:[%s139 + $0x60] sm:$0xf]
      %v173 = vld [vmem:[%s139 + $0x64] sm:$0xf]
      %v174 = vld [vmem:[%s139 + $0x68] sm:$0xf]
      %v175 = vld [vmem:[%s139 + $0x6c] sm:$0xf]
      %v176 = vld [vmem:[%s139 + $0x70] sm:$0xf]
      %v177 = vld [vmem:[%s139 + $0x74] sm:$0xf]
      %v178 = vld [vmem:[%s139 + $0x78] sm:$0xf]
      %v179 = vld [vmem:[%s139 + $0x7c] sm:$0xf]
      %v180 = vld [vmem:[%s1] sm:$0xf]
      %v181 = vld [vmem:[%s1 + $0x4] sm:$0xf]
      %v182 = vld [vmem:[%s1 + $0x8] sm:$0xf]
      %v183 = vld [vmem:[%s1 + $0xc] sm:$0xf]
      %v216 = vunpack.c.l.b16 %v148
      %v217 = vunpack.c.l.b16 %v149
      %v218 = vunpack.c.l.b16 %v150
      %v219 = vunpack.c.l.b16 %v151
      %v220 = vunpack.c.l.b16 %v152
      %v221 = vunpack.c.l.b16 %v153
      %v222 = vunpack.c.l.b16 %v154
      %v223 = vunpack.c.l.b16 %v155
      %v224 = vunpack.c.l.b16 %v156
      %v225 = vunpack.c.l.b16 %v157
      %v226 = vunpack.c.l.b16 %v158
      %v227 = vunpack.c.l.b16 %v159
      %v228 = vunpack.c.l.b16 %v160
      %v229 = vunpack.c.l.b16 %v161
      %v230 = vunpack.c.l.b16 %v162
      %v231 = vunpack.c.l.b16 %v163
      %v232 = vunpack.c.l.b16 %v164
      %v233 = vunpack.c.l.b16 %v165
      %v234 = vunpack.c.l.b16 %v166
      %v235 = vunpack.c.l.b16 %v167
      %v236 = vunpack.c.l.b16 %v168
      %v237 = vunpack.c.l.b16 %v169
      %v238 = vunpack.c.l.b16 %v170
      %v239 = vunpack.c.l.b16 %v171
      %v240 = vunpack.c.l.b16 %v172
      %v241 = vunpack.c.l.b16 %v173
      %v242 = vunpack.c.l.b16 %v174
      %v243 = vunpack.c.l.b16 %v175
      %v244 = vunpack.c.l.b16 %v176
      %v245 = vunpack.c.l.b16 %v177
      %v246 = vunpack.c.l.b16 %v178
      %v247 = vunpack.c.l.b16 %v179
      %v248 = vpack.c.b16 %v217, %v216
      %v249 = vpack.c.b16 %v219, %v218
      %v250 = vpack.c.b16 %v221, %v220
      %v251 = vpack.c.b16 %v223, %v222
      %v252 = vpack.c.b16 %v225, %v224
      %v253 = vpack.c.b16 %v227, %v226
      %v254 = vpack.c.b16 %v229, %v228
      %v255 = vpack.c.b16 %v231, %v230
      %v256 = vpack.c.b16 %v233, %v232
      %v257 = vpack.c.b16 %v235, %v234
      %v258 = vpack.c.b16 %v237, %v236
      %v259 = vpack.c.b16 %v239, %v238
      %v260 = vpack.c.b16 %v241, %v240
      %v261 = vpack.c.b16 %v243, %v242
      %v262 = vpack.c.b16 %v245, %v244
      %v263 = vpack.c.b16 %v247, %v246
      %v268 = vunpack.c.l.b16 %v180
      %v269 = vunpack.c.l.b16 %v181
      %v270 = vunpack.c.l.b16 %v182
      %v271 = vunpack.c.l.b16 %v183
      %v272 = vpack.c.b16 %v269, %v268
      %v273 = vpack.c.b16 %v271, %v270
      %vm276 = vcmask 261120
      %v278 = vsel %vm276, %v248, 0
      %v281 = vsel %vm276, %v249, 0
      %v284 = vsel %vm276, %v250, 0
      %v287 = vsel %vm276, %v251, 0
      %v290 = vsel %vm276, %v252, 0
      %v293 = vsel %vm276, %v253, 0
      %v296 = vsel %vm276, %v254, 0
      %v299 = vsel %vm276, %v255, 0
      %v302 = vsel %vm276, %v256, 0
      %v305 = vsel %vm276, %v257, 0
      %v308 = vsel %vm276, %v258, 0
      %v311 = vsel %vm276, %v259, 0
      %v314 = vsel %vm276, %v260, 0
      %v317 = vsel %vm276, %v261, 0
      %v320 = vsel %vm276, %v262, 0
      %v323 = vsel %vm276, %v263, 0
      %325 = vmatprep.subr.bf16.mxu0 0
      %326 = vmatpush1.bf16.msra.mxu0 %v272
      %327 = vmatprep.subr.bf16.mxu0 0
      %328 = vmatpush1.bf16.msra.mxu0 %v273
      %329 = vmatprep.subr.bf16.mxu0 0
      %330 = vmatpush1.bf16.msra.mxu0 0
      %331 = vmatprep.subr.bf16.mxu0 0
      %332 = vmatpush1.bf16.msra.mxu0 0
      %333 = vmatprep.subr.bf16.mxu0 0
      %334 = vmatpush1.bf16.msra.mxu0 0
      %335 = vmatprep.subr.bf16.mxu0 0
      %336 = vmatpush1.bf16.msra.mxu0 0
      %337 = vmatprep.subr.bf16.mxu0 0
      %338 = vmatpush1.bf16.msra.mxu0 0
      %339 = vmatprep.subr.bf16.mxu0 0
      %340 = vmatpush1.bf16.msra.mxu0 0
      %341 = vmatprep.subr.bf16.mxu0 0
      %342 = vmatpush1.bf16.msra.mxu0 0
      %343 = vmatprep.subr.bf16.mxu0 0
      %344 = vmatpush1.bf16.msra.mxu0 0
      %345 = vmatprep.subr.bf16.mxu0 0
      %346 = vmatpush1.bf16.msra.mxu0 0
      %347 = vmatprep.subr.bf16.mxu0 0
      %348 = vmatpush1.bf16.msra.mxu0 0
      %349 = vmatprep.subr.bf16.mxu0 0
      %350 = vmatpush1.bf16.msra.mxu0 0
      %351 = vmatprep.subr.bf16.mxu0 0
      %352 = vmatpush1.bf16.msra.mxu0 0
      %353 = vmatprep.subr.bf16.mxu0 0
      %354 = vmatpush1.bf16.msra.mxu0 0
      %355 = vmatprep.subr.bf16.mxu0 0
      %356 = vmatpush1.bf16.msra.mxu0 0
      %357 = vmatprep.mubr.bf16.mxu0 0
      %358 = vmatmul.mubr.bf16.gmra.mrb[0].mxu0 %v278
      %v359 = vpop.f32.mrb[0].mxu0
      %v360 = vadd.f32 0.0, %v359
      %v361 = vpop.f32.mrb[0].mxu0
      %v362 = vpop.f32.mrb[0].mxu0
      %v363 = vadd.f32 0.0, %v362
      %v364 = vpop.f32.mrb[0].mxu0
      %365 = vmatprep.mubr.bf16.mxu0 0
      %366 = vmatmul.mubr.bf16.gmra.mrb[0].mxu0 %v281
      %v367 = vpop.f32.mrb[0].mxu0
      %v368 = vadd.f32 0.0, %v367
      %v369 = vpop.f32.mrb[0].mxu0
      %v370 = vpop.f32.mrb[0].mxu0
      %v371 = vadd.f32 0.0, %v370
      %v372 = vpop.f32.mrb[0].mxu0
      %373 = vmatprep.mubr.bf16.mxu0 0
      %374 = vmatmul.mubr.bf16.gmra.mrb[0].mxu0 %v284
      %v375 = vpop.f32.mrb[0].mxu0
      %v376 = vadd.f32 0.0, %v375
      %v377 = vpop.f32.mrb[0].mxu0
      %v378 = vpop.f32.mrb[0].mxu0
      %v379 = vadd.f32 0.0, %v378
      %v380 = vpop.f32.mrb[0].mxu0
      %381 = vmatprep.mubr.bf16.mxu0 0
      %382 = vmatmul.mubr.bf16.gmra.mrb[0].mxu0 %v287
      %v383 = vpop.f32.mrb[0].mxu0
      %v384 = vadd.f32 0.0, %v383
      %v385 = vpop.f32.mrb[0].mxu0
      %v386 = vpop.f32.mrb[0].mxu0
      %v387 = vadd.f32 0.0, %v386
      %v388 = vpop.f32.mrb[0].mxu0
      %389 = vmatprep.mubr.bf16.mxu0 0
      %390 = vmatmul.mubr.bf16.gmra.mrb[0].mxu0 %v290
      %v391 = vpop.f32.mrb[0].mxu0
      %v392 = vadd.f32 0.0, %v391
      %v393 = vpop.f32.mrb[0].mxu0
      %v394 = vpop.f32.mrb[0].mxu0
      %v395 = vadd.f32 0.0, %v394
      %v396 = vpop.f32.mrb[0].mxu0
      %397 = vmatprep.mubr.bf16.mxu0 0
      %398 = vmatmul.mubr.bf16.gmra.mrb[0].mxu0 %v293
      %v399 = vpop.f32.mrb[0].mxu0
      %v400 = vadd.f32 0.0, %v399
      %v401 = vpop.f32.mrb[0].mxu0
      %v402 = vpop.f32.mrb[0].mxu0
      %v403 = vadd.f32 0.0, %v402
      %v404 = vpop.f32.mrb[0].mxu0
      %405 = vmatprep.mubr.bf16.mxu0 0
      %406 = vmatmul.mubr.bf16.gmra.mrb[0].mxu0 %v296
      %v407 = vpop.f32.mrb[0].mxu0
      %v408 = vadd.f32 0.0, %v407
      %v409 = vpop.f32.mrb[0].mxu0
      %v410 = vpop.f32.mrb[0].mxu0
      %v411 = vadd.f32 0.0, %v410
      %v412 = vpop.f32.mrb[0].mxu0
      %413 = vmatprep.mubr.bf16.mxu0 0
      %414 = vmatmul.mubr.bf16.gmra.mrb[0].mxu0 %v299
      %v415 = vpop.f32.mrb[0].mxu0
      %v416 = vadd.f32 0.0, %v415
      %v417 = vpop.f32.mrb[0].mxu0
      %v418 = vpop.f32.mrb[0].mxu0
      %v419 = vadd.f32 0.0, %v418
      %v420 = vpop.f32.mrb[0].mxu0
      %421 = vmatprep.mubr.bf16.mxu0 0
      %422 = vmatmul.mubr.bf16.gmra.mrb[0].mxu0 %v302
      %v423 = vpop.f32.mrb[0].mxu0
      %v424 = vadd.f32 0.0, %v423
      %v425 = vpop.f32.mrb[0].mxu0
      %v426 = vpop.f32.mrb[0].mxu0
      %v427 = vadd.f32 0.0, %v426
      %v428 = vpop.f32.mrb[0].mxu0
      %429 = vmatprep.mubr.bf16.mxu0 0
      %430 = vmatmul.mubr.bf16.gmra.mrb[0].mxu0 %v305
      %v431 = vpop.f32.mrb[0].mxu0
      %v432 = vadd.f32 0.0, %v431
      %v433 = vpop.f32.mrb[0].mxu0
      %v434 = vpop.f32.mrb[0].mxu0
      %v435 = vadd.f32 0.0, %v434
      %v436 = vpop.f32.mrb[0].mxu0
      %437 = vmatprep.mubr.bf16.mxu0 0
      %438 = vmatmul.mubr.bf16.gmra.mrb[0].mxu0 %v308
      %v439 = vpop.f32.mrb[0].mxu0
      %v440 = vadd.f32 0.0, %v439
      %v441 = vpop.f32.mrb[0].mxu0
      %v442 = vpop.f32.mrb[0].mxu0
      %v443 = vadd.f32 0.0, %v442
      %v444 = vpop.f32.mrb[0].mxu0
      %445 = vmatprep.mubr.bf16.mxu0 0
      %446 = vmatmul.mubr.bf16.gmra.mrb[0].mxu0 %v311
      %v447 = vpop.f32.mrb[0].mxu0
      %v448 = vadd.f32 0.0, %v447
      %v449 = vpop.f32.mrb[0].mxu0
      %v450 = vpop.f32.mrb[0].mxu0
      %v451 = vadd.f32 0.0, %v450
      %v452 = vpop.f32.mrb[0].mxu0
      %453 = vmatprep.mubr.bf16.mxu0 0
      %454 = vmatmul.mubr.bf16.gmra.mrb[0].mxu0 %v314
      %v455 = vpop.f32.mrb[0].mxu0
      %v456 = vadd.f32 0.0, %v455
      %v457 = vpop.f32.mrb[0].mxu0
      %v458 = vpop.f32.mrb[0].mxu0
      %v459 = vadd.f32 0.0, %v458
      %v460 = vpop.f32.mrb[0].mxu0
      %461 = vmatprep.mubr.bf16.mxu0 0
      %462 = vmatmul.mubr.bf16.gmra.mrb[0].mxu0 %v317
      %v463 = vpop.f32.mrb[0].mxu0
      %v464 = vadd.f32 0.0, %v463
      %v465 = vpop.f32.mrb[0].mxu0
      %v466 = vpop.f32.mrb[0].mxu0
      %v467 = vadd.f32 0.0, %v466
      %v468 = vpop.f32.mrb[0].mxu0
      %469 = vmatprep.mubr.bf16.mxu0 0
      %470 = vmatmul.mubr.bf16.gmra.mrb[0].mxu0 %v320
      %v471 = vpop.f32.mrb[0].mxu0
      %v472 = vadd.f32 0.0, %v471
      %v473 = vpop.f32.mrb[0].mxu0
      %v474 = vpop.f32.mrb[0].mxu0
      %v475 = vadd.f32 0.0, %v474
      %v476 = vpop.f32.mrb[0].mxu0
      %477 = vmatprep.mubr.bf16.mxu0 0
      %478 = vmatmul.mubr.bf16.gmra.mrb[0].mxu0 %v323
      %v479 = vpop.f32.mrb[0].mxu0
      %v480 = vadd.f32 0.0, %v479
      %v481 = vpop.f32.mrb[0].mxu0
      %v482 = vpop.f32.mrb[0].mxu0
      %v483 = vadd.f32 0.0, %v482
      %v484 = vpop.f32.mrb[0].mxu0
      %485 = vdwg.mxu0
      %v486 = vtanh.pop %v360
      %v487 = vtanh.pop %v363
      %v488 = vtanh.pop %v368
      %v489 = vtanh.pop %v371
      %v490 = vtanh.pop %v376
      %v491 = vtanh.pop %v379
      %v492 = vtanh.pop %v384
      %v493 = vtanh.pop %v387
      %v494 = vtanh.pop %v392
      %v495 = vtanh.pop %v395
      %v496 = vtanh.pop %v400
      %v497 = vtanh.pop %v403
      %v498 = vtanh.pop %v408
      %v499 = vtanh.pop %v411
      %v500 = vtanh.pop %v416
      %v501 = vtanh.pop %v419
      %v502 = vtanh.pop %v424
      %v503 = vtanh.pop %v427
      %v504 = vtanh.pop %v432
      %v505 = vtanh.pop %v435
      %v506 = vtanh.pop %v440
      %v507 = vtanh.pop %v443
      %v508 = vtanh.pop %v448
      %v509 = vtanh.pop %v451
      %v510 = vtanh.pop %v456
      %v511 = vtanh.pop %v459
      %v512 = vtanh.pop %v464
      %v513 = vtanh.pop %v467
      %v514 = vtanh.pop %v472
      %v515 = vtanh.pop %v475
      %v516 = vtanh.pop %v480
      %v517 = vtanh.pop %v483
      %vm518 = vcmask 97280
      %519 = vst.msk [vmem:[%s145] sm:$0xff] %vm518, %v486
      %520 = vst.msk [vmem:[%s145 + $0x8] sm:$0xff] %vm518, %v487
      %521 = vst.msk [vmem:[%s145 + $0x10] sm:$0xff] %vm518, %v488
      %522 = vst.msk [vmem:[%s145 + $0x18] sm:$0xff] %vm518, %v489
      %523 = vst.msk [vmem:[%s145 + $0x20] sm:$0xff] %vm518, %v490
      %524 = vst.msk [vmem:[%s145 + $0x28] sm:$0xff] %vm518, %v491
      %525 = vst.msk [vmem:[%s145 + $0x30] sm:$0xff] %vm518, %v492
      %526 = vst.msk [vmem:[%s145 + $0x38] sm:$0xff] %vm518, %v493
      %527 = vst.msk [vmem:[%s145 + $0x40] sm:$0xff] %vm518, %v494
      %528 = vst.msk [vmem:[%s145 + $0x48] sm:$0xff] %vm518, %v495
      %529 = vst.msk [vmem:[%s145 + $0x50] sm:$0xff] %vm518, %v496
      %530 = vst.msk [vmem:[%s145 + $0x58] sm:$0xff] %vm518, %v497
      %531 = vst.msk [vmem:[%s145 + $0x60] sm:$0xff] %vm518, %v498
      %532 = vst.msk [vmem:[%s145 + $0x68] sm:$0xff] %vm518, %v499
      %533 = vst.msk [vmem:[%s145 + $0x70] sm:$0xff] %vm518, %v500
      %534 = vst.msk [vmem:[%s145 + $0x78] sm:$0xff] %vm518, %v501
      %535 = vst.msk [vmem:[%s145 + $0x80] sm:$0xff] %vm518, %v502
      %536 = vst.msk [vmem:[%s145 + $0x88] sm:$0xff] %vm518, %v503
      %537 = vst.msk [vmem:[%s145 + $0x90] sm:$0xff] %vm518, %v504
      %538 = vst.msk [vmem:[%s145 + $0x98] sm:$0xff] %vm518, %v505
      %539 = vst.msk [vmem:[%s145 + $0xa0] sm:$0xff] %vm518, %v506
      %540 = vst.msk [vmem:[%s145 + $0xa8] sm:$0xff] %vm518, %v507
      %541 = vst.msk [vmem:[%s145 + $0xb0] sm:$0xff] %vm518, %v508
      %542 = vst.msk [vmem:[%s145 + $0xb8] sm:$0xff] %vm518, %v509
      %543 = vst.msk [vmem:[%s145 + $0xc0] sm:$0xff] %vm518, %v510
      %544 = vst.msk [vmem:[%s145 + $0xc8] sm:$0xff] %vm518, %v511
      %545 = vst.msk [vmem:[%s145 + $0xd0] sm:$0xff] %vm518, %v512
      %546 = vst.msk [vmem:[%s145 + $0xd8] sm:$0xff] %vm518, %v513
      %547 = vst.msk [vmem:[%s145 + $0xe0] sm:$0xff] %vm518, %v514
      %548 = vst.msk [vmem:[%s145 + $0xe8] sm:$0xff] %vm518, %v515
      %549 = vst.msk [vmem:[%s145 + $0xf0] sm:$0xff] %vm518, %v516
      %550 = vst.msk [vmem:[%s145 + $0xf8] sm:$0xff] %vm518, %v517
      %s551 = smul.u32 32, %s13
      %p552 = scmp.lt.s32.totalorder %s551, 63
      %s553 = scalar_select %p552, %s551, 63
      %s554 = smul.addr %s553, 8
      %s555 = scalar_lea.vmem %s2, %s554
      // Predicated region
      $region29: #{aegan_resnet_decoder_forward.21} parent=27 // pred_check
        %p556 = pneg %p78
      $region30: #{aegan_resnet_decoder_forward.21} parent=27 // pred_check_branch
        %558 = sbr.rel (%p556) target = $region32
      $region31: #{aegan_resnet_decoder_forward.21} parent=27 // pred_region
        %s559 = smul.u32 32, %s13
      $region32: #{aegan_resnet_decoder_forward.21} parent=27 // pred_fallthru
        _
    $region28: #{aegan_resnet_decoder_forward.21} parent=5 // pred_fallthru
      _
    %p560 = scmp.le.s32.totalorder 2, %s8
    // Predicated region
    $region33: #{aegan_resnet_decoder_forward.21} parent=5 // pred_check
      %p561 = pneg %p560
    $region34: #{aegan_resnet_decoder_forward.21} parent=5 // pred_check_branch
      %563 = sbr.rel (%p561) target = $region36
    $region35: #{aegan_resnet_decoder_forward.21} parent=5 // pred_region
      %s564 = ssub.s32 %s8, 2
      // Predicated region
      $region37: #{aegan_resnet_decoder_forward.21} parent=35 // pred_check
        %p565 = pneg %p84
      $region38: #{aegan_resnet_decoder_forward.21} parent=35 // pred_check_branch
        %567 = sbr.rel (%p565) target = $region40
      $region39: #{aegan_resnet_decoder_forward.21} parent=35 // pred_region
        %s568 = smul.u32 32, %s14
        %p569 = scmp.lt.s32.totalorder %s568, 63
        %s570 = scalar_select %p569, %s568, 63
        %s571 = smul.addr %s570, 8
        %s572 = scalar_lea.vmem %s2, %s571
      $region40: #{aegan_resnet_decoder_forward.21} parent=35 // pred_fallthru
        _
    $region36: #{aegan_resnet_decoder_forward.21} parent=5 // pred_fallthru
      _
  $region6: #{aegan_resnet_decoder_forward.21} parent=0 // loop_footer
    %s12 = sadd.s32 1, %s8
  $region7: #{aegan_resnet_decoder_forward.21} parent=0 // loop_footer_branch
    %7 = sbr.rel target = $region3
  $region8: #{aegan_resnet_decoder_forward.21} parent=0 // loop_exit
    _

</llo_original>
